<compile_context>
chip_gen: v5e
topology: v5e:2x2
jax: 0.10.0
libtpu: 0.0.40
codegen_flags: <defaults>
</compile_context>

<pallas_src>
from functools import partial

import jax
import jax.numpy as jnp
from jax import lax
from jax.experimental import pallas as pl
from jax.experimental.pallas import tpu as pltpu


# --------------------------------------------------------------------------
# Pallas kernels
# --------------------------------------------------------------------------
def _mm_bias_kernel(p_ref, w_ref, b_ref, o_ref, *, relu):
    """(patches @ scaled-weight) + bias, optional ReLU.  f32 accumulator."""
    acc = jnp.dot(p_ref[...], w_ref[...], preferred_element_type=jnp.float32)
    acc = acc + b_ref[...]
    if relu:
        acc = jnp.maximum(acc, 0.0)
    o_ref[...] = acc


def _mm_bias_res_kernel(p_ref, w_ref, b_ref, r_ref, o_ref, *, relu):
    """(patches @ scaled-weight) + bias + residual, optional ReLU."""
    acc = jnp.dot(p_ref[...], w_ref[...], preferred_element_type=jnp.float32)
    acc = acc + b_ref[...] + r_ref[...]
    if relu:
        acc = jnp.maximum(acc, 0.0)
    o_ref[...] = acc


def _max4_kernel(a_ref, b_ref, c_ref, d_ref, o_ref):
    """Elementwise max of the four 2x2-window corners (MaxPool2d(2))."""
    o_ref[...] = jnp.maximum(
        jnp.maximum(a_ref[...], b_ref[...]),
        jnp.maximum(c_ref[...], d_ref[...]),
    )


# --------------------------------------------------------------------------
# Wrappers around the kernels (all called under a single jax.jit)
# --------------------------------------------------------------------------
def _round_up(n, m):
    return ((n + m - 1) // m) * m


def _choose_tm(m):
    """M tile: big (up to 256), multiple of 8/16, >=2 grid steps when M>=128."""
    m8 = _round_up(m, 8)
    if m8 >= 512:
        return 256
    if m8 >= 128 and m8 % 16 == 0:
        return m8 // 2          # 2 grid steps -> both TCs on v7x
    return m8


def conv_bn_act(x, w_mat, bias, *, k, stride, pad, relu, residual=None):
    """Conv2d(no bias)+folded BN+optional residual+optional ReLU on NHWC input.

    x        : (B, H, W, Cin) f32
    w_mat    : (k*k*Cin, Cout) bf16, BN scale already folded into columns
    bias     : (1, Cout) f32 (folded BN bias)
    residual : optional (B, Ho, Wo, Cout) f32, added before ReLU
    returns  : (B, Ho, Wo, Cout) f32
    """
    B, H, W, Cin = x.shape
    K, Cout = w_mat.shape
    Ho = (H + 2 * pad - k) // stride + 1
    Wo = (W + 2 * pad - k) // stride + 1
    M = B * Ho * Wo

    xb = x.astype(jnp.bfloat16)
    if k == 1 and pad == 0:
        p = xb[:, ::stride, ::stride, :].reshape(M, K)
    else:
        xp = jnp.pad(xb, ((0, 0), (pad, pad), (pad, pad), (0, 0)))
        cols = []
        for ky in range(k):
            for kx in range(k):
                cols.append(
                    xp[:, ky:ky + stride * (Ho - 1) + 1:stride,
                          kx:kx + stride * (Wo - 1) + 1:stride, :])
        p = jnp.concatenate(cols, axis=-1).reshape(M, K)

    TM = _choose_tm(M)
    M_pad = _round_up(M, TM)
    if M_pad != M:
        p = jnp.pad(p, ((0, M_pad - M), (0, 0)))

    in_specs = [
        pl.BlockSpec((TM, K), lambda i: (i, 0)),
        pl.BlockSpec((K, Cout), lambda i: (0, 0)),
        pl.BlockSpec((1, Cout), lambda i: (0, 0)),
    ]
    args = [p, w_mat, bias]
    if residual is None:
        kern = partial(_mm_bias_kernel, relu=relu)
    else:
        r = residual.reshape(M, Cout)                    # NHWC -> (M, C), no transpose
        if M_pad != M:
            r = jnp.pad(r, ((0, M_pad - M), (0, 0)))
        in_specs.append(pl.BlockSpec((TM, Cout), lambda i: (i, 0)))
        args.append(r)
        kern = partial(_mm_bias_res_kernel, relu=relu)

    out = pl.pallas_call(
        kern,
        out_shape=jax.ShapeDtypeStruct((M_pad, Cout), jnp.float32),
        grid=(M_pad // TM,),
        in_specs=in_specs,
        out_specs=pl.BlockSpec((TM, Cout), lambda i: (i, 0)),
        compiler_params=pltpu.CompilerParams(dimension_semantics=("parallel",)),
    )(*args)

    return out[:M].reshape(B, Ho, Wo, Cout)


def maxpool2x2(x):
    """MaxPool2d(kernel_size=2, stride=2) on NHWC — reduction done in Pallas."""
    B, H, W, C = x.shape
    assert H % 2 == 0 and W % 2 == 0, "maxpool2x2 assumes even spatial dims"
    Ho, Wo = H // 2, W // 2
    M = B * Ho * Wo
    corners = [x[:, dy::2, dx::2, :].reshape(M, C)
               for dy in (0, 1) for dx in (0, 1)]
    spec = pl.BlockSpec((M, C), lambda i: (0, 0))
    out = pl.pallas_call(
        _max4_kernel,
        out_shape=jax.ShapeDtypeStruct((M, C), x.dtype),
        grid=(1,),
        in_specs=[spec, spec, spec, spec],
        out_specs=spec,
    )(*corners)
    return out.reshape(B, Ho, Wo, C)


# --------------------------------------------------------------------------
# Parameter init (deterministic, synthetic) + host-side preprocessing
# --------------------------------------------------------------------------
def _bn_fold(gamma, beta, mean, var, eps=1e-5):
    s = gamma * lax.rsqrt(var + eps)
    return s.astype(jnp.float32), (beta - mean * s).astype(jnp.float32)


def init_bn(key, c):
    k1, k2, k3, k4 = jax.random.split(key, 4)
    gamma = 1.0 + 0.1 * jax.random.normal(k1, (c,))
    beta = 0.1 * jax.random.normal(k2, (c,))
    mean = 0.1 * jax.random.normal(k3, (c,))
    var = 1.0 + 0.1 * jax.random.uniform(k4, (c,))
    return _bn_fold(gamma, beta, mean, var)


def init_conv(key, cout, cin, k):
    fan_in = cin * k * k
    return (jax.random.normal(key, (cout, cin, k, k)) * (2.0 / fan_in) ** 0.5
            ).astype(jnp.float32)


def init_block(key, cin, cout, stride):
    ks = jax.random.split(key, 6)
    p = dict(
        w1=init_conv(ks[0], cout, cin, 3), bn1=init_bn(ks[1], cout),
        w2=init_conv(ks[2], cout, cout, 3), bn2=init_bn(ks[3], cout),
    )
    if stride != 1 or cin != cout:
        p["wd"] = init_conv(ks[4], cout, cin, 1)
        p["bnd"] = init_bn(ks[5], cout)
    return p


def init_params(key):
    ks = jax.random.split(key, 9)
    return dict(
        stem_w=init_conv(ks[0], 8, 4, 3),
        stem_bn=init_bn(ks[1], 8),
        layer1=[init_block(ks[2], 8, 8, 1), init_block(ks[3], 8, 8, 1)],
        layer2=[init_block(ks[4], 8, 16, 2), init_block(ks[5], 16, 16, 1)],
        layer3=[init_block(ks[6], 16, 32, 2), init_block(ks[7], 32, 32, 1)],
        layer4=[init_block(ks[8], 32, 64, 2)],
    )


def _prep_conv(w, bn):
    """Fold BN scale into weight columns; lay out as (k*k*Cin, Cout) bf16."""
    s, b = bn
    cout, cin, kh, kw = w.shape
    wm = (w * s[:, None, None, None]).transpose(2, 3, 1, 0).reshape(kh * kw * cin, cout)
    return wm.astype(jnp.bfloat16), b.reshape(1, cout).astype(jnp.float32)


def prepare_pallas_params(params):
    pp = {}
    wm, b = _prep_conv(params["stem_w"], params["stem_bn"])
    pp["stem"] = {"w": wm, "b": b}
    for name in ("layer1", "layer2", "layer3", "layer4"):
        blocks = []
        for bp in params[name]:
            d = {}
            d["w1"], d["b1"] = _prep_conv(bp["w1"], bp["bn1"])
            d["w2"], d["b2"] = _prep_conv(bp["w2"], bp["bn2"])
            if "wd" in bp:
                d["wd"], d["bd"] = _prep_conv(bp["wd"], bp["bnd"])
            blocks.append(d)
        pp[name] = blocks
    return pp


# --------------------------------------------------------------------------
# Resnet.forward (Pallas path): collect outputs at i in [2, 4, 5, 6] + final
# --------------------------------------------------------------------------
def basic_block(x, bp, stride):
    identity = x
    out = conv_bn_act(x, bp["w1"], bp["b1"], k=3, stride=stride, pad=1, relu=True)
    if "wd" in bp:
        identity = conv_bn_act(x, bp["wd"], bp["bd"], k=1, stride=stride, pad=0,
                               relu=False)
    # conv2 -> bn2 -> (+ identity) -> relu, fused in one Pallas call
    return conv_bn_act(out, bp["w2"], bp["b2"], k=3, stride=1, pad=1, relu=True,
                       residual=identity)


def resnet_forward_pallas(x_nchw, pp):
    x = x_nchw.transpose(0, 2, 3, 1)              # NCHW -> NHWC, once
    outputs = []
    # seq[0]=conv, seq[1]=bn, seq[2]=relu (fused into one kernel; i==2 output)
    x = conv_bn_act(x, pp["stem"]["w"], pp["stem"]["b"], k=3, stride=1, pad=1,
                    relu=True)
    outputs.append(x)                             # i == 2
    x = maxpool2x2(x)                             # i == 3 (not collected)
    for name, stride in (("layer1", 1), ("layer2", 2), ("layer3", 2)):
        for j, bp in enumerate(pp[name]):
            x = basic_block(x, bp, stride if j == 0 else 1)
        outputs.append(x)                         # i in (4, 5, 6)
    for j, bp in enumerate(pp["layer4"]):
        x = basic_block(x, bp, 2 if j == 0 else 1)
    outputs.append(x)                             # final x
    # match the PyTorch interface (NCHW) only on the collected outputs
    return [o.transpose(0, 3, 1, 2) for o in outputs]


# --------------------------------------------------------------------------
# Pure-JAX reference (for correctness check only; default precision)
# --------------------------------------------------------------------------
def conv_bn_act_ref(x, w, scale, bias, *, stride, pad, relu, residual=None):
    y = lax.conv_general_dilated(
        x, w, (stride, stride), [(pad, pad), (pad, pad)],
        dimension_numbers=("NCHW", "OIHW", "NCHW"))
    y = y * scale[None, :, None, None] + bias[None, :, None, None]
    if residual is not None:
        y = y + residual
    if relu:
        y = jnp.maximum(y, 0.0)
    return y


def maxpool_ref(x):
    B, C, H, W = x.shape
    return x.reshape(B, C, H // 2, 2, W // 2, 2).max(axis=(3, 5))


def basic_block_ref(x, p, stride):
    identity = x
    out = conv_bn_act_ref(x, p["w1"], *p["bn1"], stride=stride, pad=1, relu=True)
    if "wd" in p:
        identity = conv_bn_act_ref(x, p["wd"], *p["bnd"], stride=stride, pad=0,
                                   relu=False)
    return conv_bn_act_ref(out, p["w2"], *p["bn2"], stride=1, pad=1, relu=True,
                           residual=identity)


def resnet_forward_ref(x, params):
    outputs = []
    x = conv_bn_act_ref(x, params["stem_w"], *params["stem_bn"], stride=1, pad=1,
                        relu=True)
    outputs.append(x)
    x = maxpool_ref(x)
    for name, stride in (("layer1", 1), ("layer2", 2), ("layer3", 2)):
        for j, bp in enumerate(params[name]):
            x = basic_block_ref(x, bp, stride if j == 0 else 1)
        outputs.append(x)
    for j, bp in enumerate(params["layer4"]):
        x = basic_block_ref(x, bp, 2 if j == 0 else 1)
    outputs.append(x)
    return outputs


# --------------------------------------------------------------------------
if __name__ == "__main__":
    key = jax.random.PRNGKey(0)
    pkey, xkey = jax.random.split(key)
    params = init_params(pkey)
    pparams = prepare_pallas_params(params)
    x = jax.random.normal(xkey, (2, 4, 16, 16), jnp.float32)

    fwd = jax.jit(resnet_forward_pallas)
    outs = jax.block_until_ready(fwd(x, pparams))

    refs = jax.block_until_ready(jax.jit(resnet_forward_ref)(x, params))

    expected_shapes = [(2, 8, 16, 16), (2, 8, 8, 8), (2, 16, 4, 4),
                       (2, 32, 2, 2), (2, 64, 1, 1)]
    assert len(outs) == 5
    for o, r, es in zip(outs, refs, expected_shapes):
        assert o.shape == es and r.shape == es, (o.shape, r.shape, es)
        assert bool(jnp.all(jnp.isfinite(o)))
        rel = float(jnp.linalg.norm(o - r) / (jnp.linalg.norm(r) + 1e-6))
        # bf16 MXU operands vs f32 reference: loose elementwise + tight norm check
        assert bool(jnp.allclose(o, r, rtol=5e-2, atol=5e-2)), (
            float(jnp.max(jnp.abs(o - r))), rel)
        assert rel < 2e-2, rel

    print("KERNEL_OK")
</pallas_src>

<mosaic_0001>
module attributes {stable_mosaic.version = 11 : i64} {
  func.func @_mm_bias_kernel(%arg0: i32, %arg1: memref<256x36xbf16, #tpu.memory_space<vmem>>, %arg2: memref<36x8xbf16, #tpu.memory_space<vmem>>, %arg3: memref<1x8xf32, #tpu.memory_space<vmem>>, %arg4: memref<256x8xf32, #tpu.memory_space<vmem>>) attributes {dimension_semantics = [#tpu.dimension_semantics<parallel>], iteration_bounds = array<i64: 2>, scalar_prefetch = 0 : i64, scratch_operands = 0 : i64, tpu.core_type = #tpu.core_type<tc>, window_params = [{transform_indices = @transform_0, window_bounds = array<i64: 256, 36>}, {pipeline_mode = #tpu.pipeline_mode<synchronous>, transform_indices = @transform_1, window_bounds = array<i64: 36, 8>}, {pipeline_mode = #tpu.pipeline_mode<synchronous>, transform_indices = @transform_2, window_bounds = array<i64: 1, 8>}, {transform_indices = @transform_3, window_bounds = array<i64: 256, 8>}]} {
    %c0 = arith.constant 0 : index
    %c0_0 = arith.constant 0 : index
    %0 = vector.load %arg1[%c0, %c0_0] : memref<256x36xbf16, #tpu.memory_space<vmem>>, vector<256x36xbf16>
    %c0_1 = arith.constant 0 : index
    %c0_2 = arith.constant 0 : index
    %1 = vector.load %arg2[%c0_1, %c0_2] : memref<36x8xbf16, #tpu.memory_space<vmem>>, vector<36x8xbf16>
    %cst = arith.constant dense<0.000000e+00> : vector<256x8xf32>
    %2 = tpu.matmul %0, %1, %cst {dimension_numbers = #tpu.dot_dimension_numbers<[1], [0], [0], [1], [0, 0, 1, 1], [], []>} : vector<256x36xbf16>, vector<36x8xbf16>, vector<256x8xf32> -> vector<256x8xf32>
    %c0_3 = arith.constant 0 : index
    %c0_4 = arith.constant 0 : index
    %3 = vector.load %arg3[%c0_3, %c0_4] : memref<1x8xf32, #tpu.memory_space<vmem>>, vector<1x8xf32>
    %4 = vector.broadcast %3 : vector<1x8xf32> to vector<256x8xf32>
    %5 = arith.addf %2, %4 : vector<256x8xf32>
    %cst_5 = arith.constant 0.000000e+00 : f32
    %6 = vector.broadcast %cst_5 : f32 to vector<256x8xf32>
    %7 = arith.maximumf %5, %6 : vector<256x8xf32>
    %c0_6 = arith.constant 0 : index
    %c0_7 = arith.constant 0 : index
    %8 = vector.load %arg4[%c0_6, %c0_7] : memref<256x8xf32, #tpu.memory_space<vmem>>, vector<256x8xf32>
    tpu.vector_store %arg4[%c0_6, %c0_7], %7 {strides = array<i32>} : memref<256x8xf32, #tpu.memory_space<vmem>>, vector<256x8xf32>,
    return
  }
  func.func @transform_0(%arg0: i32) -> (i32, i32) {
    %c0_i32 = arith.constant 0 : i32
    %c0_i32_0 = arith.constant 0 : i32
    return %arg0, %c0_i32 : i32, i32
  }
  func.func @transform_1(%arg0: i32) -> (i32, i32) {
    %c0_i32 = arith.constant 0 : i32
    %c0_i32_0 = arith.constant 0 : i32
    %c0_i32_1 = arith.constant 0 : i32
    return %c0_i32, %c0_i32_0 : i32, i32
  }
  func.func @transform_2(%arg0: i32) -> (i32, i32) {
    %c0_i32 = arith.constant 0 : i32
    %c0_i32_0 = arith.constant 0 : i32
    %c0_i32_1 = arith.constant 0 : i32
    return %c0_i32, %c0_i32_0 : i32, i32
  }
  func.func @transform_3(%arg0: i32) -> (i32, i32) {
    %c0_i32 = arith.constant 0 : i32
    %c0_i32_0 = arith.constant 0 : i32
    return %arg0, %c0_i32 : i32, i32
  }
}

module attributes {stable_mosaic.version = 11 : i64} {
  func.func @_max4_kernel(%arg0: i32, %arg1: memref<128x8xf32, #tpu.memory_space<vmem>>, %arg2: memref<128x8xf32, #tpu.memory_space<vmem>>, %arg3: memref<128x8xf32, #tpu.memory_space<vmem>>, %arg4: memref<128x8xf32, #tpu.memory_space<vmem>>, %arg5: memref<128x8xf32, #tpu.memory_space<vmem>>) attributes {dimension_semantics = [#tpu.dimension_semantics<arbitrary>], iteration_bounds = array<i64: 1>, scalar_prefetch = 0 : i64, scratch_operands = 0 : i64, tpu.core_type = #tpu.core_type<tc>, window_params = [{pipeline_mode = #tpu.pipeline_mode<synchronous>, transform_indices = @transform_0, window_bounds = array<i64: 128, 8>}, {pipeline_mode = #tpu.pipeline_mode<synchronous>, transform_indices = @transform_1, window_bounds = array<i64: 128, 8>}, {pipeline_mode = #tpu.pipeline_mode<synchronous>, transform_indices = @transform_2, window_bounds = array<i64: 128, 8>}, {pipeline_mode = #tpu.pipeline_mode<synchronous>, transform_indices = @transform_3, window_bounds = array<i64: 128, 8>}, {pipeline_mode = #tpu.pipeline_mode<synchronous>, transform_indices = @transform_4, window_bounds = array<i64: 128, 8>}]} {
    %c0 = arith.constant 0 : index
    %c0_0 = arith.constant 0 : index
    %0 = vector.load %arg1[%c0, %c0_0] : memref<128x8xf32, #tpu.memory_space<vmem>>, vector<128x8xf32>
    %c0_1 = arith.constant 0 : index
    %c0_2 = arith.constant 0 : index
    %1 = vector.load %arg2[%c0_1, %c0_2] : memref<128x8xf32, #tpu.memory_space<vmem>>, vector<128x8xf32>
    %2 = arith.maximumf %0, %1 : vector<128x8xf32>
    %c0_3 = arith.constant 0 : index
    %c0_4 = arith.constant 0 : index
    %3 = vector.load %arg3[%c0_3, %c0_4] : memref<128x8xf32, #tpu.memory_space<vmem>>, vector<128x8xf32>
    %c0_5 = arith.constant 0 : index
    %c0_6 = arith.constant 0 : index
    %4 = vector.load %arg4[%c0_5, %c0_6] : memref<128x8xf32, #tpu.memory_space<vmem>>, vector<128x8xf32>
    %5 = arith.maximumf %3, %4 : vector<128x8xf32>
    %6 = arith.maximumf %2, %5 : vector<128x8xf32>
    %c0_7 = arith.constant 0 : index
    %c0_8 = arith.constant 0 : index
    %7 = vector.load %arg5[%c0_7, %c0_8] : memref<128x8xf32, #tpu.memory_space<vmem>>, vector<128x8xf32>
    tpu.vector_store %arg5[%c0_7, %c0_8], %6 {strides = array<i32>} : memref<128x8xf32, #tpu.memory_space<vmem>>, vector<128x8xf32>,
    return
  }
  func.func @transform_0(%arg0: i32) -> (i32, i32) {
    %c0_i32 = arith.constant 0 : i32
    %c0_i32_0 = arith.constant 0 : i32
    %c0_i32_1 = arith.constant 0 : i32
    return %c0_i32, %c0_i32_0 : i32, i32
  }
  func.func @transform_1(%arg0: i32) -> (i32, i32) {
    %c0_i32 = arith.constant 0 : i32
    %c0_i32_0 = arith.constant 0 : i32
    %c0_i32_1 = arith.constant 0 : i32
    return %c0_i32, %c0_i32_0 : i32, i32
  }
  func.func @transform_2(%arg0: i32) -> (i32, i32) {
    %c0_i32 = arith.constant 0 : i32
    %c0_i32_0 = arith.constant 0 : i32
    %c0_i32_1 = arith.constant 0 : i32
    return %c0_i32, %c0_i32_0 : i32, i32
  }
  func.func @transform_3(%arg0: i32) -> (i32, i32) {
    %c0_i32 = arith.constant 0 : i32
    %c0_i32_0 = arith.constant 0 : i32
    %c0_i32_1 = arith.constant 0 : i32
    return %c0_i32, %c0_i32_0 : i32, i32
  }
  func.func @transform_4(%arg0: i32) -> (i32, i32) {
    %c0_i32 = arith.constant 0 : i32
    %c0_i32_0 = arith.constant 0 : i32
    %c0_i32_1 = arith.constant 0 : i32
    return %c0_i32, %c0_i32_0 : i32, i32
  }
}

module attributes {stable_mosaic.version = 11 : i64} {
  func.func @_mm_bias_kernel(%arg0: i32, %arg1: memref<64x72xbf16, #tpu.memory_space<vmem>>, %arg2: memref<72x8xbf16, #tpu.memory_space<vmem>>, %arg3: memref<1x8xf32, #tpu.memory_space<vmem>>, %arg4: memref<64x8xf32, #tpu.memory_space<vmem>>) attributes {dimension_semantics = [#tpu.dimension_semantics<parallel>], iteration_bounds = array<i64: 2>, scalar_prefetch = 0 : i64, scratch_operands = 0 : i64, tpu.core_type = #tpu.core_type<tc>, window_params = [{transform_indices = @transform_0, window_bounds = array<i64: 64, 72>}, {pipeline_mode = #tpu.pipeline_mode<synchronous>, transform_indices = @transform_1, window_bounds = array<i64: 72, 8>}, {pipeline_mode = #tpu.pipeline_mode<synchronous>, transform_indices = @transform_2, window_bounds = array<i64: 1, 8>}, {transform_indices = @transform_3, window_bounds = array<i64: 64, 8>}]} {
    %c0 = arith.constant 0 : index
    %c0_0 = arith.constant 0 : index
    %0 = vector.load %arg1[%c0, %c0_0] : memref<64x72xbf16, #tpu.memory_space<vmem>>, vector<64x72xbf16>
    %c0_1 = arith.constant 0 : index
    %c0_2 = arith.constant 0 : index
    %1 = vector.load %arg2[%c0_1, %c0_2] : memref<72x8xbf16, #tpu.memory_space<vmem>>, vector<72x8xbf16>
    %cst = arith.constant dense<0.000000e+00> : vector<64x8xf32>
    %2 = tpu.matmul %0, %1, %cst {dimension_numbers = #tpu.dot_dimension_numbers<[1], [0], [0], [1], [0, 0, 1, 1], [], []>} : vector<64x72xbf16>, vector<72x8xbf16>, vector<64x8xf32> -> vector<64x8xf32>
    %c0_3 = arith.constant 0 : index
    %c0_4 = arith.constant 0 : index
    %3 = vector.load %arg3[%c0_3, %c0_4] : memref<1x8xf32, #tpu.memory_space<vmem>>, vector<1x8xf32>
    %4 = vector.broadcast %3 : vector<1x8xf32> to vector<64x8xf32>
    %5 = arith.addf %2, %4 : vector<64x8xf32>
    %cst_5 = arith.constant 0.000000e+00 : f32
    %6 = vector.broadcast %cst_5 : f32 to vector<64x8xf32>
    %7 = arith.maximumf %5, %6 : vector<64x8xf32>
    %c0_6 = arith.constant 0 : index
    %c0_7 = arith.constant 0 : index
    %8 = vector.load %arg4[%c0_6, %c0_7] : memref<64x8xf32, #tpu.memory_space<vmem>>, vector<64x8xf32>
    tpu.vector_store %arg4[%c0_6, %c0_7], %7 {strides = array<i32>} : memref<64x8xf32, #tpu.memory_space<vmem>>, vector<64x8xf32>,
    return
  }
  func.func @transform_0(%arg0: i32) -> (i32, i32) {
    %c0_i32 = arith.constant 0 : i32
    %c0_i32_0 = arith.constant 0 : i32
    return %arg0, %c0_i32 : i32, i32
  }
  func.func @transform_1(%arg0: i32) -> (i32, i32) {
    %c0_i32 = arith.constant 0 : i32
    %c0_i32_0 = arith.constant 0 : i32
    %c0_i32_1 = arith.constant 0 : i32
    return %c0_i32, %c0_i32_0 : i32, i32
  }
  func.func @transform_2(%arg0: i32) -> (i32, i32) {
    %c0_i32 = arith.constant 0 : i32
    %c0_i32_0 = arith.constant 0 : i32
    %c0_i32_1 = arith.constant 0 : i32
    return %c0_i32, %c0_i32_0 : i32, i32
  }
  func.func @transform_3(%arg0: i32) -> (i32, i32) {
    %c0_i32 = arith.constant 0 : i32
    %c0_i32_0 = arith.constant 0 : i32
    return %arg0, %c0_i32 : i32, i32
  }
}

module attributes {stable_mosaic.version = 11 : i64} {
  func.func @_mm_bias_res_kernel(%arg0: i32, %arg1: memref<64x72xbf16, #tpu.memory_space<vmem>>, %arg2: memref<72x8xbf16, #tpu.memory_space<vmem>>, %arg3: memref<1x8xf32, #tpu.memory_space<vmem>>, %arg4: memref<64x8xf32, #tpu.memory_space<vmem>>, %arg5: memref<64x8xf32, #tpu.memory_space<vmem>>) attributes {dimension_semantics = [#tpu.dimension_semantics<parallel>], iteration_bounds = array<i64: 2>, scalar_prefetch = 0 : i64, scratch_operands = 0 : i64, tpu.core_type = #tpu.core_type<tc>, window_params = [{transform_indices = @transform_0, window_bounds = array<i64: 64, 72>}, {pipeline_mode = #tpu.pipeline_mode<synchronous>, transform_indices = @transform_1, window_bounds = array<i64: 72, 8>}, {pipeline_mode = #tpu.pipeline_mode<synchronous>, transform_indices = @transform_2, window_bounds = array<i64: 1, 8>}, {transform_indices = @transform_3, window_bounds = array<i64: 64, 8>}, {transform_indices = @transform_4, window_bounds = array<i64: 64, 8>}]} {
    %c0 = arith.constant 0 : index
    %c0_0 = arith.constant 0 : index
    %0 = vector.load %arg1[%c0, %c0_0] : memref<64x72xbf16, #tpu.memory_space<vmem>>, vector<64x72xbf16>
    %c0_1 = arith.constant 0 : index
    %c0_2 = arith.constant 0 : index
    %1 = vector.load %arg2[%c0_1, %c0_2] : memref<72x8xbf16, #tpu.memory_space<vmem>>, vector<72x8xbf16>
    %cst = arith.constant dense<0.000000e+00> : vector<64x8xf32>
    %2 = tpu.matmul %0, %1, %cst {dimension_numbers = #tpu.dot_dimension_numbers<[1], [0], [0], [1], [0, 0, 1, 1], [], []>} : vector<64x72xbf16>, vector<72x8xbf16>, vector<64x8xf32> -> vector<64x8xf32>
    %c0_3 = arith.constant 0 : index
    %c0_4 = arith.constant 0 : index
    %3 = vector.load %arg3[%c0_3, %c0_4] : memref<1x8xf32, #tpu.memory_space<vmem>>, vector<1x8xf32>
    %4 = vector.broadcast %3 : vector<1x8xf32> to vector<64x8xf32>
    %5 = arith.addf %2, %4 : vector<64x8xf32>
    %c0_5 = arith.constant 0 : index
    %c0_6 = arith.constant 0 : index
    %6 = vector.load %arg4[%c0_5, %c0_6] : memref<64x8xf32, #tpu.memory_space<vmem>>, vector<64x8xf32>
    %7 = arith.addf %5, %6 : vector<64x8xf32>
    %cst_7 = arith.constant 0.000000e+00 : f32
    %8 = vector.broadcast %cst_7 : f32 to vector<64x8xf32>
    %9 = arith.maximumf %7, %8 : vector<64x8xf32>
    %c0_8 = arith.constant 0 : index
    %c0_9 = arith.constant 0 : index
    %10 = vector.load %arg5[%c0_8, %c0_9] : memref<64x8xf32, #tpu.memory_space<vmem>>, vector<64x8xf32>
    tpu.vector_store %arg5[%c0_8, %c0_9], %9 {strides = array<i32>} : memref<64x8xf32, #tpu.memory_space<vmem>>, vector<64x8xf32>,
    return
  }
  func.func @transform_0(%arg0: i32) -> (i32, i32) {
    %c0_i32 = arith.constant 0 : i32
    %c0_i32_0 = arith.constant 0 : i32
    return %arg0, %c0_i32 : i32, i32
  }
  func.func @transform_1(%arg0: i32) -> (i32, i32) {
    %c0_i32 = arith.constant 0 : i32
    %c0_i32_0 = arith.constant 0 : i32
    %c0_i32_1 = arith.constant 0 : i32
    return %c0_i32, %c0_i32_0 : i32, i32
  }
  func.func @transform_2(%arg0: i32) -> (i32, i32) {
    %c0_i32 = arith.constant 0 : i32
    %c0_i32_0 = arith.constant 0 : i32
    %c0_i32_1 = arith.constant 0 : i32
    return %c0_i32, %c0_i32_0 : i32, i32
  }
  func.func @transform_3(%arg0: i32) -> (i32, i32) {
    %c0_i32 = arith.constant 0 : i32
    %c0_i32_0 = arith.constant 0 : i32
    return %arg0, %c0_i32 : i32, i32
  }
  func.func @transform_4(%arg0: i32) -> (i32, i32) {
    %c0_i32 = arith.constant 0 : i32
    %c0_i32_0 = arith.constant 0 : i32
    return %arg0, %c0_i32 : i32, i32
  }
}

module attributes {stable_mosaic.version = 11 : i64} {
  func.func @_mm_bias_kernel(%arg0: i32, %arg1: memref<32x72xbf16, #tpu.memory_space<vmem>>, %arg2: memref<72x16xbf16, #tpu.memory_space<vmem>>, %arg3: memref<1x16xf32, #tpu.memory_space<vmem>>, %arg4: memref<32x16xf32, #tpu.memory_space<vmem>>) attributes {dimension_semantics = [#tpu.dimension_semantics<parallel>], iteration_bounds = array<i64: 1>, scalar_prefetch = 0 : i64, scratch_operands = 0 : i64, tpu.core_type = #tpu.core_type<tc>, window_params = [{transform_indices = @transform_0, window_bounds = array<i64: 32, 72>}, {pipeline_mode = #tpu.pipeline_mode<synchronous>, transform_indices = @transform_1, window_bounds = array<i64: 72, 16>}, {pipeline_mode = #tpu.pipeline_mode<synchronous>, transform_indices = @transform_2, window_bounds = array<i64: 1, 16>}, {transform_indices = @transform_3, window_bounds = array<i64: 32, 16>}]} {
    %c0 = arith.constant 0 : index
    %c0_0 = arith.constant 0 : index
    %0 = vector.load %arg1[%c0, %c0_0] : memref<32x72xbf16, #tpu.memory_space<vmem>>, vector<32x72xbf16>
    %c0_1 = arith.constant 0 : index
    %c0_2 = arith.constant 0 : index
    %1 = vector.load %arg2[%c0_1, %c0_2] : memref<72x16xbf16, #tpu.memory_space<vmem>>, vector<72x16xbf16>
    %cst = arith.constant dense<0.000000e+00> : vector<32x16xf32>
    %2 = tpu.matmul %0, %1, %cst {dimension_numbers = #tpu.dot_dimension_numbers<[1], [0], [0], [1], [0, 0, 1, 1], [], []>} : vector<32x72xbf16>, vector<72x16xbf16>, vector<32x16xf32> -> vector<32x16xf32>
    %c0_3 = arith.constant 0 : index
    %c0_4 = arith.constant 0 : index
    %3 = vector.load %arg3[%c0_3, %c0_4] : memref<1x16xf32, #tpu.memory_space<vmem>>, vector<1x16xf32>
    %4 = vector.broadcast %3 : vector<1x16xf32> to vector<32x16xf32>
    %5 = arith.addf %2, %4 : vector<32x16xf32>
    %cst_5 = arith.constant 0.000000e+00 : f32
    %6 = vector.broadcast %cst_5 : f32 to vector<32x16xf32>
    %7 = arith.maximumf %5, %6 : vector<32x16xf32>
    %c0_6 = arith.constant 0 : index
    %c0_7 = arith.constant 0 : index
    %8 = vector.load %arg4[%c0_6, %c0_7] : memref<32x16xf32, #tpu.memory_space<vmem>>, vector<32x16xf32>
    tpu.vector_store %arg4[%c0_6, %c0_7], %7 {strides = array<i32>} : memref<32x16xf32, #tpu.memory_space<vmem>>, vector<32x16xf32>,
    return
  }
  func.func @transform_0(%arg0: i32) -> (i32, i32) {
    %c0_i32 = arith.constant 0 : i32
    %c0_i32_0 = arith.constant 0 : i32
    return %arg0, %c0_i32 : i32, i32
  }
  func.func @transform_1(%arg0: i32) -> (i32, i32) {
    %c0_i32 = arith.constant 0 : i32
    %c0_i32_0 = arith.constant 0 : i32
    %c0_i32_1 = arith.constant 0 : i32
    return %c0_i32, %c0_i32_0 : i32, i32
  }
  func.func @transform_2(%arg0: i32) -> (i32, i32) {
    %c0_i32 = arith.constant 0 : i32
    %c0_i32_0 = arith.constant 0 : i32
    %c0_i32_1 = arith.constant 0 : i32
    return %c0_i32, %c0_i32_0 : i32, i32
  }
  func.func @transform_3(%arg0: i32) -> (i32, i32) {
    %c0_i32 = arith.constant 0 : i32
    %c0_i32_0 = arith.constant 0 : i32
    return %arg0, %c0_i32 : i32, i32
  }
}

module attributes {stable_mosaic.version = 11 : i64} {
  func.func @_mm_bias_kernel(%arg0: i32, %arg1: memref<32x8xbf16, #tpu.memory_space<vmem>>, %arg2: memref<8x16xbf16, #tpu.memory_space<vmem>>, %arg3: memref<1x16xf32, #tpu.memory_space<vmem>>, %arg4: memref<32x16xf32, #tpu.memory_space<vmem>>) attributes {dimension_semantics = [#tpu.dimension_semantics<parallel>], iteration_bounds = array<i64: 1>, scalar_prefetch = 0 : i64, scratch_operands = 0 : i64, tpu.core_type = #tpu.core_type<tc>, window_params = [{transform_indices = @transform_0, window_bounds = array<i64: 32, 8>}, {pipeline_mode = #tpu.pipeline_mode<synchronous>, transform_indices = @transform_1, window_bounds = array<i64: 8, 16>}, {pipeline_mode = #tpu.pipeline_mode<synchronous>, transform_indices = @transform_2, window_bounds = array<i64: 1, 16>}, {transform_indices = @transform_3, window_bounds = array<i64: 32, 16>}]} {
    %c0 = arith.constant 0 : index
    %c0_0 = arith.constant 0 : index
    %0 = vector.load %arg1[%c0, %c0_0] : memref<32x8xbf16, #tpu.memory_space<vmem>>, vector<32x8xbf16>
    %c0_1 = arith.constant 0 : index
    %c0_2 = arith.constant 0 : index
    %1 = vector.load %arg2[%c0_1, %c0_2] : memref<8x16xbf16, #tpu.memory_space<vmem>>, vector<8x16xbf16>
    %cst = arith.constant dense<0.000000e+00> : vector<32x16xf32>
    %2 = tpu.matmul %0, %1, %cst {dimension_numbers = #tpu.dot_dimension_numbers<[1], [0], [0], [1], [0, 0, 1, 1], [], []>} : vector<32x8xbf16>, vector<8x16xbf16>, vector<32x16xf32> -> vector<32x16xf32>
    %c0_3 = arith.constant 0 : index
    %c0_4 = arith.constant 0 : index
    %3 = vector.load %arg3[%c0_3, %c0_4] : memref<1x16xf32, #tpu.memory_space<vmem>>, vector<1x16xf32>
    %4 = vector.broadcast %3 : vector<1x16xf32> to vector<32x16xf32>
    %5 = arith.addf %2, %4 : vector<32x16xf32>
    %c0_5 = arith.constant 0 : index
    %c0_6 = arith.constant 0 : index
    %6 = vector.load %arg4[%c0_5, %c0_6] : memref<32x16xf32, #tpu.memory_space<vmem>>, vector<32x16xf32>
    tpu.vector_store %arg4[%c0_5, %c0_6], %5 {strides = array<i32>} : memref<32x16xf32, #tpu.memory_space<vmem>>, vector<32x16xf32>,
    return
  }
  func.func @transform_0(%arg0: i32) -> (i32, i32) {
    %c0_i32 = arith.constant 0 : i32
    %c0_i32_0 = arith.constant 0 : i32
    return %arg0, %c0_i32 : i32, i32
  }
  func.func @transform_1(%arg0: i32) -> (i32, i32) {
    %c0_i32 = arith.constant 0 : i32
    %c0_i32_0 = arith.constant 0 : i32
    %c0_i32_1 = arith.constant 0 : i32
    return %c0_i32, %c0_i32_0 : i32, i32
  }
  func.func @transform_2(%arg0: i32) -> (i32, i32) {
    %c0_i32 = arith.constant 0 : i32
    %c0_i32_0 = arith.constant 0 : i32
    %c0_i32_1 = arith.constant 0 : i32
    return %c0_i32, %c0_i32_0 : i32, i32
  }
  func.func @transform_3(%arg0: i32) -> (i32, i32) {
    %c0_i32 = arith.constant 0 : i32
    %c0_i32_0 = arith.constant 0 : i32
    return %arg0, %c0_i32 : i32, i32
  }
}

module attributes {stable_mosaic.version = 11 : i64} {
  func.func @_mm_bias_res_kernel(%arg0: i32, %arg1: memref<32x144xbf16, #tpu.memory_space<vmem>>, %arg2: memref<144x16xbf16, #tpu.memory_space<vmem>>, %arg3: memref<1x16xf32, #tpu.memory_space<vmem>>, %arg4: memref<32x16xf32, #tpu.memory_space<vmem>>, %arg5: memref<32x16xf32, #tpu.memory_space<vmem>>) attributes {dimension_semantics = [#tpu.dimension_semantics<parallel>], iteration_bounds = array<i64: 1>, scalar_prefetch = 0 : i64, scratch_operands = 0 : i64, tpu.core_type = #tpu.core_type<tc>, window_params = [{transform_indices = @transform_0, window_bounds = array<i64: 32, 144>}, {pipeline_mode = #tpu.pipeline_mode<synchronous>, transform_indices = @transform_1, window_bounds = array<i64: 144, 16>}, {pipeline_mode = #tpu.pipeline_mode<synchronous>, transform_indices = @transform_2, window_bounds = array<i64: 1, 16>}, {transform_indices = @transform_3, window_bounds = array<i64: 32, 16>}, {transform_indices = @transform_4, window_bounds = array<i64: 32, 16>}]} {
    %c0 = arith.constant 0 : index
    %c0_0 = arith.constant 0 : index
    %0 = vector.load %arg1[%c0, %c0_0] : memref<32x144xbf16, #tpu.memory_space<vmem>>, vector<32x144xbf16>
    %c0_1 = arith.constant 0 : index
    %c0_2 = arith.constant 0 : index
    %1 = vector.load %arg2[%c0_1, %c0_2] : memref<144x16xbf16, #tpu.memory_space<vmem>>, vector<144x16xbf16>
    %cst = arith.constant dense<0.000000e+00> : vector<32x16xf32>
    %2 = tpu.matmul %0, %1, %cst {dimension_numbers = #tpu.dot_dimension_numbers<[1], [0], [0], [1], [0, 0, 1, 1], [], []>} : vector<32x144xbf16>, vector<144x16xbf16>, vector<32x16xf32> -> vector<32x16xf32>
    %c0_3 = arith.constant 0 : index
    %c0_4 = arith.constant 0 : index
    %3 = vector.load %arg3[%c0_3, %c0_4] : memref<1x16xf32, #tpu.memory_space<vmem>>, vector<1x16xf32>
    %4 = vector.broadcast %3 : vector<1x16xf32> to vector<32x16xf32>
    %5 = arith.addf %2, %4 : vector<32x16xf32>
    %c0_5 = arith.constant 0 : index
    %c0_6 = arith.constant 0 : index
    %6 = vector.load %arg4[%c0_5, %c0_6] : memref<32x16xf32, #tpu.memory_space<vmem>>, vector<32x16xf32>
    %7 = arith.addf %5, %6 : vector<32x16xf32>
    %cst_7 = arith.constant 0.000000e+00 : f32
    %8 = vector.broadcast %cst_7 : f32 to vector<32x16xf32>
    %9 = arith.maximumf %7, %8 : vector<32x16xf32>
    %c0_8 = arith.constant 0 : index
    %c0_9 = arith.constant 0 : index
    %10 = vector.load %arg5[%c0_8, %c0_9] : memref<32x16xf32, #tpu.memory_space<vmem>>, vector<32x16xf32>
    tpu.vector_store %arg5[%c0_8, %c0_9], %9 {strides = array<i32>} : memref<32x16xf32, #tpu.memory_space<vmem>>, vector<32x16xf32>,
    return
  }
  func.func @transform_0(%arg0: i32) -> (i32, i32) {
    %c0_i32 = arith.constant 0 : i32
    %c0_i32_0 = arith.constant 0 : i32
    return %arg0, %c0_i32 : i32, i32
  }
  func.func @transform_1(%arg0: i32) -> (i32, i32) {
    %c0_i32 = arith.constant 0 : i32
    %c0_i32_0 = arith.constant 0 : i32
    %c0_i32_1 = arith.constant 0 : i32
    return %c0_i32, %c0_i32_0 : i32, i32
  }
  func.func @transform_2(%arg0: i32) -> (i32, i32) {
    %c0_i32 = arith.constant 0 : i32
    %c0_i32_0 = arith.constant 0 : i32
    %c0_i32_1 = arith.constant 0 : i32
    return %c0_i32, %c0_i32_0 : i32, i32
  }
  func.func @transform_3(%arg0: i32) -> (i32, i32) {
    %c0_i32 = arith.constant 0 : i32
    %c0_i32_0 = arith.constant 0 : i32
    return %arg0, %c0_i32 : i32, i32
  }
  func.func @transform_4(%arg0: i32) -> (i32, i32) {
    %c0_i32 = arith.constant 0 : i32
    %c0_i32_0 = arith.constant 0 : i32
    return %arg0, %c0_i32 : i32, i32
  }
}

module attributes {stable_mosaic.version = 11 : i64} {
  func.func @_mm_bias_kernel(%arg0: i32, %arg1: memref<32x144xbf16, #tpu.memory_space<vmem>>, %arg2: memref<144x16xbf16, #tpu.memory_space<vmem>>, %arg3: memref<1x16xf32, #tpu.memory_space<vmem>>, %arg4: memref<32x16xf32, #tpu.memory_space<vmem>>) attributes {dimension_semantics = [#tpu.dimension_semantics<parallel>], iteration_bounds = array<i64: 1>, scalar_prefetch = 0 : i64, scratch_operands = 0 : i64, tpu.core_type = #tpu.core_type<tc>, window_params = [{transform_indices = @transform_0, window_bounds = array<i64: 32, 144>}, {pipeline_mode = #tpu.pipeline_mode<synchronous>, transform_indices = @transform_1, window_bounds = array<i64: 144, 16>}, {pipeline_mode = #tpu.pipeline_mode<synchronous>, transform_indices = @transform_2, window_bounds = array<i64: 1, 16>}, {transform_indices = @transform_3, window_bounds = array<i64: 32, 16>}]} {
    %c0 = arith.constant 0 : index
    %c0_0 = arith.constant 0 : index
    %0 = vector.load %arg1[%c0, %c0_0] : memref<32x144xbf16, #tpu.memory_space<vmem>>, vector<32x144xbf16>
    %c0_1 = arith.constant 0 : index
    %c0_2 = arith.constant 0 : index
    %1 = vector.load %arg2[%c0_1, %c0_2] : memref<144x16xbf16, #tpu.memory_space<vmem>>, vector<144x16xbf16>
    %cst = arith.constant dense<0.000000e+00> : vector<32x16xf32>
    %2 = tpu.matmul %0, %1, %cst {dimension_numbers = #tpu.dot_dimension_numbers<[1], [0], [0], [1], [0, 0, 1, 1], [], []>} : vector<32x144xbf16>, vector<144x16xbf16>, vector<32x16xf32> -> vector<32x16xf32>
    %c0_3 = arith.constant 0 : index
    %c0_4 = arith.constant 0 : index
    %3 = vector.load %arg3[%c0_3, %c0_4] : memref<1x16xf32, #tpu.memory_space<vmem>>, vector<1x16xf32>
    %4 = vector.broadcast %3 : vector<1x16xf32> to vector<32x16xf32>
    %5 = arith.addf %2, %4 : vector<32x16xf32>
    %cst_5 = arith.constant 0.000000e+00 : f32
    %6 = vector.broadcast %cst_5 : f32 to vector<32x16xf32>
    %7 = arith.maximumf %5, %6 : vector<32x16xf32>
    %c0_6 = arith.constant 0 : index
    %c0_7 = arith.constant 0 : index
    %8 = vector.load %arg4[%c0_6, %c0_7] : memref<32x16xf32, #tpu.memory_space<vmem>>, vector<32x16xf32>
    tpu.vector_store %arg4[%c0_6, %c0_7], %7 {strides = array<i32>} : memref<32x16xf32, #tpu.memory_space<vmem>>, vector<32x16xf32>,
    return
  }
  func.func @transform_0(%arg0: i32) -> (i32, i32) {
    %c0_i32 = arith.constant 0 : i32
    %c0_i32_0 = arith.constant 0 : i32
    return %arg0, %c0_i32 : i32, i32
  }
  func.func @transform_1(%arg0: i32) -> (i32, i32) {
    %c0_i32 = arith.constant 0 : i32
    %c0_i32_0 = arith.constant 0 : i32
    %c0_i32_1 = arith.constant 0 : i32
    return %c0_i32, %c0_i32_0 : i32, i32
  }
  func.func @transform_2(%arg0: i32) -> (i32, i32) {
    %c0_i32 = arith.constant 0 : i32
    %c0_i32_0 = arith.constant 0 : i32
    %c0_i32_1 = arith.constant 0 : i32
    return %c0_i32, %c0_i32_0 : i32, i32
  }
  func.func @transform_3(%arg0: i32) -> (i32, i32) {
    %c0_i32 = arith.constant 0 : i32
    %c0_i32_0 = arith.constant 0 : i32
    return %arg0, %c0_i32 : i32, i32
  }
}

module attributes {stable_mosaic.version = 11 : i64} {
  func.func @_mm_bias_kernel(%arg0: i32, %arg1: memref<8x144xbf16, #tpu.memory_space<vmem>>, %arg2: memref<144x32xbf16, #tpu.memory_space<vmem>>, %arg3: memref<1x32xf32, #tpu.memory_space<vmem>>, %arg4: memref<8x32xf32, #tpu.memory_space<vmem>>) attributes {dimension_semantics = [#tpu.dimension_semantics<parallel>], iteration_bounds = array<i64: 1>, scalar_prefetch = 0 : i64, scratch_operands = 0 : i64, tpu.core_type = #tpu.core_type<tc>, window_params = [{transform_indices = @transform_0, window_bounds = array<i64: 8, 144>}, {pipeline_mode = #tpu.pipeline_mode<synchronous>, transform_indices = @transform_1, window_bounds = array<i64: 144, 32>}, {pipeline_mode = #tpu.pipeline_mode<synchronous>, transform_indices = @transform_2, window_bounds = array<i64: 1, 32>}, {transform_indices = @transform_3, window_bounds = array<i64: 8, 32>}]} {
    %c0 = arith.constant 0 : index
    %c0_0 = arith.constant 0 : index
    %0 = vector.load %arg1[%c0, %c0_0] : memref<8x144xbf16, #tpu.memory_space<vmem>>, vector<8x144xbf16>
    %c0_1 = arith.constant 0 : index
    %c0_2 = arith.constant 0 : index
    %1 = vector.load %arg2[%c0_1, %c0_2] : memref<144x32xbf16, #tpu.memory_space<vmem>>, vector<144x32xbf16>
    %cst = arith.constant dense<0.000000e+00> : vector<8x32xf32>
    %2 = tpu.matmul %0, %1, %cst {dimension_numbers = #tpu.dot_dimension_numbers<[1], [0], [0], [1], [0, 0, 1, 1], [], []>} : vector<8x144xbf16>, vector<144x32xbf16>, vector<8x32xf32> -> vector<8x32xf32>
    %c0_3 = arith.constant 0 : index
    %c0_4 = arith.constant 0 : index
    %3 = vector.load %arg3[%c0_3, %c0_4] : memref<1x32xf32, #tpu.memory_space<vmem>>, vector<1x32xf32>
    %4 = vector.broadcast %3 : vector<1x32xf32> to vector<8x32xf32>
    %5 = arith.addf %2, %4 : vector<8x32xf32>
    %cst_5 = arith.constant 0.000000e+00 : f32
    %6 = vector.broadcast %cst_5 : f32 to vector<8x32xf32>
    %7 = arith.maximumf %5, %6 : vector<8x32xf32>
    %c0_6 = arith.constant 0 : index
    %c0_7 = arith.constant 0 : index
    %8 = vector.load %arg4[%c0_6, %c0_7] : memref<8x32xf32, #tpu.memory_space<vmem>>, vector<8x32xf32>
    tpu.vector_store %arg4[%c0_6, %c0_7], %7 {strides = array<i32>} : memref<8x32xf32, #tpu.memory_space<vmem>>, vector<8x32xf32>,
    return
  }
  func.func @transform_0(%arg0: i32) -> (i32, i32) {
    %c0_i32 = arith.constant 0 : i32
    %c0_i32_0 = arith.constant 0 : i32
    return %arg0, %c0_i32 : i32, i32
  }
  func.func @transform_1(%arg0: i32) -> (i32, i32) {
    %c0_i32 = arith.constant 0 : i32
    %c0_i32_0 = arith.constant 0 : i32
    %c0_i32_1 = arith.constant 0 : i32
    return %c0_i32, %c0_i32_0 : i32, i32
  }
  func.func @transform_2(%arg0: i32) -> (i32, i32) {
    %c0_i32 = arith.constant 0 : i32
    %c0_i32_0 = arith.constant 0 : i32
    %c0_i32_1 = arith.constant 0 : i32
    return %c0_i32, %c0_i32_0 : i32, i32
  }
  func.func @transform_3(%arg0: i32) -> (i32, i32) {
    %c0_i32 = arith.constant 0 : i32
    %c0_i32_0 = arith.constant 0 : i32
    return %arg0, %c0_i32 : i32, i32
  }
}

module attributes {stable_mosaic.version = 11 : i64} {
  func.func @_mm_bias_kernel(%arg0: i32, %arg1: memref<8x16xbf16, #tpu.memory_space<vmem>>, %arg2: memref<16x32xbf16, #tpu.memory_space<vmem>>, %arg3: memref<1x32xf32, #tpu.memory_space<vmem>>, %arg4: memref<8x32xf32, #tpu.memory_space<vmem>>) attributes {dimension_semantics = [#tpu.dimension_semantics<parallel>], iteration_bounds = array<i64: 1>, scalar_prefetch = 0 : i64, scratch_operands = 0 : i64, tpu.core_type = #tpu.core_type<tc>, window_params = [{transform_indices = @transform_0, window_bounds = array<i64: 8, 16>}, {pipeline_mode = #tpu.pipeline_mode<synchronous>, transform_indices = @transform_1, window_bounds = array<i64: 16, 32>}, {pipeline_mode = #tpu.pipeline_mode<synchronous>, transform_indices = @transform_2, window_bounds = array<i64: 1, 32>}, {transform_indices = @transform_3, window_bounds = array<i64: 8, 32>}]} {
    %c0 = arith.constant 0 : index
    %c0_0 = arith.constant 0 : index
    %0 = vector.load %arg1[%c0, %c0_0] : memref<8x16xbf16, #tpu.memory_space<vmem>>, vector<8x16xbf16>
    %c0_1 = arith.constant 0 : index
    %c0_2 = arith.constant 0 : index
    %1 = vector.load %arg2[%c0_1, %c0_2] : memref<16x32xbf16, #tpu.memory_space<vmem>>, vector<16x32xbf16>
    %cst = arith.constant dense<0.000000e+00> : vector<8x32xf32>
    %2 = tpu.matmul %0, %1, %cst {dimension_numbers = #tpu.dot_dimension_numbers<[1], [0], [0], [1], [0, 0, 1, 1], [], []>} : vector<8x16xbf16>, vector<16x32xbf16>, vector<8x32xf32> -> vector<8x32xf32>
    %c0_3 = arith.constant 0 : index
    %c0_4 = arith.constant 0 : index
    %3 = vector.load %arg3[%c0_3, %c0_4] : memref<1x32xf32, #tpu.memory_space<vmem>>, vector<1x32xf32>
    %4 = vector.broadcast %3 : vector<1x32xf32> to vector<8x32xf32>
    %5 = arith.addf %2, %4 : vector<8x32xf32>
    %c0_5 = arith.constant 0 : index
    %c0_6 = arith.constant 0 : index
    %6 = vector.load %arg4[%c0_5, %c0_6] : memref<8x32xf32, #tpu.memory_space<vmem>>, vector<8x32xf32>
    tpu.vector_store %arg4[%c0_5, %c0_6], %5 {strides = array<i32>} : memref<8x32xf32, #tpu.memory_space<vmem>>, vector<8x32xf32>,
    return
  }
  func.func @transform_0(%arg0: i32) -> (i32, i32) {
    %c0_i32 = arith.constant 0 : i32
    %c0_i32_0 = arith.constant 0 : i32
    return %arg0, %c0_i32 : i32, i32
  }
  func.func @transform_1(%arg0: i32) -> (i32, i32) {
    %c0_i32 = arith.constant 0 : i32
    %c0_i32_0 = arith.constant 0 : i32
    %c0_i32_1 = arith.constant 0 : i32
    return %c0_i32, %c0_i32_0 : i32, i32
  }
  func.func @transform_2(%arg0: i32) -> (i32, i32) {
    %c0_i32 = arith.constant 0 : i32
    %c0_i32_0 = arith.constant 0 : i32
    %c0_i32_1 = arith.constant 0 : i32
    return %c0_i32, %c0_i32_0 : i32, i32
  }
  func.func @transform_3(%arg0: i32) -> (i32, i32) {
    %c0_i32 = arith.constant 0 : i32
    %c0_i32_0 = arith.constant 0 : i32
    return %arg0, %c0_i32 : i32, i32
  }
}

module attributes {stable_mosaic.version = 11 : i64} {
  func.func @_mm_bias_res_kernel(%arg0: i32, %arg1: memref<8x288xbf16, #tpu.memory_space<vmem>>, %arg2: memref<288x32xbf16, #tpu.memory_space<vmem>>, %arg3: memref<1x32xf32, #tpu.memory_space<vmem>>, %arg4: memref<8x32xf32, #tpu.memory_space<vmem>>, %arg5: memref<8x32xf32, #tpu.memory_space<vmem>>) attributes {dimension_semantics = [#tpu.dimension_semantics<parallel>], iteration_bounds = array<i64: 1>, scalar_prefetch = 0 : i64, scratch_operands = 0 : i64, tpu.core_type = #tpu.core_type<tc>, window_params = [{transform_indices = @transform_0, window_bounds = array<i64: 8, 288>}, {pipeline_mode = #tpu.pipeline_mode<synchronous>, transform_indices = @transform_1, window_bounds = array<i64: 288, 32>}, {pipeline_mode = #tpu.pipeline_mode<synchronous>, transform_indices = @transform_2, window_bounds = array<i64: 1, 32>}, {transform_indices = @transform_3, window_bounds = array<i64: 8, 32>}, {transform_indices = @transform_4, window_bounds = array<i64: 8, 32>}]} {
    %c0 = arith.constant 0 : index
    %c0_0 = arith.constant 0 : index
    %0 = vector.load %arg1[%c0, %c0_0] : memref<8x288xbf16, #tpu.memory_space<vmem>>, vector<8x288xbf16>
    %c0_1 = arith.constant 0 : index
    %c0_2 = arith.constant 0 : index
    %1 = vector.load %arg2[%c0_1, %c0_2] : memref<288x32xbf16, #tpu.memory_space<vmem>>, vector<288x32xbf16>
    %cst = arith.constant dense<0.000000e+00> : vector<8x32xf32>
    %2 = tpu.matmul %0, %1, %cst {dimension_numbers = #tpu.dot_dimension_numbers<[1], [0], [0], [1], [0, 0, 1, 1], [], []>} : vector<8x288xbf16>, vector<288x32xbf16>, vector<8x32xf32> -> vector<8x32xf32>
    %c0_3 = arith.constant 0 : index
    %c0_4 = arith.constant 0 : index
    %3 = vector.load %arg3[%c0_3, %c0_4] : memref<1x32xf32, #tpu.memory_space<vmem>>, vector<1x32xf32>
    %4 = vector.broadcast %3 : vector<1x32xf32> to vector<8x32xf32>
    %5 = arith.addf %2, %4 : vector<8x32xf32>
    %c0_5 = arith.constant 0 : index
    %c0_6 = arith.constant 0 : index
    %6 = vector.load %arg4[%c0_5, %c0_6] : memref<8x32xf32, #tpu.memory_space<vmem>>, vector<8x32xf32>
    %7 = arith.addf %5, %6 : vector<8x32xf32>
    %cst_7 = arith.constant 0.000000e+00 : f32
    %8 = vector.broadcast %cst_7 : f32 to vector<8x32xf32>
    %9 = arith.maximumf %7, %8 : vector<8x32xf32>
    %c0_8 = arith.constant 0 : index
    %c0_9 = arith.constant 0 : index
    %10 = vector.load %arg5[%c0_8, %c0_9] : memref<8x32xf32, #tpu.memory_space<vmem>>, vector<8x32xf32>
    tpu.vector_store %arg5[%c0_8, %c0_9], %9 {strides = array<i32>} : memref<8x32xf32, #tpu.memory_space<vmem>>, vector<8x32xf32>,
    return
  }
  func.func @transform_0(%arg0: i32) -> (i32, i32) {
    %c0_i32 = arith.constant 0 : i32
    %c0_i32_0 = arith.constant 0 : i32
    return %arg0, %c0_i32 : i32, i32
  }
  func.func @transform_1(%arg0: i32) -> (i32, i32) {
    %c0_i32 = arith.constant 0 : i32
    %c0_i32_0 = arith.constant 0 : i32
    %c0_i32_1 = arith.constant 0 : i32
    return %c0_i32, %c0_i32_0 : i32, i32
  }
  func.func @transform_2(%arg0: i32) -> (i32, i32) {
    %c0_i32 = arith.constant 0 : i32
    %c0_i32_0 = arith.constant 0 : i32
    %c0_i32_1 = arith.constant 0 : i32
    return %c0_i32, %c0_i32_0 : i32, i32
  }
  func.func @transform_3(%arg0: i32) -> (i32, i32) {
    %c0_i32 = arith.constant 0 : i32
    %c0_i32_0 = arith.constant 0 : i32
    return %arg0, %c0_i32 : i32, i32
  }
  func.func @transform_4(%arg0: i32) -> (i32, i32) {
    %c0_i32 = arith.constant 0 : i32
    %c0_i32_0 = arith.constant 0 : i32
    return %arg0, %c0_i32 : i32, i32
  }
}

module attributes {stable_mosaic.version = 11 : i64} {
  func.func @_mm_bias_kernel(%arg0: i32, %arg1: memref<8x288xbf16, #tpu.memory_space<vmem>>, %arg2: memref<288x32xbf16, #tpu.memory_space<vmem>>, %arg3: memref<1x32xf32, #tpu.memory_space<vmem>>, %arg4: memref<8x32xf32, #tpu.memory_space<vmem>>) attributes {dimension_semantics = [#tpu.dimension_semantics<parallel>], iteration_bounds = array<i64: 1>, scalar_prefetch = 0 : i64, scratch_operands = 0 : i64, tpu.core_type = #tpu.core_type<tc>, window_params = [{transform_indices = @transform_0, window_bounds = array<i64: 8, 288>}, {pipeline_mode = #tpu.pipeline_mode<synchronous>, transform_indices = @transform_1, window_bounds = array<i64: 288, 32>}, {pipeline_mode = #tpu.pipeline_mode<synchronous>, transform_indices = @transform_2, window_bounds = array<i64: 1, 32>}, {transform_indices = @transform_3, window_bounds = array<i64: 8, 32>}]} {
    %c0 = arith.constant 0 : index
    %c0_0 = arith.constant 0 : index
    %0 = vector.load %arg1[%c0, %c0_0] : memref<8x288xbf16, #tpu.memory_space<vmem>>, vector<8x288xbf16>
    %c0_1 = arith.constant 0 : index
    %c0_2 = arith.constant 0 : index
    %1 = vector.load %arg2[%c0_1, %c0_2] : memref<288x32xbf16, #tpu.memory_space<vmem>>, vector<288x32xbf16>
    %cst = arith.constant dense<0.000000e+00> : vector<8x32xf32>
    %2 = tpu.matmul %0, %1, %cst {dimension_numbers = #tpu.dot_dimension_numbers<[1], [0], [0], [1], [0, 0, 1, 1], [], []>} : vector<8x288xbf16>, vector<288x32xbf16>, vector<8x32xf32> -> vector<8x32xf32>
    %c0_3 = arith.constant 0 : index
    %c0_4 = arith.constant 0 : index
    %3 = vector.load %arg3[%c0_3, %c0_4] : memref<1x32xf32, #tpu.memory_space<vmem>>, vector<1x32xf32>
    %4 = vector.broadcast %3 : vector<1x32xf32> to vector<8x32xf32>
    %5 = arith.addf %2, %4 : vector<8x32xf32>
    %cst_5 = arith.constant 0.000000e+00 : f32
    %6 = vector.broadcast %cst_5 : f32 to vector<8x32xf32>
    %7 = arith.maximumf %5, %6 : vector<8x32xf32>
    %c0_6 = arith.constant 0 : index
    %c0_7 = arith.constant 0 : index
    %8 = vector.load %arg4[%c0_6, %c0_7] : memref<8x32xf32, #tpu.memory_space<vmem>>, vector<8x32xf32>
    tpu.vector_store %arg4[%c0_6, %c0_7], %7 {strides = array<i32>} : memref<8x32xf32, #tpu.memory_space<vmem>>, vector<8x32xf32>,
    return
  }
  func.func @transform_0(%arg0: i32) -> (i32, i32) {
    %c0_i32 = arith.constant 0 : i32
    %c0_i32_0 = arith.constant 0 : i32
    return %arg0, %c0_i32 : i32, i32
  }
  func.func @transform_1(%arg0: i32) -> (i32, i32) {
    %c0_i32 = arith.constant 0 : i32
    %c0_i32_0 = arith.constant 0 : i32
    %c0_i32_1 = arith.constant 0 : i32
    return %c0_i32, %c0_i32_0 : i32, i32
  }
  func.func @transform_2(%arg0: i32) -> (i32, i32) {
    %c0_i32 = arith.constant 0 : i32
    %c0_i32_0 = arith.constant 0 : i32
    %c0_i32_1 = arith.constant 0 : i32
    return %c0_i32, %c0_i32_0 : i32, i32
  }
  func.func @transform_3(%arg0: i32) -> (i32, i32) {
    %c0_i32 = arith.constant 0 : i32
    %c0_i32_0 = arith.constant 0 : i32
    return %arg0, %c0_i32 : i32, i32
  }
}

module attributes {stable_mosaic.version = 11 : i64} {
  func.func @_mm_bias_kernel(%arg0: i32, %arg1: memref<8x288xbf16, #tpu.memory_space<vmem>>, %arg2: memref<288x64xbf16, #tpu.memory_space<vmem>>, %arg3: memref<1x64xf32, #tpu.memory_space<vmem>>, %arg4: memref<8x64xf32, #tpu.memory_space<vmem>>) attributes {dimension_semantics = [#tpu.dimension_semantics<parallel>], iteration_bounds = array<i64: 1>, scalar_prefetch = 0 : i64, scratch_operands = 0 : i64, tpu.core_type = #tpu.core_type<tc>, window_params = [{transform_indices = @transform_0, window_bounds = array<i64: 8, 288>}, {pipeline_mode = #tpu.pipeline_mode<synchronous>, transform_indices = @transform_1, window_bounds = array<i64: 288, 64>}, {pipeline_mode = #tpu.pipeline_mode<synchronous>, transform_indices = @transform_2, window_bounds = array<i64: 1, 64>}, {transform_indices = @transform_3, window_bounds = array<i64: 8, 64>}]} {
    %c0 = arith.constant 0 : index
    %c0_0 = arith.constant 0 : index
    %0 = vector.load %arg1[%c0, %c0_0] : memref<8x288xbf16, #tpu.memory_space<vmem>>, vector<8x288xbf16>
    %c0_1 = arith.constant 0 : index
    %c0_2 = arith.constant 0 : index
    %1 = vector.load %arg2[%c0_1, %c0_2] : memref<288x64xbf16, #tpu.memory_space<vmem>>, vector<288x64xbf16>
    %cst = arith.constant dense<0.000000e+00> : vector<8x64xf32>
    %2 = tpu.matmul %0, %1, %cst {dimension_numbers = #tpu.dot_dimension_numbers<[1], [0], [0], [1], [0, 0, 1, 1], [], []>} : vector<8x288xbf16>, vector<288x64xbf16>, vector<8x64xf32> -> vector<8x64xf32>
    %c0_3 = arith.constant 0 : index
    %c0_4 = arith.constant 0 : index
    %3 = vector.load %arg3[%c0_3, %c0_4] : memref<1x64xf32, #tpu.memory_space<vmem>>, vector<1x64xf32>
    %4 = vector.broadcast %3 : vector<1x64xf32> to vector<8x64xf32>
    %5 = arith.addf %2, %4 : vector<8x64xf32>
    %cst_5 = arith.constant 0.000000e+00 : f32
    %6 = vector.broadcast %cst_5 : f32 to vector<8x64xf32>
    %7 = arith.maximumf %5, %6 : vector<8x64xf32>
    %c0_6 = arith.constant 0 : index
    %c0_7 = arith.constant 0 : index
    %8 = vector.load %arg4[%c0_6, %c0_7] : memref<8x64xf32, #tpu.memory_space<vmem>>, vector<8x64xf32>
    tpu.vector_store %arg4[%c0_6, %c0_7], %7 {strides = array<i32>} : memref<8x64xf32, #tpu.memory_space<vmem>>, vector<8x64xf32>,
    return
  }
  func.func @transform_0(%arg0: i32) -> (i32, i32) {
    %c0_i32 = arith.constant 0 : i32
    %c0_i32_0 = arith.constant 0 : i32
    return %arg0, %c0_i32 : i32, i32
  }
  func.func @transform_1(%arg0: i32) -> (i32, i32) {
    %c0_i32 = arith.constant 0 : i32
    %c0_i32_0 = arith.constant 0 : i32
    %c0_i32_1 = arith.constant 0 : i32
    return %c0_i32, %c0_i32_0 : i32, i32
  }
  func.func @transform_2(%arg0: i32) -> (i32, i32) {
    %c0_i32 = arith.constant 0 : i32
    %c0_i32_0 = arith.constant 0 : i32
    %c0_i32_1 = arith.constant 0 : i32
    return %c0_i32, %c0_i32_0 : i32, i32
  }
  func.func @transform_3(%arg0: i32) -> (i32, i32) {
    %c0_i32 = arith.constant 0 : i32
    %c0_i32_0 = arith.constant 0 : i32
    return %arg0, %c0_i32 : i32, i32
  }
}

module attributes {stable_mosaic.version = 11 : i64} {
  func.func @_mm_bias_kernel(%arg0: i32, %arg1: memref<8x32xbf16, #tpu.memory_space<vmem>>, %arg2: memref<32x64xbf16, #tpu.memory_space<vmem>>, %arg3: memref<1x64xf32, #tpu.memory_space<vmem>>, %arg4: memref<8x64xf32, #tpu.memory_space<vmem>>) attributes {dimension_semantics = [#tpu.dimension_semantics<parallel>], iteration_bounds = array<i64: 1>, scalar_prefetch = 0 : i64, scratch_operands = 0 : i64, tpu.core_type = #tpu.core_type<tc>, window_params = [{transform_indices = @transform_0, window_bounds = array<i64: 8, 32>}, {pipeline_mode = #tpu.pipeline_mode<synchronous>, transform_indices = @transform_1, window_bounds = array<i64: 32, 64>}, {pipeline_mode = #tpu.pipeline_mode<synchronous>, transform_indices = @transform_2, window_bounds = array<i64: 1, 64>}, {transform_indices = @transform_3, window_bounds = array<i64: 8, 64>}]} {
    %c0 = arith.constant 0 : index
    %c0_0 = arith.constant 0 : index
    %0 = vector.load %arg1[%c0, %c0_0] : memref<8x32xbf16, #tpu.memory_space<vmem>>, vector<8x32xbf16>
    %c0_1 = arith.constant 0 : index
    %c0_2 = arith.constant 0 : index
    %1 = vector.load %arg2[%c0_1, %c0_2] : memref<32x64xbf16, #tpu.memory_space<vmem>>, vector<32x64xbf16>
    %cst = arith.constant dense<0.000000e+00> : vector<8x64xf32>
    %2 = tpu.matmul %0, %1, %cst {dimension_numbers = #tpu.dot_dimension_numbers<[1], [0], [0], [1], [0, 0, 1, 1], [], []>} : vector<8x32xbf16>, vector<32x64xbf16>, vector<8x64xf32> -> vector<8x64xf32>
    %c0_3 = arith.constant 0 : index
    %c0_4 = arith.constant 0 : index
    %3 = vector.load %arg3[%c0_3, %c0_4] : memref<1x64xf32, #tpu.memory_space<vmem>>, vector<1x64xf32>
    %4 = vector.broadcast %3 : vector<1x64xf32> to vector<8x64xf32>
    %5 = arith.addf %2, %4 : vector<8x64xf32>
    %c0_5 = arith.constant 0 : index
    %c0_6 = arith.constant 0 : index
    %6 = vector.load %arg4[%c0_5, %c0_6] : memref<8x64xf32, #tpu.memory_space<vmem>>, vector<8x64xf32>
    tpu.vector_store %arg4[%c0_5, %c0_6], %5 {strides = array<i32>} : memref<8x64xf32, #tpu.memory_space<vmem>>, vector<8x64xf32>,
    return
  }
  func.func @transform_0(%arg0: i32) -> (i32, i32) {
    %c0_i32 = arith.constant 0 : i32
    %c0_i32_0 = arith.constant 0 : i32
    return %arg0, %c0_i32 : i32, i32
  }
  func.func @transform_1(%arg0: i32) -> (i32, i32) {
    %c0_i32 = arith.constant 0 : i32
    %c0_i32_0 = arith.constant 0 : i32
    %c0_i32_1 = arith.constant 0 : i32
    return %c0_i32, %c0_i32_0 : i32, i32
  }
  func.func @transform_2(%arg0: i32) -> (i32, i32) {
    %c0_i32 = arith.constant 0 : i32
    %c0_i32_0 = arith.constant 0 : i32
    %c0_i32_1 = arith.constant 0 : i32
    return %c0_i32, %c0_i32_0 : i32, i32
  }
  func.func @transform_3(%arg0: i32) -> (i32, i32) {
    %c0_i32 = arith.constant 0 : i32
    %c0_i32_0 = arith.constant 0 : i32
    return %arg0, %c0_i32 : i32, i32
  }
}

module attributes {stable_mosaic.version = 11 : i64} {
  func.func @_mm_bias_res_kernel(%arg0: i32, %arg1: memref<8x576xbf16, #tpu.memory_space<vmem>>, %arg2: memref<576x64xbf16, #tpu.memory_space<vmem>>, %arg3: memref<1x64xf32, #tpu.memory_space<vmem>>, %arg4: memref<8x64xf32, #tpu.memory_space<vmem>>, %arg5: memref<8x64xf32, #tpu.memory_space<vmem>>) attributes {dimension_semantics = [#tpu.dimension_semantics<parallel>], iteration_bounds = array<i64: 1>, scalar_prefetch = 0 : i64, scratch_operands = 0 : i64, tpu.core_type = #tpu.core_type<tc>, window_params = [{transform_indices = @transform_0, window_bounds = array<i64: 8, 576>}, {pipeline_mode = #tpu.pipeline_mode<synchronous>, transform_indices = @transform_1, window_bounds = array<i64: 576, 64>}, {pipeline_mode = #tpu.pipeline_mode<synchronous>, transform_indices = @transform_2, window_bounds = array<i64: 1, 64>}, {transform_indices = @transform_3, window_bounds = array<i64: 8, 64>}, {transform_indices = @transform_4, window_bounds = array<i64: 8, 64>}]} {
    %c0 = arith.constant 0 : index
    %c0_0 = arith.constant 0 : index
    %0 = vector.load %arg1[%c0, %c0_0] : memref<8x576xbf16, #tpu.memory_space<vmem>>, vector<8x576xbf16>
    %c0_1 = arith.constant 0 : index
    %c0_2 = arith.constant 0 : index
    %1 = vector.load %arg2[%c0_1, %c0_2] : memref<576x64xbf16, #tpu.memory_space<vmem>>, vector<576x64xbf16>
    %cst = arith.constant dense<0.000000e+00> : vector<8x64xf32>
    %2 = tpu.matmul %0, %1, %cst {dimension_numbers = #tpu.dot_dimension_numbers<[1], [0], [0], [1], [0, 0, 1, 1], [], []>} : vector<8x576xbf16>, vector<576x64xbf16>, vector<8x64xf32> -> vector<8x64xf32>
    %c0_3 = arith.constant 0 : index
    %c0_4 = arith.constant 0 : index
    %3 = vector.load %arg3[%c0_3, %c0_4] : memref<1x64xf32, #tpu.memory_space<vmem>>, vector<1x64xf32>
    %4 = vector.broadcast %3 : vector<1x64xf32> to vector<8x64xf32>
    %5 = arith.addf %2, %4 : vector<8x64xf32>
    %c0_5 = arith.constant 0 : index
    %c0_6 = arith.constant 0 : index
    %6 = vector.load %arg4[%c0_5, %c0_6] : memref<8x64xf32, #tpu.memory_space<vmem>>, vector<8x64xf32>
    %7 = arith.addf %5, %6 : vector<8x64xf32>
    %cst_7 = arith.constant 0.000000e+00 : f32
    %8 = vector.broadcast %cst_7 : f32 to vector<8x64xf32>
    %9 = arith.maximumf %7, %8 : vector<8x64xf32>
    %c0_8 = arith.constant 0 : index
    %c0_9 = arith.constant 0 : index
    %10 = vector.load %arg5[%c0_8, %c0_9] : memref<8x64xf32, #tpu.memory_space<vmem>>, vector<8x64xf32>
    tpu.vector_store %arg5[%c0_8, %c0_9], %9 {strides = array<i32>} : memref<8x64xf32, #tpu.memory_space<vmem>>, vector<8x64xf32>,
    return
  }
  func.func @transform_0(%arg0: i32) -> (i32, i32) {
    %c0_i32 = arith.constant 0 : i32
    %c0_i32_0 = arith.constant 0 : i32
    return %arg0, %c0_i32 : i32, i32
  }
  func.func @transform_1(%arg0: i32) -> (i32, i32) {
    %c0_i32 = arith.constant 0 : i32
    %c0_i32_0 = arith.constant 0 : i32
    %c0_i32_1 = arith.constant 0 : i32
    return %c0_i32, %c0_i32_0 : i32, i32
  }
  func.func @transform_2(%arg0: i32) -> (i32, i32) {
    %c0_i32 = arith.constant 0 : i32
    %c0_i32_0 = arith.constant 0 : i32
    %c0_i32_1 = arith.constant 0 : i32
    return %c0_i32, %c0_i32_0 : i32, i32
  }
  func.func @transform_3(%arg0: i32) -> (i32, i32) {
    %c0_i32 = arith.constant 0 : i32
    %c0_i32_0 = arith.constant 0 : i32
    return %arg0, %c0_i32 : i32, i32
  }
  func.func @transform_4(%arg0: i32) -> (i32, i32) {
    %c0_i32 = arith.constant 0 : i32
    %c0_i32_0 = arith.constant 0 : i32
    return %arg0, %c0_i32 : i32, i32
  }
}

</mosaic_0001>

<llo_original>
// kernel: resnet_forward_pallas.19
$region0: #{resnet_forward_pallas.19}
  #allocation0 [shape = 'u32[]', space=smem, size = 0x4, offset = 0x4, fixed_abs, tag = 'smem constant byte address 0x4 - core index']
  #allocation1 [shape = 'u32[72,128]{1,0:T(1,128)}', space=vmem, size = 0x9000, scoped, tag = 'internal scratch']
  %s0 = inlined_call_operand.vmem [shape: bf16[512,36], index: 0, kind: input, shape index: {}]
  %s1 = inlined_call_operand.vmem [shape: bf16[36,8], index: 1, kind: input, shape index: {}]
  %s2 = inlined_call_operand.vmem [shape: f32[1,8], index: 2, kind: input, shape index: {}]
  %s3 = inlined_call_operand.vmem [shape: f32[512,8], index: 3, kind: output, shape index: {}]
  %s4 = sld [smem:[#allocation0]]
  $region45: #{resnet_forward_pallas.19} parent=0
    _
  %s6 = ssub.s32 1, %s4
  %s7 = scalar_select 0, %s6, %s4
  loop: start=0, step=1, limit=4
  $region2: #{resnet_forward_pallas.19} parent=0 // loop_pre_header
    _
  $region3: #{resnet_forward_pallas.19} parent=0 // loop_header
    %s9 = sphi 0, %s13
    %p10 = scmp.ge.s32.totalorder %s9, 4
    %s19 = sphi 0, %s21
    %s22 = sphi 0, %s19
    %s23 = sphi 0, %s22
    %s39 = sphi 0, %s23
    %s43 = sphi 0, %s43
    %s45 = sphi 0, %s43
    %s46 = sphi 0, %s45
    %s60 = sphi 0, %s46
    %s64 = sphi 0, %s64
    %s66 = sphi 0, %s64
    %s67 = sphi 0, %s66
    %s81 = sphi 0, %s67
    %s87 = sphi 0, %s89
    %s90 = sphi 0, %s87
    %s91 = sphi 0, %s90
    %s107 = sphi 0, %s91
  $region4: #{resnet_forward_pallas.19} parent=0 // loop_header_branch
    %12 = sbr.rel (%p10) target = $region8
  $region5: #{resnet_forward_pallas.19} parent=0 // loop_body
    %s14 = ssub.s32 %s9, 1
    %s15 = ssub.s32 %s9, 2
    %s16 = sadd.s32 %s9, 1
    %s17 = ssub.s32 %s9, %s16
    %p18 = scmp.eq.s32.totalorder %s17, 0
    %s20 = sadd.s32 %s19, 1
    %s21 = scalar_select %p18, %s19, %s20
    %p24 = pneg %p18
    %p25 = scmp.eq.s32.totalorder %s9, 1
    %p26 = por %p24, %p25
    %p27 = scmp.ne.s32.totalorder %s19, %s22
    %p28 = scmp.eq.s32.totalorder %s9, 0
    %p29 = por %p27, %p28
    %p30 = scmp.ne.s32.totalorder %s19, %s22
    %p31 = scmp.eq.s32.totalorder %s14, 1
    %p32 = por %p30, %p31
    %p33 = scmp.ne.s32.totalorder %s22, %s23
    %p34 = scmp.eq.s32.totalorder %s14, 0
    %p35 = por %p33, %p34
    %p36 = scmp.ne.s32.totalorder %s22, %s23
    %p37 = scmp.eq.s32.totalorder %s15, 1
    %p38 = por %p36, %p37
    %p40 = scmp.ne.s32.totalorder %s23, %s39
    %p41 = scmp.eq.s32.totalorder %s15, 0
    %p42 = por %p40, %p41
    %s44 = sadd.s32 %s43, 1
    %p47 = scmp.eq.s32.totalorder %s9, 1
    %p48 = scmp.ne.s32.totalorder %s43, %s45
    %p49 = scmp.eq.s32.totalorder %s9, 0
    %p50 = por %p48, %p49
    %p51 = scmp.ne.s32.totalorder %s43, %s45
    %p52 = scmp.eq.s32.totalorder %s14, 1
    %p53 = por %p51, %p52
    %p54 = scmp.ne.s32.totalorder %s45, %s46
    %p55 = scmp.eq.s32.totalorder %s14, 0
    %p56 = por %p54, %p55
    %p57 = scmp.ne.s32.totalorder %s45, %s46
    %p58 = scmp.eq.s32.totalorder %s15, 1
    %p59 = por %p57, %p58
    %p61 = scmp.ne.s32.totalorder %s46, %s60
    %p62 = scmp.eq.s32.totalorder %s15, 0
    %p63 = por %p61, %p62
    %s65 = sadd.s32 %s64, 1
    %p68 = scmp.eq.s32.totalorder %s9, 1
    %p69 = scmp.ne.s32.totalorder %s64, %s66
    %p70 = scmp.eq.s32.totalorder %s9, 0
    %p71 = por %p69, %p70
    %p72 = scmp.ne.s32.totalorder %s64, %s66
    %p73 = scmp.eq.s32.totalorder %s14, 1
    %p74 = por %p72, %p73
    %p75 = scmp.ne.s32.totalorder %s66, %s67
    %p76 = scmp.eq.s32.totalorder %s14, 0
    %p77 = por %p75, %p76
    %p78 = scmp.ne.s32.totalorder %s66, %s67
    %p79 = scmp.eq.s32.totalorder %s15, 1
    %p80 = por %p78, %p79
    %p82 = scmp.ne.s32.totalorder %s67, %s81
    %p83 = scmp.eq.s32.totalorder %s15, 0
    %p84 = por %p82, %p83
    %s85 = ssub.s32 %s9, %s16
    %p86 = scmp.eq.s32.totalorder %s85, 0
    %s88 = sadd.s32 %s87, 1
    %s89 = scalar_select %p86, %s87, %s88
    %p92 = pneg %p86
    %p93 = scmp.eq.s32.totalorder %s9, 1
    %p94 = por %p92, %p93
    %p95 = scmp.ne.s32.totalorder %s87, %s90
    %p96 = scmp.eq.s32.totalorder %s9, 0
    %p97 = por %p95, %p96
    %p98 = scmp.ne.s32.totalorder %s87, %s90
    %p99 = scmp.eq.s32.totalorder %s14, 1
    %p100 = por %p98, %p99
    %p101 = scmp.ne.s32.totalorder %s90, %s91
    %p102 = scmp.eq.s32.totalorder %s14, 0
    %p103 = por %p101, %p102
    %p104 = scmp.ne.s32.totalorder %s90, %s91
    %p105 = scmp.eq.s32.totalorder %s15, 1
    %p106 = por %p104, %p105
    %p108 = scmp.ne.s32.totalorder %s91, %s107
    %p109 = scmp.eq.s32.totalorder %s15, 0
    %p110 = por %p108, %p109
    %p111 = scmp.le.s32.totalorder 1, %s9
    %p112 = scmp.lt.s32.totalorder %s9, 3
    %p113 = pnand %p111, %p112
    %p114 = pneg %p113
    // Predicated region
    $region9: #{resnet_forward_pallas.19} parent=5 // pred_check
      _
    $region10: #{resnet_forward_pallas.19} parent=5 // pred_check_branch
      %116 = sbr.rel (%p113) target = $region12
    $region11: #{resnet_forward_pallas.19} parent=5 // pred_region
      %s117 = ssub.s32 %s9, 1
      // Predicated region
      $region13: #{resnet_forward_pallas.19} parent=11 // pred_check
        %p118 = pneg %p56
      $region14: #{resnet_forward_pallas.19} parent=11 // pred_check_branch
        %120 = sbr.rel (%p118) target = $region16
      $region15: #{resnet_forward_pallas.19} parent=11 // pred_region
        _
      $region16: #{resnet_forward_pallas.19} parent=11 // pred_fallthru
        _
      // Predicated region
      $region17: #{resnet_forward_pallas.19} parent=11 // pred_check
        %p121 = pneg %p77
      $region18: #{resnet_forward_pallas.19} parent=11 // pred_check_branch
        %123 = sbr.rel (%p121) target = $region20
      $region19: #{resnet_forward_pallas.19} parent=11 // pred_region
        _
      $region20: #{resnet_forward_pallas.19} parent=11 // pred_fallthru
        _
    $region12: #{resnet_forward_pallas.19} parent=5 // pred_fallthru
      _
    %p124 = scmp.lt.s32.totalorder %s9, 2
    // Predicated region
    $region21: #{resnet_forward_pallas.19} parent=5 // pred_check
      %p125 = pneg %p124
    $region22: #{resnet_forward_pallas.19} parent=5 // pred_check_branch
      %127 = sbr.rel (%p125) target = $region24
    $region23: #{resnet_forward_pallas.19} parent=5 // pred_region
      // Predicated region
      $region25: #{resnet_forward_pallas.19} parent=23 // pred_check
        %p128 = pneg %p29
      $region26: #{resnet_forward_pallas.19} parent=23 // pred_check_branch
        %130 = sbr.rel (%p128) target = $region28
      $region27: #{resnet_forward_pallas.19} parent=23 // pred_region
        %s131 = smul.u32 32, %s9
        %p132 = scmp.lt.s32.totalorder %s131, 63
        %s133 = scalar_select %p132, %s131, 63
        %s134 = smul.addr %s133, 4
        %s135 = scalar_lea.vmem %s0, %s134
        %s136 = smul.u32 32, %s9
      $region28: #{resnet_forward_pallas.19} parent=23 // pred_fallthru
        _
    $region24: #{resnet_forward_pallas.19} parent=5 // pred_fallthru
      _
    %p137 = scmp.le.s32.totalorder 1, %s9
    %p138 = scmp.lt.s32.totalorder %s9, 3
    %p139 = pnand %p137, %p138
    %p140 = pneg %p139
    // Predicated region
    $region29: #{resnet_forward_pallas.19} parent=5 // pred_check
      _
    $region30: #{resnet_forward_pallas.19} parent=5 // pred_check_branch
      %142 = sbr.rel (%p139) target = $region32
    $region31: #{resnet_forward_pallas.19} parent=5 // pred_region
      %s143 = ssub.s32 %s9, 1
      %s144 = smul.u32 32, %s14
      %p145 = scmp.lt.s32.totalorder %s144, 63
      %s146 = scalar_select %p145, %s144, 63
      %s147 = smul.addr %s146, 4
      %s148 = scalar_lea.vmem %s0, %s147
      %p149 = pneg %p35
      %p150 = pneg %p32
      %p151 = pneg %p56
      %p152 = pneg %p53
      %p153 = pneg %p77
      %p154 = pneg %p74
      %p155 = pneg %p103
      %p156 = pneg %p100
      %s157 = smul.u32 32, %s14
      %p158 = scmp.lt.s32.totalorder %s157, 63
      %s159 = scalar_select %p158, %s157, 63
      %s160 = smul.addr %s159, 8
      %s161 = scalar_lea.vmem %s3, %s160
      %s162 = smul.u32 32, %s14
      %p163 = scmp.lt.s32.totalorder %s162, 63
      %s164 = scalar_select %p163, %s162, 63
      %s165 = smul.addr %s164, 4
      %s166 = scalar_lea.vmem %s0, %s165
      %s167 = smul.u32 32, %s14
      %s168 = smul.u32 32, %s14
      %p169 = scmp.lt.s32.totalorder %s168, 63
      %s170 = scalar_select %p169, %s168, 63
      %s171 = smul.addr %s170, 8
      %s172 = scalar_lea.vmem %s3, %s171
      %s173 = smul.u32 32, %s14
      %v175 = vld [vmem:[%s166] sm:$0xf]
      %v176 = vld [vmem:[%s166 + $0x4] sm:$0xf]
      %v177 = vld [vmem:[%s166 + $0x8] sm:$0xf]
      %v178 = vld [vmem:[%s166 + $0xc] sm:$0xf]
      %v179 = vld [vmem:[%s166 + $0x10] sm:$0xf]
      %v180 = vld [vmem:[%s166 + $0x14] sm:$0xf]
      %v181 = vld [vmem:[%s166 + $0x18] sm:$0xf]
      %v182 = vld [vmem:[%s166 + $0x1c] sm:$0xf]
      %v183 = vld [vmem:[%s166 + $0x20] sm:$0xf]
      %v184 = vld [vmem:[%s166 + $0x24] sm:$0xf]
      %v185 = vld [vmem:[%s166 + $0x28] sm:$0xf]
      %v186 = vld [vmem:[%s166 + $0x2c] sm:$0xf]
      %v187 = vld [vmem:[%s166 + $0x30] sm:$0xf]
      %v188 = vld [vmem:[%s166 + $0x34] sm:$0xf]
      %v189 = vld [vmem:[%s166 + $0x38] sm:$0xf]
      %v190 = vld [vmem:[%s166 + $0x3c] sm:$0xf]
      %v191 = vld [vmem:[%s166 + $0x40] sm:$0xf]
      %v192 = vld [vmem:[%s166 + $0x44] sm:$0xf]
      %v193 = vld [vmem:[%s166 + $0x48] sm:$0xf]
      %v194 = vld [vmem:[%s166 + $0x4c] sm:$0xf]
      %v195 = vld [vmem:[%s166 + $0x50] sm:$0xf]
      %v196 = vld [vmem:[%s166 + $0x54] sm:$0xf]
      %v197 = vld [vmem:[%s166 + $0x58] sm:$0xf]
      %v198 = vld [vmem:[%s166 + $0x5c] sm:$0xf]
      %v199 = vld [vmem:[%s166 + $0x60] sm:$0xf]
      %v200 = vld [vmem:[%s166 + $0x64] sm:$0xf]
      %v201 = vld [vmem:[%s166 + $0x68] sm:$0xf]
      %v202 = vld [vmem:[%s166 + $0x6c] sm:$0xf]
      %v203 = vld [vmem:[%s166 + $0x70] sm:$0xf]
      %v204 = vld [vmem:[%s166 + $0x74] sm:$0xf]
      %v205 = vld [vmem:[%s166 + $0x78] sm:$0xf]
      %v206 = vld [vmem:[%s166 + $0x7c] sm:$0xf]
      %v207 = vld [vmem:[%s1] sm:$0xf]
      %v208 = vld [vmem:[%s1 + $0x4] sm:$0xf]
      %v209 = vld [vmem:[%s1 + $0x8] sm:$0xf]
      %v210 = vld [vmem:[%s1 + $0xc] sm:$0xf]
      %v211 = vld [vmem:[%s1 + $0x10] sm:$0x3]
      %v212 = vld [vmem:[%s2] sm:$0x1]
      %v214 = vperm.slane %v212, 0
      %v248 = vunpack.c.l.b16 %v175
      %v249 = vunpack.c.l.b16 %v176
      %v250 = vunpack.c.l.b16 %v177
      %v251 = vunpack.c.l.b16 %v178
      %v252 = vunpack.c.l.b16 %v179
      %v253 = vunpack.c.l.b16 %v180
      %v254 = vunpack.c.l.b16 %v181
      %v255 = vunpack.c.l.b16 %v182
      %v256 = vunpack.c.l.b16 %v183
      %v257 = vunpack.c.l.b16 %v184
      %v258 = vunpack.c.l.b16 %v185
      %v259 = vunpack.c.l.b16 %v186
      %v260 = vunpack.c.l.b16 %v187
      %v261 = vunpack.c.l.b16 %v188
      %v262 = vunpack.c.l.b16 %v189
      %v263 = vunpack.c.l.b16 %v190
      %v264 = vunpack.c.l.b16 %v191
      %v265 = vunpack.c.l.b16 %v192
      %v266 = vunpack.c.l.b16 %v193
      %v267 = vunpack.c.l.b16 %v194
      %v268 = vunpack.c.l.b16 %v195
      %v269 = vunpack.c.l.b16 %v196
      %v270 = vunpack.c.l.b16 %v197
      %v271 = vunpack.c.l.b16 %v198
      %v272 = vunpack.c.l.b16 %v199
      %v273 = vunpack.c.l.b16 %v200
      %v274 = vunpack.c.l.b16 %v201
      %v275 = vunpack.c.l.b16 %v202
      %v276 = vunpack.c.l.b16 %v203
      %v277 = vunpack.c.l.b16 %v204
      %v278 = vunpack.c.l.b16 %v205
      %v279 = vunpack.c.l.b16 %v206
      %v280 = vpack.c.b16 %v249, %v248
      %v281 = vpack.c.b16 %v251, %v250
      %v282 = vpack.c.b16 %v253, %v252
      %v283 = vpack.c.b16 %v255, %v254
      %v284 = vpack.c.b16 %v257, %v256
      %v285 = vpack.c.b16 %v259, %v258
      %v286 = vpack.c.b16 %v261, %v260
      %v287 = vpack.c.b16 %v263, %v262
      %v288 = vpack.c.b16 %v265, %v264
      %v289 = vpack.c.b16 %v267, %v266
      %v290 = vpack.c.b16 %v269, %v268
      %v291 = vpack.c.b16 %v271, %v270
      %v292 = vpack.c.b16 %v273, %v272
      %v293 = vpack.c.b16 %v275, %v274
      %v294 = vpack.c.b16 %v277, %v276
      %v295 = vpack.c.b16 %v279, %v278
      %v301 = vunpack.c.l.b16 %v207
      %v302 = vunpack.c.l.b16 %v208
      %v303 = vunpack.c.l.b16 %v209
      %v304 = vunpack.c.l.b16 %v210
      %v305 = vunpack.c.l.b16 %v211
      %v306 = vpack.c.b16 %v302, %v301
      %v307 = vpack.c.b16 %v304, %v303
      %v308 = vpack.c.b16 %v305, %v305
      %vm311 = vcmask 293888
      %v313 = vsel %vm311, %v280, 0
      %v316 = vsel %vm311, %v281, 0
      %v319 = vsel %vm311, %v282, 0
      %v322 = vsel %vm311, %v283, 0
      %v325 = vsel %vm311, %v284, 0
      %v328 = vsel %vm311, %v285, 0
      %v331 = vsel %vm311, %v286, 0
      %v334 = vsel %vm311, %v287, 0
      %v337 = vsel %vm311, %v288, 0
      %v340 = vsel %vm311, %v289, 0
      %v343 = vsel %vm311, %v290, 0
      %v346 = vsel %vm311, %v291, 0
      %v349 = vsel %vm311, %v292, 0
      %v352 = vsel %vm311, %v293, 0
      %v355 = vsel %vm311, %v294, 0
      %v358 = vsel %vm311, %v295, 0
      %vm360 = vcmask 1041408
      %v362 = vsel %vm360, %v308, 0
      %364 = vmatpush.bf16.msra.mxu0 0
      %365 = vmatpush.bf16.msra.mxu0 0
      %366 = vmatpush.bf16.msra.mxu0 0
      %367 = vmatpush.bf16.msra.mxu0 0
      %368 = vmatpush.bf16.msra.mxu0 0
      %369 = vmatpush.bf16.msra.mxu0 %v362
      %370 = vmatpush.bf16.msra.mxu0 %v307
      %371 = vmatpush.bf16.msra.mxu0 %v306
      %372 = vmatmul.bf16.gmra.mxu0 %v313
      %v373 = vpop.f32.mrf.mxu0
      %v374 = vadd.f32 %v214, %v373
      %v375 = vpop.f32.mrf.mxu0
      %v376 = vadd.f32 %v214, %v375
      %377 = vmatmul.bf16.gmra.mxu0 %v316
      %v378 = vpop.f32.mrf.mxu0
      %v379 = vadd.f32 %v214, %v378
      %v380 = vpop.f32.mrf.mxu0
      %v381 = vadd.f32 %v214, %v380
      %382 = vmatmul.bf16.gmra.mxu0 %v319
      %v383 = vpop.f32.mrf.mxu0
      %v384 = vadd.f32 %v214, %v383
      %v385 = vpop.f32.mrf.mxu0
      %v386 = vadd.f32 %v214, %v385
      %387 = vmatmul.bf16.gmra.mxu0 %v322
      %v388 = vpop.f32.mrf.mxu0
      %v389 = vadd.f32 %v214, %v388
      %v390 = vpop.f32.mrf.mxu0
      %v391 = vadd.f32 %v214, %v390
      %392 = vmatmul.bf16.gmra.mxu0 %v325
      %v393 = vpop.f32.mrf.mxu0
      %v394 = vadd.f32 %v214, %v393
      %v395 = vpop.f32.mrf.mxu0
      %v396 = vadd.f32 %v214, %v395
      %397 = vmatmul.bf16.gmra.mxu0 %v328
      %v398 = vpop.f32.mrf.mxu0
      %v399 = vadd.f32 %v214, %v398
      %v400 = vpop.f32.mrf.mxu0
      %v401 = vadd.f32 %v214, %v400
      %402 = vmatmul.bf16.gmra.mxu0 %v331
      %v403 = vpop.f32.mrf.mxu0
      %v404 = vadd.f32 %v214, %v403
      %v405 = vpop.f32.mrf.mxu0
      %v406 = vadd.f32 %v214, %v405
      %407 = vmatmul.bf16.gmra.mxu0 %v334
      %v408 = vpop.f32.mrf.mxu0
      %v409 = vadd.f32 %v214, %v408
      %v410 = vpop.f32.mrf.mxu0
      %v411 = vadd.f32 %v214, %v410
      %412 = vmatmul.bf16.gmra.mxu0 %v337
      %v413 = vpop.f32.mrf.mxu0
      %v414 = vadd.f32 %v214, %v413
      %v415 = vpop.f32.mrf.mxu0
      %v416 = vadd.f32 %v214, %v415
      %417 = vmatmul.bf16.gmra.mxu0 %v340
      %v418 = vpop.f32.mrf.mxu0
      %v419 = vadd.f32 %v214, %v418
      %v420 = vpop.f32.mrf.mxu0
      %v421 = vadd.f32 %v214, %v420
      %422 = vmatmul.bf16.gmra.mxu0 %v343
      %v423 = vpop.f32.mrf.mxu0
      %v424 = vadd.f32 %v214, %v423
      %v425 = vpop.f32.mrf.mxu0
      %v426 = vadd.f32 %v214, %v425
      %427 = vmatmul.bf16.gmra.mxu0 %v346
      %v428 = vpop.f32.mrf.mxu0
      %v429 = vadd.f32 %v214, %v428
      %v430 = vpop.f32.mrf.mxu0
      %v431 = vadd.f32 %v214, %v430
      %432 = vmatmul.bf16.gmra.mxu0 %v349
      %v433 = vpop.f32.mrf.mxu0
      %v434 = vadd.f32 %v214, %v433
      %v435 = vpop.f32.mrf.mxu0
      %v436 = vadd.f32 %v214, %v435
      %437 = vmatmul.bf16.gmra.mxu0 %v352
      %v438 = vpop.f32.mrf.mxu0
      %v439 = vadd.f32 %v214, %v438
      %v440 = vpop.f32.mrf.mxu0
      %v441 = vadd.f32 %v214, %v440
      %442 = vmatmul.bf16.gmra.mxu0 %v355
      %v443 = vpop.f32.mrf.mxu0
      %v444 = vadd.f32 %v214, %v443
      %v445 = vpop.f32.mrf.mxu0
      %v446 = vadd.f32 %v214, %v445
      %447 = vmatmul.bf16.gmra.mxu0 %v358
      %v448 = vpop.f32.mrf.mxu0
      %v449 = vadd.f32 %v214, %v448
      %v450 = vpop.f32.mrf.mxu0
      %v451 = vadd.f32 %v214, %v450
      %452 = vdwg.mxu0
      %v453 = vmax.f32 %v374, 0.0
      %v454 = vmax.f32 %v376, 0.0
      %v455 = vmax.f32 %v379, 0.0
      %v456 = vmax.f32 %v381, 0.0
      %v457 = vmax.f32 %v384, 0.0
      %v458 = vmax.f32 %v386, 0.0
      %v459 = vmax.f32 %v389, 0.0
      %v460 = vmax.f32 %v391, 0.0
      %v461 = vmax.f32 %v394, 0.0
      %v462 = vmax.f32 %v396, 0.0
      %v463 = vmax.f32 %v399, 0.0
      %v464 = vmax.f32 %v401, 0.0
      %v465 = vmax.f32 %v404, 0.0
      %v466 = vmax.f32 %v406, 0.0
      %v467 = vmax.f32 %v409, 0.0
      %v468 = vmax.f32 %v411, 0.0
      %v469 = vmax.f32 %v414, 0.0
      %v470 = vmax.f32 %v416, 0.0
      %v471 = vmax.f32 %v419, 0.0
      %v472 = vmax.f32 %v421, 0.0
      %v473 = vmax.f32 %v424, 0.0
      %v474 = vmax.f32 %v426, 0.0
      %v475 = vmax.f32 %v429, 0.0
      %v476 = vmax.f32 %v431, 0.0
      %v477 = vmax.f32 %v434, 0.0
      %v478 = vmax.f32 %v436, 0.0
      %v479 = vmax.f32 %v439, 0.0
      %v480 = vmax.f32 %v441, 0.0
      %v481 = vmax.f32 %v444, 0.0
      %v482 = vmax.f32 %v446, 0.0
      %v483 = vmax.f32 %v449, 0.0
      %v484 = vmax.f32 %v451, 0.0
      %vm485 = vcmask 64512
      %486 = vst.msk [vmem:[%s172] sm:$0xff] %vm485, %v453
      %487 = vst.msk [vmem:[%s172 + $0x8] sm:$0xff] %vm485, %v454
      %488 = vst.msk [vmem:[%s172 + $0x10] sm:$0xff] %vm485, %v455
      %489 = vst.msk [vmem:[%s172 + $0x18] sm:$0xff] %vm485, %v456
      %490 = vst.msk [vmem:[%s172 + $0x20] sm:$0xff] %vm485, %v457
      %491 = vst.msk [vmem:[%s172 + $0x28] sm:$0xff] %vm485, %v458
      %492 = vst.msk [vmem:[%s172 + $0x30] sm:$0xff] %vm485, %v459
      %493 = vst.msk [vmem:[%s172 + $0x38] sm:$0xff] %vm485, %v460
      %494 = vst.msk [vmem:[%s172 + $0x40] sm:$0xff] %vm485, %v461
      %495 = vst.msk [vmem:[%s172 + $0x48] sm:$0xff] %vm485, %v462
      %496 = vst.msk [vmem:[%s172 + $0x50] sm:$0xff] %vm485, %v463
      %497 = vst.msk [vmem:[%s172 + $0x58] sm:$0xff] %vm485, %v464
      %498 = vst.msk [vmem:[%s172 + $0x60] sm:$0xff] %vm485, %v465
      %499 = vst.msk [vmem:[%s172 + $0x68] sm:$0xff] %vm485, %v466
      %500 = vst.msk [vmem:[%s172 + $0x70] sm:$0xff] %vm485, %v467
      %501 = vst.msk [vmem:[%s172 + $0x78] sm:$0xff] %vm485, %v468
      %502 = vst.msk [vmem:[%s172 + $0x80] sm:$0xff] %vm485, %v469
      %503 = vst.msk [vmem:[%s172 + $0x88] sm:$0xff] %vm485, %v470
      %504 = vst.msk [vmem:[%s172 + $0x90] sm:$0xff] %vm485, %v471
      %505 = vst.msk [vmem:[%s172 + $0x98] sm:$0xff] %vm485, %v472
      %506 = vst.msk [vmem:[%s172 + $0xa0] sm:$0xff] %vm485, %v473
      %507 = vst.msk [vmem:[%s172 + $0xa8] sm:$0xff] %vm485, %v474
      %508 = vst.msk [vmem:[%s172 + $0xb0] sm:$0xff] %vm485, %v475
      %509 = vst.msk [vmem:[%s172 + $0xb8] sm:$0xff] %vm485, %v476
      %510 = vst.msk [vmem:[%s172 + $0xc0] sm:$0xff] %vm485, %v477
      %511 = vst.msk [vmem:[%s172 + $0xc8] sm:$0xff] %vm485, %v478
      %512 = vst.msk [vmem:[%s172 + $0xd0] sm:$0xff] %vm485, %v479
      %513 = vst.msk [vmem:[%s172 + $0xd8] sm:$0xff] %vm485, %v480
      %514 = vst.msk [vmem:[%s172 + $0xe0] sm:$0xff] %vm485, %v481
      %515 = vst.msk [vmem:[%s172 + $0xe8] sm:$0xff] %vm485, %v482
      %516 = vst.msk [vmem:[%s172 + $0xf0] sm:$0xff] %vm485, %v483
      %517 = vst.msk [vmem:[%s172 + $0xf8] sm:$0xff] %vm485, %v484
      %s518 = smul.u32 32, %s14
      %p519 = scmp.lt.s32.totalorder %s518, 63
      %s520 = scalar_select %p519, %s518, 63
      %s521 = smul.addr %s520, 8
      %s522 = scalar_lea.vmem %s3, %s521
      // Predicated region
      $region33: #{resnet_forward_pallas.19} parent=31 // pred_check
        %p523 = pneg %p100
      $region34: #{resnet_forward_pallas.19} parent=31 // pred_check_branch
        %525 = sbr.rel (%p523) target = $region36
      $region35: #{resnet_forward_pallas.19} parent=31 // pred_region
        %s526 = smul.u32 32, %s14
      $region36: #{resnet_forward_pallas.19} parent=31 // pred_fallthru
        _
    $region32: #{resnet_forward_pallas.19} parent=5 // pred_fallthru
      _
    %p527 = scmp.le.s32.totalorder 2, %s9
    // Predicated region
    $region37: #{resnet_forward_pallas.19} parent=5 // pred_check
      %p528 = pneg %p527
    $region38: #{resnet_forward_pallas.19} parent=5 // pred_check_branch
      %530 = sbr.rel (%p528) target = $region40
    $region39: #{resnet_forward_pallas.19} parent=5 // pred_region
      %s531 = ssub.s32 %s9, 2
      // Predicated region
      $region41: #{resnet_forward_pallas.19} parent=39 // pred_check
        %p532 = pneg %p106
      $region42: #{resnet_forward_pallas.19} parent=39 // pred_check_branch
        %534 = sbr.rel (%p532) target = $region44
      $region43: #{resnet_forward_pallas.19} parent=39 // pred_region
        %s535 = smul.u32 32, %s15
        %p536 = scmp.lt.s32.totalorder %s535, 63
        %s537 = scalar_select %p536, %s535, 63
        %s538 = smul.addr %s537, 8
        %s539 = scalar_lea.vmem %s3, %s538
      $region44: #{resnet_forward_pallas.19} parent=39 // pred_fallthru
        _
    $region40: #{resnet_forward_pallas.19} parent=5 // pred_fallthru
      _
  $region6: #{resnet_forward_pallas.19} parent=0 // loop_footer
    %s13 = sadd.s32 1, %s9
  $region7: #{resnet_forward_pallas.19} parent=0 // loop_footer_branch
    %8 = sbr.rel target = $region3
  $region8: #{resnet_forward_pallas.19} parent=0 // loop_exit
    _

// kernel: resnet_forward_pallas.20
$region0: #{resnet_forward_pallas.20}
  #allocation0 [shape = 'u32[]', space=smem, size = 0x4, offset = 0x4, fixed_abs, tag = 'smem constant byte address 0x4 - core index']
  #allocation1 [shape = 'u32[72,128]{1,0:T(1,128)}', space=vmem, size = 0x9000, scoped, tag = 'internal scratch']
  %s0 = inlined_call_operand.vmem [shape: f32[128,8], index: 0, kind: input, shape index: {}]
  %s1 = inlined_call_operand.vmem [shape: f32[128,8], index: 1, kind: input, shape index: {}]
  %s2 = inlined_call_operand.vmem [shape: f32[128,8], index: 2, kind: input, shape index: {}]
  %s3 = inlined_call_operand.vmem [shape: f32[128,8], index: 3, kind: input, shape index: {}]
  %s4 = inlined_call_operand.vmem [shape: f32[128,8], index: 4, kind: output, shape index: {}]
  %s5 = sld [smem:[#allocation0]]
  $region26: #{resnet_forward_pallas.20} parent=0
    _
  %s7 = ssub.s32 1, %s5
  %s8 = scalar_select 0, %s7, %s5
  // Predicated region
  $region2: #{resnet_forward_pallas.20} parent=0 // pred_check
    _
  $region3: #{resnet_forward_pallas.20} parent=0 // pred_check_branch
    %10 = sbr.rel (0) target = $region5
  $region4: #{resnet_forward_pallas.20} parent=0 // pred_region
    _
  $region5: #{resnet_forward_pallas.20} parent=0 // pred_fallthru
    _
  // Predicated region
  $region6: #{resnet_forward_pallas.20} parent=0 // pred_check
    _
  $region7: #{resnet_forward_pallas.20} parent=0 // pred_check_branch
    %12 = sbr.rel (0) target = $region9
  $region8: #{resnet_forward_pallas.20} parent=0 // pred_region
    _
  $region9: #{resnet_forward_pallas.20} parent=0 // pred_fallthru
    _
  // Predicated region
  $region10: #{resnet_forward_pallas.20} parent=0 // pred_check
    _
  $region11: #{resnet_forward_pallas.20} parent=0 // pred_check_branch
    %14 = sbr.rel (0) target = $region13
  $region12: #{resnet_forward_pallas.20} parent=0 // pred_region
    _
  $region13: #{resnet_forward_pallas.20} parent=0 // pred_fallthru
    _
  // Predicated region
  $region14: #{resnet_forward_pallas.20} parent=0 // pred_check
    _
  $region15: #{resnet_forward_pallas.20} parent=0 // pred_check_branch
    %16 = sbr.rel (0) target = $region17
  $region16: #{resnet_forward_pallas.20} parent=0 // pred_region
    _
  $region17: #{resnet_forward_pallas.20} parent=0 // pred_fallthru
    _
  %v17 = vld [vmem:[%s0] sm:$0xff]
  %v18 = vld [vmem:[%s0 + $0x8] sm:$0xff]
  %v19 = vld [vmem:[%s0 + $0x10] sm:$0xff]
  %v20 = vld [vmem:[%s0 + $0x18] sm:$0xff]
  %v21 = vld [vmem:[%s0 + $0x20] sm:$0xff]
  %v22 = vld [vmem:[%s0 + $0x28] sm:$0xff]
  %v23 = vld [vmem:[%s0 + $0x30] sm:$0xff]
  %v24 = vld [vmem:[%s0 + $0x38] sm:$0xff]
  %v25 = vld [vmem:[%s0 + $0x40] sm:$0xff]
  %v26 = vld [vmem:[%s0 + $0x48] sm:$0xff]
  %v27 = vld [vmem:[%s0 + $0x50] sm:$0xff]
  %v28 = vld [vmem:[%s0 + $0x58] sm:$0xff]
  %v29 = vld [vmem:[%s0 + $0x60] sm:$0xff]
  %v30 = vld [vmem:[%s0 + $0x68] sm:$0xff]
  %v31 = vld [vmem:[%s0 + $0x70] sm:$0xff]
  %v32 = vld [vmem:[%s0 + $0x78] sm:$0xff]
  %v33 = vld [vmem:[%s1] sm:$0xff]
  %v34 = vld [vmem:[%s1 + $0x8] sm:$0xff]
  %v35 = vld [vmem:[%s1 + $0x10] sm:$0xff]
  %v36 = vld [vmem:[%s1 + $0x18] sm:$0xff]
  %v37 = vld [vmem:[%s1 + $0x20] sm:$0xff]
  %v38 = vld [vmem:[%s1 + $0x28] sm:$0xff]
  %v39 = vld [vmem:[%s1 + $0x30] sm:$0xff]
  %v40 = vld [vmem:[%s1 + $0x38] sm:$0xff]
  %v41 = vld [vmem:[%s1 + $0x40] sm:$0xff]
  %v42 = vld [vmem:[%s1 + $0x48] sm:$0xff]
  %v43 = vld [vmem:[%s1 + $0x50] sm:$0xff]
  %v44 = vld [vmem:[%s1 + $0x58] sm:$0xff]
  %v45 = vld [vmem:[%s1 + $0x60] sm:$0xff]
  %v46 = vld [vmem:[%s1 + $0x68] sm:$0xff]
  %v47 = vld [vmem:[%s1 + $0x70] sm:$0xff]
  %v48 = vld [vmem:[%s1 + $0x78] sm:$0xff]
  %v49 = vmax.f32 %v17, %v33
  %v50 = vmax.f32 %v18, %v34
  %v51 = vmax.f32 %v19, %v35
  %v52 = vmax.f32 %v20, %v36
  %v53 = vmax.f32 %v21, %v37
  %v54 = vmax.f32 %v22, %v38
  %v55 = vmax.f32 %v23, %v39
  %v56 = vmax.f32 %v24, %v40
  %v57 = vmax.f32 %v25, %v41
  %v58 = vmax.f32 %v26, %v42
  %v59 = vmax.f32 %v27, %v43
  %v60 = vmax.f32 %v28, %v44
  %v61 = vmax.f32 %v29, %v45
  %v62 = vmax.f32 %v30, %v46
  %v63 = vmax.f32 %v31, %v47
  %v64 = vmax.f32 %v32, %v48
  %v65 = vld [vmem:[%s2] sm:$0xff]
  %v66 = vld [vmem:[%s2 + $0x8] sm:$0xff]
  %v67 = vld [vmem:[%s2 + $0x10] sm:$0xff]
  %v68 = vld [vmem:[%s2 + $0x18] sm:$0xff]
  %v69 = vld [vmem:[%s2 + $0x20] sm:$0xff]
  %v70 = vld [vmem:[%s2 + $0x28] sm:$0xff]
  %v71 = vld [vmem:[%s2 + $0x30] sm:$0xff]
  %v72 = vld [vmem:[%s2 + $0x38] sm:$0xff]
  %v73 = vld [vmem:[%s2 + $0x40] sm:$0xff]
  %v74 = vld [vmem:[%s2 + $0x48] sm:$0xff]
  %v75 = vld [vmem:[%s2 + $0x50] sm:$0xff]
  %v76 = vld [vmem:[%s2 + $0x58] sm:$0xff]
  %v77 = vld [vmem:[%s2 + $0x60] sm:$0xff]
  %v78 = vld [vmem:[%s2 + $0x68] sm:$0xff]
  %v79 = vld [vmem:[%s2 + $0x70] sm:$0xff]
  %v80 = vld [vmem:[%s2 + $0x78] sm:$0xff]
  %v81 = vld [vmem:[%s3] sm:$0xff]
  %v82 = vld [vmem:[%s3 + $0x8] sm:$0xff]
  %v83 = vld [vmem:[%s3 + $0x10] sm:$0xff]
  %v84 = vld [vmem:[%s3 + $0x18] sm:$0xff]
  %v85 = vld [vmem:[%s3 + $0x20] sm:$0xff]
  %v86 = vld [vmem:[%s3 + $0x28] sm:$0xff]
  %v87 = vld [vmem:[%s3 + $0x30] sm:$0xff]
  %v88 = vld [vmem:[%s3 + $0x38] sm:$0xff]
  %v89 = vld [vmem:[%s3 + $0x40] sm:$0xff]
  %v90 = vld [vmem:[%s3 + $0x48] sm:$0xff]
  %v91 = vld [vmem:[%s3 + $0x50] sm:$0xff]
  %v92 = vld [vmem:[%s3 + $0x58] sm:$0xff]
  %v93 = vld [vmem:[%s3 + $0x60] sm:$0xff]
  %v94 = vld [vmem:[%s3 + $0x68] sm:$0xff]
  %v95 = vld [vmem:[%s3 + $0x70] sm:$0xff]
  %v96 = vld [vmem:[%s3 + $0x78] sm:$0xff]
  %v97 = vmax.f32 %v65, %v81
  %v98 = vmax.f32 %v66, %v82
  %v99 = vmax.f32 %v67, %v83
  %v100 = vmax.f32 %v68, %v84
  %v101 = vmax.f32 %v69, %v85
  %v102 = vmax.f32 %v70, %v86
  %v103 = vmax.f32 %v71, %v87
  %v104 = vmax.f32 %v72, %v88
  %v105 = vmax.f32 %v73, %v89
  %v106 = vmax.f32 %v74, %v90
  %v107 = vmax.f32 %v75, %v91
  %v108 = vmax.f32 %v76, %v92
  %v109 = vmax.f32 %v77, %v93
  %v110 = vmax.f32 %v78, %v94
  %v111 = vmax.f32 %v79, %v95
  %v112 = vmax.f32 %v80, %v96
  %v113 = vmax.f32 %v49, %v97
  %v114 = vmax.f32 %v50, %v98
  %v115 = vmax.f32 %v51, %v99
  %v116 = vmax.f32 %v52, %v100
  %v117 = vmax.f32 %v53, %v101
  %v118 = vmax.f32 %v54, %v102
  %v119 = vmax.f32 %v55, %v103
  %v120 = vmax.f32 %v56, %v104
  %v121 = vmax.f32 %v57, %v105
  %v122 = vmax.f32 %v58, %v106
  %v123 = vmax.f32 %v59, %v107
  %v124 = vmax.f32 %v60, %v108
  %v125 = vmax.f32 %v61, %v109
  %v126 = vmax.f32 %v62, %v110
  %v127 = vmax.f32 %v63, %v111
  %v128 = vmax.f32 %v64, %v112
  %vm129 = vcmask 64512
  %130 = vst.msk [vmem:[%s4] sm:$0xff] %vm129, %v113
  %131 = vst.msk [vmem:[%s4 + $0x8] sm:$0xff] %vm129, %v114
  %132 = vst.msk [vmem:[%s4 + $0x10] sm:$0xff] %vm129, %v115
  %133 = vst.msk [vmem:[%s4 + $0x18] sm:$0xff] %vm129, %v116
  %134 = vst.msk [vmem:[%s4 + $0x20] sm:$0xff] %vm129, %v117
  %135 = vst.msk [vmem:[%s4 + $0x28] sm:$0xff] %vm129, %v118
  %136 = vst.msk [vmem:[%s4 + $0x30] sm:$0xff] %vm129, %v119
  %137 = vst.msk [vmem:[%s4 + $0x38] sm:$0xff] %vm129, %v120
  %138 = vst.msk [vmem:[%s4 + $0x40] sm:$0xff] %vm129, %v121
  %139 = vst.msk [vmem:[%s4 + $0x48] sm:$0xff] %vm129, %v122
  %140 = vst.msk [vmem:[%s4 + $0x50] sm:$0xff] %vm129, %v123
  %141 = vst.msk [vmem:[%s4 + $0x58] sm:$0xff] %vm129, %v124
  %142 = vst.msk [vmem:[%s4 + $0x60] sm:$0xff] %vm129, %v125
  %143 = vst.msk [vmem:[%s4 + $0x68] sm:$0xff] %vm129, %v126
  %144 = vst.msk [vmem:[%s4 + $0x70] sm:$0xff] %vm129, %v127
  %145 = vst.msk [vmem:[%s4 + $0x78] sm:$0xff] %vm129, %v128
  // Predicated region
  $region18: #{resnet_forward_pallas.20} parent=0 // pred_check
    _
  $region19: #{resnet_forward_pallas.20} parent=0 // pred_check_branch
    %147 = sbr.rel (0) target = $region21
  $region20: #{resnet_forward_pallas.20} parent=0 // pred_region
    _
  $region21: #{resnet_forward_pallas.20} parent=0 // pred_fallthru
    _
  // Predicated region
  $region22: #{resnet_forward_pallas.20} parent=0 // pred_check
    _
  $region23: #{resnet_forward_pallas.20} parent=0 // pred_check_branch
    %149 = sbr.rel (0) target = $region25
  $region24: #{resnet_forward_pallas.20} parent=0 // pred_region
    _
  $region25: #{resnet_forward_pallas.20} parent=0 // pred_fallthru
    _

// kernel: resnet_forward_pallas.21
$region0: #{resnet_forward_pallas.21}
  #allocation0 [shape = 'u32[]', space=smem, size = 0x4, offset = 0x4, fixed_abs, tag = 'smem constant byte address 0x4 - core index']
  #allocation1 [shape = 'u32[72,128]{1,0:T(1,128)}', space=vmem, size = 0x9000, scoped, tag = 'internal scratch']
  %s0 = inlined_call_operand.vmem [shape: bf16[128,72], index: 0, kind: input, shape index: {}]
  %s1 = inlined_call_operand.vmem [shape: bf16[72,8], index: 1, kind: input, shape index: {}]
  %s2 = inlined_call_operand.vmem [shape: f32[1,8], index: 2, kind: input, shape index: {}]
  %s3 = inlined_call_operand.vmem [shape: f32[128,8], index: 3, kind: output, shape index: {}]
  %s4 = sld [smem:[#allocation0]]
  $region45: #{resnet_forward_pallas.21} parent=0
    _
  %s6 = ssub.s32 1, %s4
  %s7 = scalar_select 0, %s6, %s4
  loop: start=0, step=1, limit=4
  $region2: #{resnet_forward_pallas.21} parent=0 // loop_pre_header
    _
  $region3: #{resnet_forward_pallas.21} parent=0 // loop_header
    %s9 = sphi 0, %s13
    %p10 = scmp.ge.s32.totalorder %s9, 4
    %s19 = sphi 0, %s21
    %s22 = sphi 0, %s19
    %s23 = sphi 0, %s22
    %s39 = sphi 0, %s23
    %s43 = sphi 0, %s43
    %s45 = sphi 0, %s43
    %s46 = sphi 0, %s45
    %s60 = sphi 0, %s46
    %s64 = sphi 0, %s64
    %s66 = sphi 0, %s64
    %s67 = sphi 0, %s66
    %s81 = sphi 0, %s67
    %s87 = sphi 0, %s89
    %s90 = sphi 0, %s87
    %s91 = sphi 0, %s90
    %s107 = sphi 0, %s91
  $region4: #{resnet_forward_pallas.21} parent=0 // loop_header_branch
    %12 = sbr.rel (%p10) target = $region8
  $region5: #{resnet_forward_pallas.21} parent=0 // loop_body
    %s14 = ssub.s32 %s9, 1
    %s15 = ssub.s32 %s9, 2
    %s16 = sadd.s32 %s9, 1
    %s17 = ssub.s32 %s9, %s16
    %p18 = scmp.eq.s32.totalorder %s17, 0
    %s20 = sadd.s32 %s19, 1
    %s21 = scalar_select %p18, %s19, %s20
    %p24 = pneg %p18
    %p25 = scmp.eq.s32.totalorder %s9, 1
    %p26 = por %p24, %p25
    %p27 = scmp.ne.s32.totalorder %s19, %s22
    %p28 = scmp.eq.s32.totalorder %s9, 0
    %p29 = por %p27, %p28
    %p30 = scmp.ne.s32.totalorder %s19, %s22
    %p31 = scmp.eq.s32.totalorder %s14, 1
    %p32 = por %p30, %p31
    %p33 = scmp.ne.s32.totalorder %s22, %s23
    %p34 = scmp.eq.s32.totalorder %s14, 0
    %p35 = por %p33, %p34
    %p36 = scmp.ne.s32.totalorder %s22, %s23
    %p37 = scmp.eq.s32.totalorder %s15, 1
    %p38 = por %p36, %p37
    %p40 = scmp.ne.s32.totalorder %s23, %s39
    %p41 = scmp.eq.s32.totalorder %s15, 0
    %p42 = por %p40, %p41
    %s44 = sadd.s32 %s43, 1
    %p47 = scmp.eq.s32.totalorder %s9, 1
    %p48 = scmp.ne.s32.totalorder %s43, %s45
    %p49 = scmp.eq.s32.totalorder %s9, 0
    %p50 = por %p48, %p49
    %p51 = scmp.ne.s32.totalorder %s43, %s45
    %p52 = scmp.eq.s32.totalorder %s14, 1
    %p53 = por %p51, %p52
    %p54 = scmp.ne.s32.totalorder %s45, %s46
    %p55 = scmp.eq.s32.totalorder %s14, 0
    %p56 = por %p54, %p55
    %p57 = scmp.ne.s32.totalorder %s45, %s46
    %p58 = scmp.eq.s32.totalorder %s15, 1
    %p59 = por %p57, %p58
    %p61 = scmp.ne.s32.totalorder %s46, %s60
    %p62 = scmp.eq.s32.totalorder %s15, 0
    %p63 = por %p61, %p62
    %s65 = sadd.s32 %s64, 1
    %p68 = scmp.eq.s32.totalorder %s9, 1
    %p69 = scmp.ne.s32.totalorder %s64, %s66
    %p70 = scmp.eq.s32.totalorder %s9, 0
    %p71 = por %p69, %p70
    %p72 = scmp.ne.s32.totalorder %s64, %s66
    %p73 = scmp.eq.s32.totalorder %s14, 1
    %p74 = por %p72, %p73
    %p75 = scmp.ne.s32.totalorder %s66, %s67
    %p76 = scmp.eq.s32.totalorder %s14, 0
    %p77 = por %p75, %p76
    %p78 = scmp.ne.s32.totalorder %s66, %s67
    %p79 = scmp.eq.s32.totalorder %s15, 1
    %p80 = por %p78, %p79
    %p82 = scmp.ne.s32.totalorder %s67, %s81
    %p83 = scmp.eq.s32.totalorder %s15, 0
    %p84 = por %p82, %p83
    %s85 = ssub.s32 %s9, %s16
    %p86 = scmp.eq.s32.totalorder %s85, 0
    %s88 = sadd.s32 %s87, 1
    %s89 = scalar_select %p86, %s87, %s88
    %p92 = pneg %p86
    %p93 = scmp.eq.s32.totalorder %s9, 1
    %p94 = por %p92, %p93
    %p95 = scmp.ne.s32.totalorder %s87, %s90
    %p96 = scmp.eq.s32.totalorder %s9, 0
    %p97 = por %p95, %p96
    %p98 = scmp.ne.s32.totalorder %s87, %s90
    %p99 = scmp.eq.s32.totalorder %s14, 1
    %p100 = por %p98, %p99
    %p101 = scmp.ne.s32.totalorder %s90, %s91
    %p102 = scmp.eq.s32.totalorder %s14, 0
    %p103 = por %p101, %p102
    %p104 = scmp.ne.s32.totalorder %s90, %s91
    %p105 = scmp.eq.s32.totalorder %s15, 1
    %p106 = por %p104, %p105
    %p108 = scmp.ne.s32.totalorder %s91, %s107
    %p109 = scmp.eq.s32.totalorder %s15, 0
    %p110 = por %p108, %p109
    %p111 = scmp.le.s32.totalorder 1, %s9
    %p112 = scmp.lt.s32.totalorder %s9, 3
    %p113 = pnand %p111, %p112
    %p114 = pneg %p113
    // Predicated region
    $region9: #{resnet_forward_pallas.21} parent=5 // pred_check
      _
    $region10: #{resnet_forward_pallas.21} parent=5 // pred_check_branch
      %116 = sbr.rel (%p113) target = $region12
    $region11: #{resnet_forward_pallas.21} parent=5 // pred_region
      %s117 = ssub.s32 %s9, 1
      // Predicated region
      $region13: #{resnet_forward_pallas.21} parent=11 // pred_check
        %p118 = pneg %p56
      $region14: #{resnet_forward_pallas.21} parent=11 // pred_check_branch
        %120 = sbr.rel (%p118) target = $region16
      $region15: #{resnet_forward_pallas.21} parent=11 // pred_region
        _
      $region16: #{resnet_forward_pallas.21} parent=11 // pred_fallthru
        _
      // Predicated region
      $region17: #{resnet_forward_pallas.21} parent=11 // pred_check
        %p121 = pneg %p77
      $region18: #{resnet_forward_pallas.21} parent=11 // pred_check_branch
        %123 = sbr.rel (%p121) target = $region20
      $region19: #{resnet_forward_pallas.21} parent=11 // pred_region
        _
      $region20: #{resnet_forward_pallas.21} parent=11 // pred_fallthru
        _
    $region12: #{resnet_forward_pallas.21} parent=5 // pred_fallthru
      _
    %p124 = scmp.lt.s32.totalorder %s9, 2
    // Predicated region
    $region21: #{resnet_forward_pallas.21} parent=5 // pred_check
      %p125 = pneg %p124
    $region22: #{resnet_forward_pallas.21} parent=5 // pred_check_branch
      %127 = sbr.rel (%p125) target = $region24
    $region23: #{resnet_forward_pallas.21} parent=5 // pred_region
      // Predicated region
      $region25: #{resnet_forward_pallas.21} parent=23 // pred_check
        %p128 = pneg %p29
      $region26: #{resnet_forward_pallas.21} parent=23 // pred_check_branch
        %130 = sbr.rel (%p128) target = $region28
      $region27: #{resnet_forward_pallas.21} parent=23 // pred_region
        %s131 = smul.u32 8, %s9
        %p132 = scmp.lt.s32.totalorder %s131, 15
        %s133 = scalar_select %p132, %s131, 15
        %s134 = smul.addr %s133, 4
        %s135 = scalar_lea.vmem %s0, %s134
        %s136 = smul.u32 8, %s9
      $region28: #{resnet_forward_pallas.21} parent=23 // pred_fallthru
        _
    $region24: #{resnet_forward_pallas.21} parent=5 // pred_fallthru
      _
    %p137 = scmp.le.s32.totalorder 1, %s9
    %p138 = scmp.lt.s32.totalorder %s9, 3
    %p139 = pnand %p137, %p138
    %p140 = pneg %p139
    // Predicated region
    $region29: #{resnet_forward_pallas.21} parent=5 // pred_check
      _
    $region30: #{resnet_forward_pallas.21} parent=5 // pred_check_branch
      %142 = sbr.rel (%p139) target = $region32
    $region31: #{resnet_forward_pallas.21} parent=5 // pred_region
      %s143 = ssub.s32 %s9, 1
      %s144 = smul.u32 8, %s14
      %p145 = scmp.lt.s32.totalorder %s144, 15
      %s146 = scalar_select %p145, %s144, 15
      %s147 = smul.addr %s146, 4
      %s148 = scalar_lea.vmem %s0, %s147
      %p149 = pneg %p35
      %p150 = pneg %p32
      %p151 = pneg %p56
      %p152 = pneg %p53
      %p153 = pneg %p77
      %p154 = pneg %p74
      %p155 = pneg %p103
      %p156 = pneg %p100
      %s157 = smul.u32 8, %s14
      %p158 = scmp.lt.s32.totalorder %s157, 15
      %s159 = scalar_select %p158, %s157, 15
      %s160 = smul.addr %s159, 8
      %s161 = scalar_lea.vmem %s3, %s160
      %s162 = smul.u32 8, %s14
      %p163 = scmp.lt.s32.totalorder %s162, 15
      %s164 = scalar_select %p163, %s162, 15
      %s165 = smul.addr %s164, 4
      %s166 = scalar_lea.vmem %s0, %s165
      %s167 = smul.u32 8, %s14
      %s168 = smul.u32 8, %s14
      %p169 = scmp.lt.s32.totalorder %s168, 15
      %s170 = scalar_select %p169, %s168, 15
      %s171 = smul.addr %s170, 8
      %s172 = scalar_lea.vmem %s3, %s171
      %s173 = smul.u32 8, %s14
      %v175 = vld [vmem:[%s166] sm:$0xf]
      %v176 = vld [vmem:[%s166 + $0x4] sm:$0xf]
      %v177 = vld [vmem:[%s166 + $0x8] sm:$0xf]
      %v178 = vld [vmem:[%s166 + $0xc] sm:$0xf]
      %v179 = vld [vmem:[%s166 + $0x10] sm:$0xf]
      %v180 = vld [vmem:[%s166 + $0x14] sm:$0xf]
      %v181 = vld [vmem:[%s166 + $0x18] sm:$0xf]
      %v182 = vld [vmem:[%s166 + $0x1c] sm:$0xf]
      %v183 = vld [vmem:[%s1] sm:$0xf]
      %v184 = vld [vmem:[%s1 + $0x4] sm:$0xf]
      %v185 = vld [vmem:[%s1 + $0x8] sm:$0xf]
      %v186 = vld [vmem:[%s1 + $0xc] sm:$0xf]
      %v187 = vld [vmem:[%s1 + $0x10] sm:$0xf]
      %v188 = vld [vmem:[%s1 + $0x14] sm:$0xf]
      %v189 = vld [vmem:[%s1 + $0x18] sm:$0xf]
      %v190 = vld [vmem:[%s1 + $0x1c] sm:$0xf]
      %v191 = vld [vmem:[%s1 + $0x20] sm:$0xf]
      %v192 = vld [vmem:[%s2] sm:$0x1]
      %v194 = vperm.slane %v192, 0
      %v204 = vunpack.c.l.b16 %v175
      %v205 = vunpack.c.l.b16 %v176
      %v206 = vunpack.c.l.b16 %v177
      %v207 = vunpack.c.l.b16 %v178
      %v208 = vunpack.c.l.b16 %v179
      %v209 = vunpack.c.l.b16 %v180
      %v210 = vunpack.c.l.b16 %v181
      %v211 = vunpack.c.l.b16 %v182
      %v212 = vpack.c.b16 %v205, %v204
      %v213 = vpack.c.b16 %v207, %v206
      %v214 = vpack.c.b16 %v209, %v208
      %v215 = vpack.c.b16 %v211, %v210
      %v225 = vunpack.c.l.b16 %v183
      %v226 = vunpack.c.l.b16 %v184
      %v227 = vunpack.c.l.b16 %v185
      %v228 = vunpack.c.l.b16 %v186
      %v229 = vunpack.c.l.b16 %v187
      %v230 = vunpack.c.l.b16 %v188
      %v231 = vunpack.c.l.b16 %v189
      %v232 = vunpack.c.l.b16 %v190
      %v233 = vunpack.c.l.b16 %v191
      %v234 = vpack.c.b16 %v226, %v225
      %v235 = vpack.c.b16 %v228, %v227
      %v236 = vpack.c.b16 %v230, %v229
      %v237 = vpack.c.b16 %v232, %v231
      %v238 = vpack.c.b16 %v233, %v233
      %vm243 = vcmask 588800
      %v245 = vsel %vm243, %v212, 0
      %v248 = vsel %vm243, %v213, 0
      %v251 = vsel %vm243, %v214, 0
      %v254 = vsel %vm243, %v215, 0
      %vm256 = vcmask 1043456
      %v258 = vsel %vm256, %v238, 0
      %260 = vmatpush.bf16.msra.mxu0 0
      %261 = vmatpush.bf16.msra.mxu0 0
      %262 = vmatpush.bf16.msra.mxu0 0
      %263 = vmatpush.bf16.msra.mxu0 %v258
      %264 = vmatpush.bf16.msra.mxu0 %v237
      %265 = vmatpush.bf16.msra.mxu0 %v236
      %266 = vmatpush.bf16.msra.mxu0 %v235
      %267 = vmatpush.bf16.msra.mxu0 %v234
      %268 = vmatmul.bf16.gmra.mxu0 %v245
      %v269 = vpop.f32.mrf.mxu0
      %v270 = vadd.f32 %v194, %v269
      %v271 = vpop.f32.mrf.mxu0
      %v272 = vadd.f32 %v194, %v271
      %273 = vmatmul.bf16.gmra.mxu0 %v248
      %v274 = vpop.f32.mrf.mxu0
      %v275 = vadd.f32 %v194, %v274
      %v276 = vpop.f32.mrf.mxu0
      %v277 = vadd.f32 %v194, %v276
      %278 = vmatmul.bf16.gmra.mxu0 %v251
      %v279 = vpop.f32.mrf.mxu0
      %v280 = vadd.f32 %v194, %v279
      %v281 = vpop.f32.mrf.mxu0
      %v282 = vadd.f32 %v194, %v281
      %283 = vmatmul.bf16.gmra.mxu0 %v254
      %v284 = vpop.f32.mrf.mxu0
      %v285 = vadd.f32 %v194, %v284
      %v286 = vpop.f32.mrf.mxu0
      %v287 = vadd.f32 %v194, %v286
      %288 = vdwg.mxu0
      %v289 = vmax.f32 %v270, 0.0
      %v290 = vmax.f32 %v272, 0.0
      %v291 = vmax.f32 %v275, 0.0
      %v292 = vmax.f32 %v277, 0.0
      %v293 = vmax.f32 %v280, 0.0
      %v294 = vmax.f32 %v282, 0.0
      %v295 = vmax.f32 %v285, 0.0
      %v296 = vmax.f32 %v287, 0.0
      %vm297 = vcmask 64512
      %298 = vst.msk [vmem:[%s172] sm:$0xff] %vm297, %v289
      %299 = vst.msk [vmem:[%s172 + $0x8] sm:$0xff] %vm297, %v290
      %300 = vst.msk [vmem:[%s172 + $0x10] sm:$0xff] %vm297, %v291
      %301 = vst.msk [vmem:[%s172 + $0x18] sm:$0xff] %vm297, %v292
      %302 = vst.msk [vmem:[%s172 + $0x20] sm:$0xff] %vm297, %v293
      %303 = vst.msk [vmem:[%s172 + $0x28] sm:$0xff] %vm297, %v294
      %304 = vst.msk [vmem:[%s172 + $0x30] sm:$0xff] %vm297, %v295
      %305 = vst.msk [vmem:[%s172 + $0x38] sm:$0xff] %vm297, %v296
      %s306 = smul.u32 8, %s14
      %p307 = scmp.lt.s32.totalorder %s306, 15
      %s308 = scalar_select %p307, %s306, 15
      %s309 = smul.addr %s308, 8
      %s310 = scalar_lea.vmem %s3, %s309
      // Predicated region
      $region33: #{resnet_forward_pallas.21} parent=31 // pred_check
        %p311 = pneg %p100
      $region34: #{resnet_forward_pallas.21} parent=31 // pred_check_branch
        %313 = sbr.rel (%p311) target = $region36
      $region35: #{resnet_forward_pallas.21} parent=31 // pred_region
        %s314 = smul.u32 8, %s14
      $region36: #{resnet_forward_pallas.21} parent=31 // pred_fallthru
        _
    $region32: #{resnet_forward_pallas.21} parent=5 // pred_fallthru
      _
    %p315 = scmp.le.s32.totalorder 2, %s9
    // Predicated region
    $region37: #{resnet_forward_pallas.21} parent=5 // pred_check
      %p316 = pneg %p315
    $region38: #{resnet_forward_pallas.21} parent=5 // pred_check_branch
      %318 = sbr.rel (%p316) target = $region40
    $region39: #{resnet_forward_pallas.21} parent=5 // pred_region
      %s319 = ssub.s32 %s9, 2
      // Predicated region
      $region41: #{resnet_forward_pallas.21} parent=39 // pred_check
        %p320 = pneg %p106
      $region42: #{resnet_forward_pallas.21} parent=39 // pred_check_branch
        %322 = sbr.rel (%p320) target = $region44
      $region43: #{resnet_forward_pallas.21} parent=39 // pred_region
        %s323 = smul.u32 8, %s15
        %p324 = scmp.lt.s32.totalorder %s323, 15
        %s325 = scalar_select %p324, %s323, 15
        %s326 = smul.addr %s325, 8
        %s327 = scalar_lea.vmem %s3, %s326
      $region44: #{resnet_forward_pallas.21} parent=39 // pred_fallthru
        _
    $region40: #{resnet_forward_pallas.21} parent=5 // pred_fallthru
      _
  $region6: #{resnet_forward_pallas.21} parent=0 // loop_footer
    %s13 = sadd.s32 1, %s9
  $region7: #{resnet_forward_pallas.21} parent=0 // loop_footer_branch
    %8 = sbr.rel target = $region3
  $region8: #{resnet_forward_pallas.21} parent=0 // loop_exit
    _

// kernel: resnet_forward_pallas.22
$region0: #{resnet_forward_pallas.22}
  #allocation0 [shape = 'u32[]', space=smem, size = 0x4, offset = 0x4, fixed_abs, tag = 'smem constant byte address 0x4 - core index']
  #allocation1 [shape = 'u32[72,128]{1,0:T(1,128)}', space=vmem, size = 0x9000, scoped, tag = 'internal scratch']
  %s0 = inlined_call_operand.vmem [shape: bf16[128,72], index: 0, kind: input, shape index: {}]
  %s1 = inlined_call_operand.vmem [shape: bf16[72,8], index: 1, kind: input, shape index: {}]
  %s2 = inlined_call_operand.vmem [shape: f32[1,8], index: 2, kind: input, shape index: {}]
  %s3 = inlined_call_operand.vmem [shape: f32[128,8], index: 3, kind: input, shape index: {}]
  %s4 = inlined_call_operand.vmem [shape: f32[128,8], index: 4, kind: output, shape index: {}]
  %s5 = sld [smem:[#allocation0]]
  $region49: #{resnet_forward_pallas.22} parent=0
    _
  %s7 = ssub.s32 1, %s5
  %s8 = scalar_select 0, %s7, %s5
  loop: start=0, step=1, limit=4
  $region2: #{resnet_forward_pallas.22} parent=0 // loop_pre_header
    _
  $region3: #{resnet_forward_pallas.22} parent=0 // loop_header
    %s10 = sphi 0, %s14
    %p11 = scmp.ge.s32.totalorder %s10, 4
    %s20 = sphi 0, %s22
    %s23 = sphi 0, %s20
    %s24 = sphi 0, %s23
    %s40 = sphi 0, %s24
    %s44 = sphi 0, %s44
    %s46 = sphi 0, %s44
    %s47 = sphi 0, %s46
    %s61 = sphi 0, %s47
    %s65 = sphi 0, %s65
    %s67 = sphi 0, %s65
    %s68 = sphi 0, %s67
    %s82 = sphi 0, %s68
    %s88 = sphi 0, %s90
    %s91 = sphi 0, %s88
    %s92 = sphi 0, %s91
    %s108 = sphi 0, %s92
    %s114 = sphi 0, %s116
    %s117 = sphi 0, %s114
    %s118 = sphi 0, %s117
    %s134 = sphi 0, %s118
  $region4: #{resnet_forward_pallas.22} parent=0 // loop_header_branch
    %13 = sbr.rel (%p11) target = $region8
  $region5: #{resnet_forward_pallas.22} parent=0 // loop_body
    %s15 = ssub.s32 %s10, 1
    %s16 = ssub.s32 %s10, 2
    %s17 = sadd.s32 %s10, 1
    %s18 = ssub.s32 %s10, %s17
    %p19 = scmp.eq.s32.totalorder %s18, 0
    %s21 = sadd.s32 %s20, 1
    %s22 = scalar_select %p19, %s20, %s21
    %p25 = pneg %p19
    %p26 = scmp.eq.s32.totalorder %s10, 1
    %p27 = por %p25, %p26
    %p28 = scmp.ne.s32.totalorder %s20, %s23
    %p29 = scmp.eq.s32.totalorder %s10, 0
    %p30 = por %p28, %p29
    %p31 = scmp.ne.s32.totalorder %s20, %s23
    %p32 = scmp.eq.s32.totalorder %s15, 1
    %p33 = por %p31, %p32
    %p34 = scmp.ne.s32.totalorder %s23, %s24
    %p35 = scmp.eq.s32.totalorder %s15, 0
    %p36 = por %p34, %p35
    %p37 = scmp.ne.s32.totalorder %s23, %s24
    %p38 = scmp.eq.s32.totalorder %s16, 1
    %p39 = por %p37, %p38
    %p41 = scmp.ne.s32.totalorder %s24, %s40
    %p42 = scmp.eq.s32.totalorder %s16, 0
    %p43 = por %p41, %p42
    %s45 = sadd.s32 %s44, 1
    %p48 = scmp.eq.s32.totalorder %s10, 1
    %p49 = scmp.ne.s32.totalorder %s44, %s46
    %p50 = scmp.eq.s32.totalorder %s10, 0
    %p51 = por %p49, %p50
    %p52 = scmp.ne.s32.totalorder %s44, %s46
    %p53 = scmp.eq.s32.totalorder %s15, 1
    %p54 = por %p52, %p53
    %p55 = scmp.ne.s32.totalorder %s46, %s47
    %p56 = scmp.eq.s32.totalorder %s15, 0
    %p57 = por %p55, %p56
    %p58 = scmp.ne.s32.totalorder %s46, %s47
    %p59 = scmp.eq.s32.totalorder %s16, 1
    %p60 = por %p58, %p59
    %p62 = scmp.ne.s32.totalorder %s47, %s61
    %p63 = scmp.eq.s32.totalorder %s16, 0
    %p64 = por %p62, %p63
    %s66 = sadd.s32 %s65, 1
    %p69 = scmp.eq.s32.totalorder %s10, 1
    %p70 = scmp.ne.s32.totalorder %s65, %s67
    %p71 = scmp.eq.s32.totalorder %s10, 0
    %p72 = por %p70, %p71
    %p73 = scmp.ne.s32.totalorder %s65, %s67
    %p74 = scmp.eq.s32.totalorder %s15, 1
    %p75 = por %p73, %p74
    %p76 = scmp.ne.s32.totalorder %s67, %s68
    %p77 = scmp.eq.s32.totalorder %s15, 0
    %p78 = por %p76, %p77
    %p79 = scmp.ne.s32.totalorder %s67, %s68
    %p80 = scmp.eq.s32.totalorder %s16, 1
    %p81 = por %p79, %p80
    %p83 = scmp.ne.s32.totalorder %s68, %s82
    %p84 = scmp.eq.s32.totalorder %s16, 0
    %p85 = por %p83, %p84
    %s86 = ssub.s32 %s10, %s17
    %p87 = scmp.eq.s32.totalorder %s86, 0
    %s89 = sadd.s32 %s88, 1
    %s90 = scalar_select %p87, %s88, %s89
    %p93 = pneg %p87
    %p94 = scmp.eq.s32.totalorder %s10, 1
    %p95 = por %p93, %p94
    %p96 = scmp.ne.s32.totalorder %s88, %s91
    %p97 = scmp.eq.s32.totalorder %s10, 0
    %p98 = por %p96, %p97
    %p99 = scmp.ne.s32.totalorder %s88, %s91
    %p100 = scmp.eq.s32.totalorder %s15, 1
    %p101 = por %p99, %p100
    %p102 = scmp.ne.s32.totalorder %s91, %s92
    %p103 = scmp.eq.s32.totalorder %s15, 0
    %p104 = por %p102, %p103
    %p105 = scmp.ne.s32.totalorder %s91, %s92
    %p106 = scmp.eq.s32.totalorder %s16, 1
    %p107 = por %p105, %p106
    %p109 = scmp.ne.s32.totalorder %s92, %s108
    %p110 = scmp.eq.s32.totalorder %s16, 0
    %p111 = por %p109, %p110
    %s112 = ssub.s32 %s10, %s17
    %p113 = scmp.eq.s32.totalorder %s112, 0
    %s115 = sadd.s32 %s114, 1
    %s116 = scalar_select %p113, %s114, %s115
    %p119 = pneg %p113
    %p120 = scmp.eq.s32.totalorder %s10, 1
    %p121 = por %p119, %p120
    %p122 = scmp.ne.s32.totalorder %s114, %s117
    %p123 = scmp.eq.s32.totalorder %s10, 0
    %p124 = por %p122, %p123
    %p125 = scmp.ne.s32.totalorder %s114, %s117
    %p126 = scmp.eq.s32.totalorder %s15, 1
    %p127 = por %p125, %p126
    %p128 = scmp.ne.s32.totalorder %s117, %s118
    %p129 = scmp.eq.s32.totalorder %s15, 0
    %p130 = por %p128, %p129
    %p131 = scmp.ne.s32.totalorder %s117, %s118
    %p132 = scmp.eq.s32.totalorder %s16, 1
    %p133 = por %p131, %p132
    %p135 = scmp.ne.s32.totalorder %s118, %s134
    %p136 = scmp.eq.s32.totalorder %s16, 0
    %p137 = por %p135, %p136
    %p138 = scmp.le.s32.totalorder 1, %s10
    %p139 = scmp.lt.s32.totalorder %s10, 3
    %p140 = pnand %p138, %p139
    %p141 = pneg %p140
    // Predicated region
    $region9: #{resnet_forward_pallas.22} parent=5 // pred_check
      _
    $region10: #{resnet_forward_pallas.22} parent=5 // pred_check_branch
      %143 = sbr.rel (%p140) target = $region12
    $region11: #{resnet_forward_pallas.22} parent=5 // pred_region
      %s144 = ssub.s32 %s10, 1
      // Predicated region
      $region13: #{resnet_forward_pallas.22} parent=11 // pred_check
        %p145 = pneg %p57
      $region14: #{resnet_forward_pallas.22} parent=11 // pred_check_branch
        %147 = sbr.rel (%p145) target = $region16
      $region15: #{resnet_forward_pallas.22} parent=11 // pred_region
        _
      $region16: #{resnet_forward_pallas.22} parent=11 // pred_fallthru
        _
      // Predicated region
      $region17: #{resnet_forward_pallas.22} parent=11 // pred_check
        %p148 = pneg %p78
      $region18: #{resnet_forward_pallas.22} parent=11 // pred_check_branch
        %150 = sbr.rel (%p148) target = $region20
      $region19: #{resnet_forward_pallas.22} parent=11 // pred_region
        _
      $region20: #{resnet_forward_pallas.22} parent=11 // pred_fallthru
        _
    $region12: #{resnet_forward_pallas.22} parent=5 // pred_fallthru
      _
    %p151 = scmp.lt.s32.totalorder %s10, 2
    // Predicated region
    $region21: #{resnet_forward_pallas.22} parent=5 // pred_check
      %p152 = pneg %p151
    $region22: #{resnet_forward_pallas.22} parent=5 // pred_check_branch
      %154 = sbr.rel (%p152) target = $region24
    $region23: #{resnet_forward_pallas.22} parent=5 // pred_region
      // Predicated region
      $region25: #{resnet_forward_pallas.22} parent=23 // pred_check
        %p155 = pneg %p30
      $region26: #{resnet_forward_pallas.22} parent=23 // pred_check_branch
        %157 = sbr.rel (%p155) target = $region28
      $region27: #{resnet_forward_pallas.22} parent=23 // pred_region
        %s158 = smul.u32 8, %s10
        %p159 = scmp.lt.s32.totalorder %s158, 15
        %s160 = scalar_select %p159, %s158, 15
        %s161 = smul.addr %s160, 4
        %s162 = scalar_lea.vmem %s0, %s161
        %s163 = smul.u32 8, %s10
      $region28: #{resnet_forward_pallas.22} parent=23 // pred_fallthru
        _
      // Predicated region
      $region29: #{resnet_forward_pallas.22} parent=23 // pred_check
        %p164 = pneg %p98
      $region30: #{resnet_forward_pallas.22} parent=23 // pred_check_branch
        %166 = sbr.rel (%p164) target = $region32
      $region31: #{resnet_forward_pallas.22} parent=23 // pred_region
        %s167 = smul.u32 8, %s10
        %p168 = scmp.lt.s32.totalorder %s167, 15
        %s169 = scalar_select %p168, %s167, 15
        %s170 = smul.addr %s169, 8
        %s171 = scalar_lea.vmem %s3, %s170
        %s172 = smul.u32 8, %s10
      $region32: #{resnet_forward_pallas.22} parent=23 // pred_fallthru
        _
    $region24: #{resnet_forward_pallas.22} parent=5 // pred_fallthru
      _
    %p173 = scmp.le.s32.totalorder 1, %s10
    %p174 = scmp.lt.s32.totalorder %s10, 3
    %p175 = pnand %p173, %p174
    %p176 = pneg %p175
    // Predicated region
    $region33: #{resnet_forward_pallas.22} parent=5 // pred_check
      _
    $region34: #{resnet_forward_pallas.22} parent=5 // pred_check_branch
      %178 = sbr.rel (%p175) target = $region36
    $region35: #{resnet_forward_pallas.22} parent=5 // pred_region
      %s179 = ssub.s32 %s10, 1
      %s180 = smul.u32 8, %s15
      %p181 = scmp.lt.s32.totalorder %s180, 15
      %s182 = scalar_select %p181, %s180, 15
      %s183 = smul.addr %s182, 4
      %s184 = scalar_lea.vmem %s0, %s183
      %p185 = pneg %p36
      %p186 = pneg %p33
      %p187 = pneg %p57
      %p188 = pneg %p54
      %p189 = pneg %p78
      %p190 = pneg %p75
      %s191 = smul.u32 8, %s15
      %p192 = scmp.lt.s32.totalorder %s191, 15
      %s193 = scalar_select %p192, %s191, 15
      %s194 = smul.addr %s193, 8
      %s195 = scalar_lea.vmem %s3, %s194
      %p196 = pneg %p104
      %p197 = pneg %p101
      %p198 = pneg %p130
      %p199 = pneg %p127
      %s200 = smul.u32 8, %s15
      %p201 = scmp.lt.s32.totalorder %s200, 15
      %s202 = scalar_select %p201, %s200, 15
      %s203 = smul.addr %s202, 8
      %s204 = scalar_lea.vmem %s4, %s203
      %s205 = smul.u32 8, %s15
      %p206 = scmp.lt.s32.totalorder %s205, 15
      %s207 = scalar_select %p206, %s205, 15
      %s208 = smul.addr %s207, 4
      %s209 = scalar_lea.vmem %s0, %s208
      %s210 = smul.u32 8, %s15
      %s211 = smul.u32 8, %s15
      %p212 = scmp.lt.s32.totalorder %s211, 15
      %s213 = scalar_select %p212, %s211, 15
      %s214 = smul.addr %s213, 8
      %s215 = scalar_lea.vmem %s3, %s214
      %s216 = smul.u32 8, %s15
      %s217 = smul.u32 8, %s15
      %p218 = scmp.lt.s32.totalorder %s217, 15
      %s219 = scalar_select %p218, %s217, 15
      %s220 = smul.addr %s219, 8
      %s221 = scalar_lea.vmem %s4, %s220
      %s222 = smul.u32 8, %s15
      %v224 = vld [vmem:[%s209] sm:$0xf]
      %v225 = vld [vmem:[%s209 + $0x4] sm:$0xf]
      %v226 = vld [vmem:[%s209 + $0x8] sm:$0xf]
      %v227 = vld [vmem:[%s209 + $0xc] sm:$0xf]
      %v228 = vld [vmem:[%s209 + $0x10] sm:$0xf]
      %v229 = vld [vmem:[%s209 + $0x14] sm:$0xf]
      %v230 = vld [vmem:[%s209 + $0x18] sm:$0xf]
      %v231 = vld [vmem:[%s209 + $0x1c] sm:$0xf]
      %v232 = vld [vmem:[%s1] sm:$0xf]
      %v233 = vld [vmem:[%s1 + $0x4] sm:$0xf]
      %v234 = vld [vmem:[%s1 + $0x8] sm:$0xf]
      %v235 = vld [vmem:[%s1 + $0xc] sm:$0xf]
      %v236 = vld [vmem:[%s1 + $0x10] sm:$0xf]
      %v237 = vld [vmem:[%s1 + $0x14] sm:$0xf]
      %v238 = vld [vmem:[%s1 + $0x18] sm:$0xf]
      %v239 = vld [vmem:[%s1 + $0x1c] sm:$0xf]
      %v240 = vld [vmem:[%s1 + $0x20] sm:$0xf]
      %v241 = vld [vmem:[%s2] sm:$0x1]
      %v243 = vperm.slane %v241, 0
      %v253 = vunpack.c.l.b16 %v224
      %v254 = vunpack.c.l.b16 %v225
      %v255 = vunpack.c.l.b16 %v226
      %v256 = vunpack.c.l.b16 %v227
      %v257 = vunpack.c.l.b16 %v228
      %v258 = vunpack.c.l.b16 %v229
      %v259 = vunpack.c.l.b16 %v230
      %v260 = vunpack.c.l.b16 %v231
      %v261 = vpack.c.b16 %v254, %v253
      %v262 = vpack.c.b16 %v256, %v255
      %v263 = vpack.c.b16 %v258, %v257
      %v264 = vpack.c.b16 %v260, %v259
      %v274 = vunpack.c.l.b16 %v232
      %v275 = vunpack.c.l.b16 %v233
      %v276 = vunpack.c.l.b16 %v234
      %v277 = vunpack.c.l.b16 %v235
      %v278 = vunpack.c.l.b16 %v236
      %v279 = vunpack.c.l.b16 %v237
      %v280 = vunpack.c.l.b16 %v238
      %v281 = vunpack.c.l.b16 %v239
      %v282 = vunpack.c.l.b16 %v240
      %v283 = vpack.c.b16 %v275, %v274
      %v284 = vpack.c.b16 %v277, %v276
      %v285 = vpack.c.b16 %v279, %v278
      %v286 = vpack.c.b16 %v281, %v280
      %v287 = vpack.c.b16 %v282, %v282
      %vm292 = vcmask 588800
      %v294 = vsel %vm292, %v261, 0
      %v297 = vsel %vm292, %v262, 0
      %v300 = vsel %vm292, %v263, 0
      %v303 = vsel %vm292, %v264, 0
      %vm305 = vcmask 1043456
      %v307 = vsel %vm305, %v287, 0
      %309 = vmatpush.bf16.msra.mxu0 0
      %310 = vmatpush.bf16.msra.mxu0 0
      %311 = vmatpush.bf16.msra.mxu0 0
      %312 = vmatpush.bf16.msra.mxu0 %v307
      %313 = vmatpush.bf16.msra.mxu0 %v286
      %314 = vmatpush.bf16.msra.mxu0 %v285
      %315 = vmatpush.bf16.msra.mxu0 %v284
      %316 = vmatpush.bf16.msra.mxu0 %v283
      %317 = vmatmul.bf16.gmra.mxu0 %v294
      %v318 = vpop.f32.mrf.mxu0
      %v319 = vadd.f32 %v243, %v318
      %v320 = vpop.f32.mrf.mxu0
      %v321 = vadd.f32 %v243, %v320
      %322 = vmatmul.bf16.gmra.mxu0 %v297
      %v323 = vpop.f32.mrf.mxu0
      %v324 = vadd.f32 %v243, %v323
      %v325 = vpop.f32.mrf.mxu0
      %v326 = vadd.f32 %v243, %v325
      %327 = vmatmul.bf16.gmra.mxu0 %v300
      %v328 = vpop.f32.mrf.mxu0
      %v329 = vadd.f32 %v243, %v328
      %v330 = vpop.f32.mrf.mxu0
      %v331 = vadd.f32 %v243, %v330
      %332 = vmatmul.bf16.gmra.mxu0 %v303
      %v333 = vpop.f32.mrf.mxu0
      %v334 = vadd.f32 %v243, %v333
      %v335 = vpop.f32.mrf.mxu0
      %v336 = vadd.f32 %v243, %v335
      %337 = vdwg.mxu0
      %v338 = vld [vmem:[%s215] sm:$0xff]
      %v339 = vld [vmem:[%s215 + $0x8] sm:$0xff]
      %v340 = vld [vmem:[%s215 + $0x10] sm:$0xff]
      %v341 = vld [vmem:[%s215 + $0x18] sm:$0xff]
      %v342 = vld [vmem:[%s215 + $0x20] sm:$0xff]
      %v343 = vld [vmem:[%s215 + $0x28] sm:$0xff]
      %v344 = vld [vmem:[%s215 + $0x30] sm:$0xff]
      %v345 = vld [vmem:[%s215 + $0x38] sm:$0xff]
      %v346 = vadd.f32 %v319, %v338
      %v347 = vadd.f32 %v321, %v339
      %v348 = vadd.f32 %v324, %v340
      %v349 = vadd.f32 %v326, %v341
      %v350 = vadd.f32 %v329, %v342
      %v351 = vadd.f32 %v331, %v343
      %v352 = vadd.f32 %v334, %v344
      %v353 = vadd.f32 %v336, %v345
      %v354 = vmax.f32 %v346, 0.0
      %v355 = vmax.f32 %v347, 0.0
      %v356 = vmax.f32 %v348, 0.0
      %v357 = vmax.f32 %v349, 0.0
      %v358 = vmax.f32 %v350, 0.0
      %v359 = vmax.f32 %v351, 0.0
      %v360 = vmax.f32 %v352, 0.0
      %v361 = vmax.f32 %v353, 0.0
      %vm362 = vcmask 64512
      %363 = vst.msk [vmem:[%s221] sm:$0xff] %vm362, %v354
      %364 = vst.msk [vmem:[%s221 + $0x8] sm:$0xff] %vm362, %v355
      %365 = vst.msk [vmem:[%s221 + $0x10] sm:$0xff] %vm362, %v356
      %366 = vst.msk [vmem:[%s221 + $0x18] sm:$0xff] %vm362, %v357
      %367 = vst.msk [vmem:[%s221 + $0x20] sm:$0xff] %vm362, %v358
      %368 = vst.msk [vmem:[%s221 + $0x28] sm:$0xff] %vm362, %v359
      %369 = vst.msk [vmem:[%s221 + $0x30] sm:$0xff] %vm362, %v360
      %370 = vst.msk [vmem:[%s221 + $0x38] sm:$0xff] %vm362, %v361
      %s371 = smul.u32 8, %s15
      %p372 = scmp.lt.s32.totalorder %s371, 15
      %s373 = scalar_select %p372, %s371, 15
      %s374 = smul.addr %s373, 8
      %s375 = scalar_lea.vmem %s4, %s374
      // Predicated region
      $region37: #{resnet_forward_pallas.22} parent=35 // pred_check
        %p376 = pneg %p127
      $region38: #{resnet_forward_pallas.22} parent=35 // pred_check_branch
        %378 = sbr.rel (%p376) target = $region40
      $region39: #{resnet_forward_pallas.22} parent=35 // pred_region
        %s379 = smul.u32 8, %s15
      $region40: #{resnet_forward_pallas.22} parent=35 // pred_fallthru
        _
    $region36: #{resnet_forward_pallas.22} parent=5 // pred_fallthru
      _
    %p380 = scmp.le.s32.totalorder 2, %s10
    // Predicated region
    $region41: #{resnet_forward_pallas.22} parent=5 // pred_check
      %p381 = pneg %p380
    $region42: #{resnet_forward_pallas.22} parent=5 // pred_check_branch
      %383 = sbr.rel (%p381) target = $region44
    $region43: #{resnet_forward_pallas.22} parent=5 // pred_region
      %s384 = ssub.s32 %s10, 2
      // Predicated region
      $region45: #{resnet_forward_pallas.22} parent=43 // pred_check
        %p385 = pneg %p133
      $region46: #{resnet_forward_pallas.22} parent=43 // pred_check_branch
        %387 = sbr.rel (%p385) target = $region48
      $region47: #{resnet_forward_pallas.22} parent=43 // pred_region
        %s388 = smul.u32 8, %s16
        %p389 = scmp.lt.s32.totalorder %s388, 15
        %s390 = scalar_select %p389, %s388, 15
        %s391 = smul.addr %s390, 8
        %s392 = scalar_lea.vmem %s4, %s391
      $region48: #{resnet_forward_pallas.22} parent=43 // pred_fallthru
        _
    $region44: #{resnet_forward_pallas.22} parent=5 // pred_fallthru
      _
  $region6: #{resnet_forward_pallas.22} parent=0 // loop_footer
    %s14 = sadd.s32 1, %s10
  $region7: #{resnet_forward_pallas.22} parent=0 // loop_footer_branch
    %9 = sbr.rel target = $region3
  $region8: #{resnet_forward_pallas.22} parent=0 // loop_exit
    _

// kernel: resnet_forward_pallas.25
$region0: #{resnet_forward_pallas.25}
  #allocation0 [shape = 'u32[]', space=smem, size = 0x4, offset = 0x4, fixed_abs, tag = 'smem constant byte address 0x4 - core index']
  #allocation1 [shape = 'u32[72,128]{1,0:T(1,128)}', space=vmem, size = 0x9000, scoped, tag = 'internal scratch']
  %s0 = inlined_call_operand.vmem [shape: bf16[32,72], index: 0, kind: input, shape index: {}]
  %s1 = inlined_call_operand.vmem [shape: bf16[72,16], index: 1, kind: input, shape index: {}]
  %s2 = inlined_call_operand.vmem [shape: f32[1,16], index: 2, kind: input, shape index: {}]
  %s3 = inlined_call_operand.vmem [shape: f32[32,16], index: 3, kind: output, shape index: {}]
  %s4 = sld [smem:[#allocation0]]
  $region22: #{resnet_forward_pallas.25} parent=0
    _
  %s6 = ssub.s32 1, %s4
  %s7 = scalar_select 0, %s6, %s4
  // Predicated region
  $region2: #{resnet_forward_pallas.25} parent=0 // pred_check
    _
  $region3: #{resnet_forward_pallas.25} parent=0 // pred_check_branch
    %9 = sbr.rel (0) target = $region5
  $region4: #{resnet_forward_pallas.25} parent=0 // pred_region
    _
  $region5: #{resnet_forward_pallas.25} parent=0 // pred_fallthru
    _
  // Predicated region
  $region6: #{resnet_forward_pallas.25} parent=0 // pred_check
    _
  $region7: #{resnet_forward_pallas.25} parent=0 // pred_check_branch
    %11 = sbr.rel (0) target = $region9
  $region8: #{resnet_forward_pallas.25} parent=0 // pred_region
    _
  $region9: #{resnet_forward_pallas.25} parent=0 // pred_fallthru
    _
  // Predicated region
  $region10: #{resnet_forward_pallas.25} parent=0 // pred_check
    _
  $region11: #{resnet_forward_pallas.25} parent=0 // pred_check_branch
    %13 = sbr.rel (0) target = $region13
  $region12: #{resnet_forward_pallas.25} parent=0 // pred_region
    _
  $region13: #{resnet_forward_pallas.25} parent=0 // pred_fallthru
    _
  %v15 = vld [vmem:[%s0] sm:$0xf]
  %v16 = vld [vmem:[%s0 + $0x4] sm:$0xf]
  %v17 = vld [vmem:[%s0 + $0x8] sm:$0xf]
  %v18 = vld [vmem:[%s0 + $0xc] sm:$0xf]
  %v19 = vld [vmem:[%s1] sm:$0xf]
  %v20 = vld [vmem:[%s1 + $0x4] sm:$0xf]
  %v21 = vld [vmem:[%s1 + $0x8] sm:$0xf]
  %v22 = vld [vmem:[%s1 + $0xc] sm:$0xf]
  %v23 = vld [vmem:[%s1 + $0x10] sm:$0xf]
  %v24 = vld [vmem:[%s1 + $0x14] sm:$0xf]
  %v25 = vld [vmem:[%s1 + $0x18] sm:$0xf]
  %v26 = vld [vmem:[%s1 + $0x1c] sm:$0xf]
  %v27 = vld [vmem:[%s1 + $0x20] sm:$0xf]
  %v28 = vld [vmem:[%s2] sm:$0x1]
  %v30 = vperm.slane %v28, 0
  %v36 = vunpack.c.l.b16 %v15
  %v37 = vunpack.c.l.b16 %v16
  %v38 = vunpack.c.l.b16 %v17
  %v39 = vunpack.c.l.b16 %v18
  %v40 = vpack.c.b16 %v37, %v36
  %v41 = vpack.c.b16 %v39, %v38
  %v51 = vunpack.c.l.b16 %v19
  %v52 = vunpack.c.l.b16 %v20
  %v53 = vunpack.c.l.b16 %v21
  %v54 = vunpack.c.l.b16 %v22
  %v55 = vunpack.c.l.b16 %v23
  %v56 = vunpack.c.l.b16 %v24
  %v57 = vunpack.c.l.b16 %v25
  %v58 = vunpack.c.l.b16 %v26
  %v59 = vunpack.c.l.b16 %v27
  %v60 = vpack.c.b16 %v52, %v51
  %v61 = vpack.c.b16 %v54, %v53
  %v62 = vpack.c.b16 %v56, %v55
  %v63 = vpack.c.b16 %v58, %v57
  %v64 = vpack.c.b16 %v59, %v59
  %vm69 = vcmask 588800
  %v71 = vsel %vm69, %v40, 0
  %v74 = vsel %vm69, %v41, 0
  %vm76 = vcmask 1043456
  %v78 = vsel %vm76, %v64, 0
  %80 = vmatpush.bf16.msra.mxu0 0
  %81 = vmatpush.bf16.msra.mxu0 0
  %82 = vmatpush.bf16.msra.mxu0 0
  %83 = vmatpush.bf16.msra.mxu0 %v78
  %84 = vmatpush.bf16.msra.mxu0 %v63
  %85 = vmatpush.bf16.msra.mxu0 %v62
  %86 = vmatpush.bf16.msra.mxu0 %v61
  %87 = vmatpush.bf16.msra.mxu0 %v60
  %88 = vmatmul.bf16.gmra.mxu0 %v71
  %v89 = vpop.f32.mrf.mxu0
  %v90 = vadd.f32 %v30, %v89
  %v91 = vpop.f32.mrf.mxu0
  %v92 = vadd.f32 %v30, %v91
  %93 = vmatmul.bf16.gmra.mxu0 %v74
  %v94 = vpop.f32.mrf.mxu0
  %v95 = vadd.f32 %v30, %v94
  %v96 = vpop.f32.mrf.mxu0
  %v97 = vadd.f32 %v30, %v96
  %98 = vdwg.mxu0
  %v99 = vmax.f32 %v90, 0.0
  %v100 = vmax.f32 %v92, 0.0
  %v101 = vmax.f32 %v95, 0.0
  %v102 = vmax.f32 %v97, 0.0
  %vm103 = vcmask 130048
  %104 = vst.msk [vmem:[%s3] sm:$0xff] %vm103, %v99
  %105 = vst.msk [vmem:[%s3 + $0x8] sm:$0xff] %vm103, %v100
  %106 = vst.msk [vmem:[%s3 + $0x10] sm:$0xff] %vm103, %v101
  %107 = vst.msk [vmem:[%s3 + $0x18] sm:$0xff] %vm103, %v102
  // Predicated region
  $region14: #{resnet_forward_pallas.25} parent=0 // pred_check
    _
  $region15: #{resnet_forward_pallas.25} parent=0 // pred_check_branch
    %109 = sbr.rel (0) target = $region17
  $region16: #{resnet_forward_pallas.25} parent=0 // pred_region
    _
  $region17: #{resnet_forward_pallas.25} parent=0 // pred_fallthru
    _
  // Predicated region
  $region18: #{resnet_forward_pallas.25} parent=0 // pred_check
    _
  $region19: #{resnet_forward_pallas.25} parent=0 // pred_check_branch
    %111 = sbr.rel (0) target = $region21
  $region20: #{resnet_forward_pallas.25} parent=0 // pred_region
    _
  $region21: #{resnet_forward_pallas.25} parent=0 // pred_fallthru
    _

// kernel: resnet_forward_pallas.26
$region0: #{resnet_forward_pallas.26}
  #allocation0 [shape = 'u32[]', space=smem, size = 0x4, offset = 0x4, fixed_abs, tag = 'smem constant byte address 0x4 - core index']
  #allocation1 [shape = 'u32[72,128]{1,0:T(1,128)}', space=vmem, size = 0x9000, scoped, tag = 'internal scratch']
  %s0 = inlined_call_operand.vmem [shape: bf16[32,8], index: 0, kind: input, shape index: {}]
  %s1 = inlined_call_operand.vmem [shape: bf16[8,16], index: 1, kind: input, shape index: {}]
  %s2 = inlined_call_operand.vmem [shape: f32[1,16], index: 2, kind: input, shape index: {}]
  %s3 = inlined_call_operand.vmem [shape: f32[32,16], index: 3, kind: output, shape index: {}]
  %s4 = sld [smem:[#allocation0]]
  $region22: #{resnet_forward_pallas.26} parent=0
    _
  %s6 = ssub.s32 1, %s4
  %s7 = scalar_select 0, %s6, %s4
  // Predicated region
  $region2: #{resnet_forward_pallas.26} parent=0 // pred_check
    _
  $region3: #{resnet_forward_pallas.26} parent=0 // pred_check_branch
    %9 = sbr.rel (0) target = $region5
  $region4: #{resnet_forward_pallas.26} parent=0 // pred_region
    _
  $region5: #{resnet_forward_pallas.26} parent=0 // pred_fallthru
    _
  // Predicated region
  $region6: #{resnet_forward_pallas.26} parent=0 // pred_check
    _
  $region7: #{resnet_forward_pallas.26} parent=0 // pred_check_branch
    %11 = sbr.rel (0) target = $region9
  $region8: #{resnet_forward_pallas.26} parent=0 // pred_region
    _
  $region9: #{resnet_forward_pallas.26} parent=0 // pred_fallthru
    _
  // Predicated region
  $region10: #{resnet_forward_pallas.26} parent=0 // pred_check
    _
  $region11: #{resnet_forward_pallas.26} parent=0 // pred_check_branch
    %13 = sbr.rel (0) target = $region13
  $region12: #{resnet_forward_pallas.26} parent=0 // pred_region
    _
  $region13: #{resnet_forward_pallas.26} parent=0 // pred_fallthru
    _
  %v15 = vld [vmem:[%s0] sm:$0xf]
  %v16 = vld [vmem:[%s0 + $0x4] sm:$0xf]
  %v17 = vld [vmem:[%s0 + $0x8] sm:$0xf]
  %v18 = vld [vmem:[%s0 + $0xc] sm:$0xf]
  %v19 = vld [vmem:[%s1] sm:$0xf]
  %v20 = vld [vmem:[%s2] sm:$0x1]
  %v22 = vperm.slane %v20, 0
  %v28 = vunpack.c.l.b16 %v15
  %v29 = vunpack.c.l.b16 %v16
  %v30 = vunpack.c.l.b16 %v17
  %v31 = vunpack.c.l.b16 %v18
  %v32 = vpack.c.b16 %v29, %v28
  %v33 = vpack.c.b16 %v31, %v30
  %vm34 = vcmask 64512
  %v36 = vsel %vm34, %v32, 0
  %v39 = vsel %vm34, %v33, 0
  %vm41 = vcmask 1043456
  %v43 = vsel %vm41, %v19, 0
  %45 = vmatpush.bf16.msra.mxu0 0
  %46 = vmatpush.bf16.msra.mxu0 0
  %47 = vmatpush.bf16.msra.mxu0 0
  %48 = vmatpush.bf16.msra.mxu0 0
  %49 = vmatpush.bf16.msra.mxu0 0
  %50 = vmatpush.bf16.msra.mxu0 0
  %51 = vmatpush.bf16.msra.mxu0 0
  %52 = vmatpush.bf16.msra.mxu0 %v43
  %53 = vmatmul.bf16.gmra.mxu0 %v36
  %v54 = vpop.f32.mrf.mxu0
  %v55 = vadd.f32 %v22, %v54
  %v56 = vpop.f32.mrf.mxu0
  %v57 = vadd.f32 %v22, %v56
  %58 = vmatmul.bf16.gmra.mxu0 %v39
  %v59 = vpop.f32.mrf.mxu0
  %v60 = vadd.f32 %v22, %v59
  %v61 = vpop.f32.mrf.mxu0
  %v62 = vadd.f32 %v22, %v61
  %63 = vdwg.mxu0
  %vm64 = vcmask 130048
  %65 = vst.msk [vmem:[%s3] sm:$0xff] %vm64, %v55
  %66 = vst.msk [vmem:[%s3 + $0x8] sm:$0xff] %vm64, %v57
  %67 = vst.msk [vmem:[%s3 + $0x10] sm:$0xff] %vm64, %v60
  %68 = vst.msk [vmem:[%s3 + $0x18] sm:$0xff] %vm64, %v62
  // Predicated region
  $region14: #{resnet_forward_pallas.26} parent=0 // pred_check
    _
  $region15: #{resnet_forward_pallas.26} parent=0 // pred_check_branch
    %70 = sbr.rel (0) target = $region17
  $region16: #{resnet_forward_pallas.26} parent=0 // pred_region
    _
  $region17: #{resnet_forward_pallas.26} parent=0 // pred_fallthru
    _
  // Predicated region
  $region18: #{resnet_forward_pallas.26} parent=0 // pred_check
    _
  $region19: #{resnet_forward_pallas.26} parent=0 // pred_check_branch
    %72 = sbr.rel (0) target = $region21
  $region20: #{resnet_forward_pallas.26} parent=0 // pred_region
    _
  $region21: #{resnet_forward_pallas.26} parent=0 // pred_fallthru
    _

// kernel: resnet_forward_pallas.27
$region0: #{resnet_forward_pallas.27}
  #allocation0 [shape = 'u32[]', space=smem, size = 0x4, offset = 0x4, fixed_abs, tag = 'smem constant byte address 0x4 - core index']
  #allocation1 [shape = 'u32[72,128]{1,0:T(1,128)}', space=vmem, size = 0x9000, scoped, tag = 'internal scratch']
  %s0 = inlined_call_operand.vmem [shape: bf16[32,144], index: 0, kind: input, shape index: {}]
  %s1 = inlined_call_operand.vmem [shape: bf16[144,16], index: 1, kind: input, shape index: {}]
  %s2 = inlined_call_operand.vmem [shape: f32[1,16], index: 2, kind: input, shape index: {}]
  %s3 = inlined_call_operand.vmem [shape: f32[32,16], index: 3, kind: input, shape index: {}]
  %s4 = inlined_call_operand.vmem [shape: f32[32,16], index: 4, kind: output, shape index: {}]
  %s5 = sld [smem:[#allocation0]]
  $region26: #{resnet_forward_pallas.27} parent=0
    _
  %s7 = ssub.s32 1, %s5
  %s8 = scalar_select 0, %s7, %s5
  // Predicated region
  $region2: #{resnet_forward_pallas.27} parent=0 // pred_check
    _
  $region3: #{resnet_forward_pallas.27} parent=0 // pred_check_branch
    %10 = sbr.rel (0) target = $region5
  $region4: #{resnet_forward_pallas.27} parent=0 // pred_region
    _
  $region5: #{resnet_forward_pallas.27} parent=0 // pred_fallthru
    _
  // Predicated region
  $region6: #{resnet_forward_pallas.27} parent=0 // pred_check
    _
  $region7: #{resnet_forward_pallas.27} parent=0 // pred_check_branch
    %12 = sbr.rel (0) target = $region9
  $region8: #{resnet_forward_pallas.27} parent=0 // pred_region
    _
  $region9: #{resnet_forward_pallas.27} parent=0 // pred_fallthru
    _
  // Predicated region
  $region10: #{resnet_forward_pallas.27} parent=0 // pred_check
    _
  $region11: #{resnet_forward_pallas.27} parent=0 // pred_check_branch
    %14 = sbr.rel (0) target = $region13
  $region12: #{resnet_forward_pallas.27} parent=0 // pred_region
    _
  $region13: #{resnet_forward_pallas.27} parent=0 // pred_fallthru
    _
  // Predicated region
  $region14: #{resnet_forward_pallas.27} parent=0 // pred_check
    _
  $region15: #{resnet_forward_pallas.27} parent=0 // pred_check_branch
    %16 = sbr.rel (0) target = $region17
  $region16: #{resnet_forward_pallas.27} parent=0 // pred_region
    _
  $region17: #{resnet_forward_pallas.27} parent=0 // pred_fallthru
    _
  %v18 = vld [vmem:[%s0] sm:$0xff]
  %v19 = vld [vmem:[%s0 + $0x8] sm:$0xff]
  %v20 = vld [vmem:[%s0 + $0x10] sm:$0xff]
  %v21 = vld [vmem:[%s0 + $0x18] sm:$0xff]
  %v22 = vld [vmem:[%s1] sm:$0xf]
  %v23 = vld [vmem:[%s1 + $0x4] sm:$0xf]
  %v24 = vld [vmem:[%s1 + $0x8] sm:$0xf]
  %v25 = vld [vmem:[%s1 + $0xc] sm:$0xf]
  %v26 = vld [vmem:[%s1 + $0x10] sm:$0xf]
  %v27 = vld [vmem:[%s1 + $0x14] sm:$0xf]
  %v28 = vld [vmem:[%s1 + $0x18] sm:$0xf]
  %v29 = vld [vmem:[%s1 + $0x1c] sm:$0xf]
  %v30 = vld [vmem:[%s1 + $0x20] sm:$0xf]
  %v31 = vld [vmem:[%s1 + $0x24] sm:$0xf]
  %v32 = vld [vmem:[%s1 + $0x28] sm:$0xf]
  %v33 = vld [vmem:[%s1 + $0x2c] sm:$0xf]
  %v34 = vld [vmem:[%s1 + $0x30] sm:$0xf]
  %v35 = vld [vmem:[%s1 + $0x34] sm:$0xf]
  %v36 = vld [vmem:[%s1 + $0x38] sm:$0xf]
  %v37 = vld [vmem:[%s1 + $0x3c] sm:$0xf]
  %v38 = vld [vmem:[%s1 + $0x40] sm:$0xf]
  %v39 = vld [vmem:[%s1 + $0x44] sm:$0xf]
  %v40 = vld [vmem:[%s2] sm:$0x1]
  %v42 = vperm.slane %v40, 0
  %v48 = vunpack.c.l.b16 %v18
  %v49 = vunpack.c.h.b16 %v18
  %v50 = vunpack.c.l.b16 %v19
  %v51 = vunpack.c.h.b16 %v19
  %v52 = vunpack.c.l.b16 %v20
  %v53 = vunpack.c.h.b16 %v20
  %v54 = vunpack.c.l.b16 %v21
  %v55 = vunpack.c.h.b16 %v21
  %v56 = vpack.c.b16 %v50, %v48
  %v57 = vpack.c.b16 %v51, %v49
  %v58 = vpack.c.b16 %v54, %v52
  %v59 = vpack.c.b16 %v55, %v53
  %v80 = vunpack.c.l.b16 %v22
  %v81 = vunpack.c.l.b16 %v23
  %v82 = vunpack.c.l.b16 %v24
  %v83 = vunpack.c.l.b16 %v25
  %v84 = vunpack.c.l.b16 %v26
  %v85 = vunpack.c.l.b16 %v27
  %v86 = vunpack.c.l.b16 %v28
  %v87 = vunpack.c.l.b16 %v29
  %v88 = vunpack.c.l.b16 %v30
  %v89 = vunpack.c.l.b16 %v31
  %v90 = vunpack.c.l.b16 %v32
  %v91 = vunpack.c.l.b16 %v33
  %v92 = vunpack.c.l.b16 %v34
  %v93 = vunpack.c.l.b16 %v35
  %v94 = vunpack.c.l.b16 %v36
  %v95 = vunpack.c.l.b16 %v37
  %v96 = vunpack.c.l.b16 %v38
  %v97 = vunpack.c.l.b16 %v39
  %v98 = vpack.c.b16 %v81, %v80
  %v99 = vpack.c.b16 %v83, %v82
  %v100 = vpack.c.b16 %v85, %v84
  %v101 = vpack.c.b16 %v87, %v86
  %v102 = vpack.c.b16 %v89, %v88
  %v103 = vpack.c.b16 %v91, %v90
  %v104 = vpack.c.b16 %v93, %v92
  %v105 = vpack.c.b16 %v95, %v94
  %v106 = vpack.c.b16 %v97, %v96
  %vm116 = vcmask 130048
  %v118 = vsel %vm116, %v57, 0
  %v121 = vsel %vm116, %v59, 0
  %123 = vmatpush.bf16.msra.mxu0 %v105
  %124 = vmatpush.bf16.msra.mxu0 %v104
  %125 = vmatpush.bf16.msra.mxu0 %v103
  %126 = vmatpush.bf16.msra.mxu0 %v102
  %127 = vmatpush.bf16.msra.mxu0 %v101
  %128 = vmatpush.bf16.msra.mxu0 %v100
  %129 = vmatpush.bf16.msra.mxu0 %v99
  %130 = vmatpush.bf16.msra.mxu0 %v98
  %131 = vmatmul.bf16.gmra.mxu0 %v56
  %v132 = vpop.f32.mrf.mxu0
  %v133 = vadd.f32 %v42, %v132
  %v134 = vpop.f32.mrf.mxu0
  %v135 = vadd.f32 %v42, %v134
  %136 = vmatmul.bf16.gmra.mxu0 %v58
  %v137 = vpop.f32.mrf.mxu0
  %v138 = vadd.f32 %v42, %v137
  %v139 = vpop.f32.mrf.mxu0
  %v140 = vadd.f32 %v42, %v139
  %141 = vdwg.mxu0
  %142 = vmatpush.bf16.msra.mxu0 0
  %143 = vmatpush.bf16.msra.mxu0 0
  %144 = vmatpush.bf16.msra.mxu0 0
  %145 = vmatpush.bf16.msra.mxu0 0
  %146 = vmatpush.bf16.msra.mxu0 0
  %147 = vmatpush.bf16.msra.mxu0 0
  %148 = vmatpush.bf16.msra.mxu0 0
  %149 = vmatpush.bf16.msra.mxu0 %v106
  %150 = vmatmul.bf16.gmra.mxu0 %v118
  %v151 = vpop.f32.mrf.mxu0
  %v152 = vadd.f32 %v133, %v151
  %v153 = vpop.f32.mrf.mxu0
  %v154 = vadd.f32 %v135, %v153
  %155 = vmatmul.bf16.gmra.mxu0 %v121
  %v156 = vpop.f32.mrf.mxu0
  %v157 = vadd.f32 %v138, %v156
  %v158 = vpop.f32.mrf.mxu0
  %v159 = vadd.f32 %v140, %v158
  %160 = vdwg.mxu0
  %v161 = vld [vmem:[%s3] sm:$0xff]
  %v162 = vld [vmem:[%s3 + $0x8] sm:$0xff]
  %v163 = vld [vmem:[%s3 + $0x10] sm:$0xff]
  %v164 = vld [vmem:[%s3 + $0x18] sm:$0xff]
  %v165 = vadd.f32 %v152, %v161
  %v166 = vadd.f32 %v154, %v162
  %v167 = vadd.f32 %v157, %v163
  %v168 = vadd.f32 %v159, %v164
  %v169 = vmax.f32 %v165, 0.0
  %v170 = vmax.f32 %v166, 0.0
  %v171 = vmax.f32 %v167, 0.0
  %v172 = vmax.f32 %v168, 0.0
  %173 = vst.msk [vmem:[%s4] sm:$0xff] %vm116, %v169
  %174 = vst.msk [vmem:[%s4 + $0x8] sm:$0xff] %vm116, %v170
  %175 = vst.msk [vmem:[%s4 + $0x10] sm:$0xff] %vm116, %v171
  %176 = vst.msk [vmem:[%s4 + $0x18] sm:$0xff] %vm116, %v172
  // Predicated region
  $region18: #{resnet_forward_pallas.27} parent=0 // pred_check
    _
  $region19: #{resnet_forward_pallas.27} parent=0 // pred_check_branch
    %178 = sbr.rel (0) target = $region21
  $region20: #{resnet_forward_pallas.27} parent=0 // pred_region
    _
  $region21: #{resnet_forward_pallas.27} parent=0 // pred_fallthru
    _
  // Predicated region
  $region22: #{resnet_forward_pallas.27} parent=0 // pred_check
    _
  $region23: #{resnet_forward_pallas.27} parent=0 // pred_check_branch
    %180 = sbr.rel (0) target = $region25
  $region24: #{resnet_forward_pallas.27} parent=0 // pred_region
    _
  $region25: #{resnet_forward_pallas.27} parent=0 // pred_fallthru
    _

// kernel: resnet_forward_pallas.28
$region0: #{resnet_forward_pallas.28}
  #allocation0 [shape = 'u32[]', space=smem, size = 0x4, offset = 0x4, fixed_abs, tag = 'smem constant byte address 0x4 - core index']
  #allocation1 [shape = 'u32[72,128]{1,0:T(1,128)}', space=vmem, size = 0x9000, scoped, tag = 'internal scratch']
  %s0 = inlined_call_operand.vmem [shape: bf16[32,144], index: 0, kind: input, shape index: {}]
  %s1 = inlined_call_operand.vmem [shape: bf16[144,16], index: 1, kind: input, shape index: {}]
  %s2 = inlined_call_operand.vmem [shape: f32[1,16], index: 2, kind: input, shape index: {}]
  %s3 = inlined_call_operand.vmem [shape: f32[32,16], index: 3, kind: output, shape index: {}]
  %s4 = sld [smem:[#allocation0]]
  $region22: #{resnet_forward_pallas.28} parent=0
    _
  %s6 = ssub.s32 1, %s4
  %s7 = scalar_select 0, %s6, %s4
  // Predicated region
  $region2: #{resnet_forward_pallas.28} parent=0 // pred_check
    _
  $region3: #{resnet_forward_pallas.28} parent=0 // pred_check_branch
    %9 = sbr.rel (0) target = $region5
  $region4: #{resnet_forward_pallas.28} parent=0 // pred_region
    _
  $region5: #{resnet_forward_pallas.28} parent=0 // pred_fallthru
    _
  // Predicated region
  $region6: #{resnet_forward_pallas.28} parent=0 // pred_check
    _
  $region7: #{resnet_forward_pallas.28} parent=0 // pred_check_branch
    %11 = sbr.rel (0) target = $region9
  $region8: #{resnet_forward_pallas.28} parent=0 // pred_region
    _
  $region9: #{resnet_forward_pallas.28} parent=0 // pred_fallthru
    _
  // Predicated region
  $region10: #{resnet_forward_pallas.28} parent=0 // pred_check
    _
  $region11: #{resnet_forward_pallas.28} parent=0 // pred_check_branch
    %13 = sbr.rel (0) target = $region13
  $region12: #{resnet_forward_pallas.28} parent=0 // pred_region
    _
  $region13: #{resnet_forward_pallas.28} parent=0 // pred_fallthru
    _
  %v15 = vld [vmem:[%s0] sm:$0xff]
  %v16 = vld [vmem:[%s0 + $0x8] sm:$0xff]
  %v17 = vld [vmem:[%s0 + $0x10] sm:$0xff]
  %v18 = vld [vmem:[%s0 + $0x18] sm:$0xff]
  %v19 = vld [vmem:[%s1] sm:$0xf]
  %v20 = vld [vmem:[%s1 + $0x4] sm:$0xf]
  %v21 = vld [vmem:[%s1 + $0x8] sm:$0xf]
  %v22 = vld [vmem:[%s1 + $0xc] sm:$0xf]
  %v23 = vld [vmem:[%s1 + $0x10] sm:$0xf]
  %v24 = vld [vmem:[%s1 + $0x14] sm:$0xf]
  %v25 = vld [vmem:[%s1 + $0x18] sm:$0xf]
  %v26 = vld [vmem:[%s1 + $0x1c] sm:$0xf]
  %v27 = vld [vmem:[%s1 + $0x20] sm:$0xf]
  %v28 = vld [vmem:[%s1 + $0x24] sm:$0xf]
  %v29 = vld [vmem:[%s1 + $0x28] sm:$0xf]
  %v30 = vld [vmem:[%s1 + $0x2c] sm:$0xf]
  %v31 = vld [vmem:[%s1 + $0x30] sm:$0xf]
  %v32 = vld [vmem:[%s1 + $0x34] sm:$0xf]
  %v33 = vld [vmem:[%s1 + $0x38] sm:$0xf]
  %v34 = vld [vmem:[%s1 + $0x3c] sm:$0xf]
  %v35 = vld [vmem:[%s1 + $0x40] sm:$0xf]
  %v36 = vld [vmem:[%s1 + $0x44] sm:$0xf]
  %v37 = vld [vmem:[%s2] sm:$0x1]
  %v39 = vperm.slane %v37, 0
  %v45 = vunpack.c.l.b16 %v15
  %v46 = vunpack.c.h.b16 %v15
  %v47 = vunpack.c.l.b16 %v16
  %v48 = vunpack.c.h.b16 %v16
  %v49 = vunpack.c.l.b16 %v17
  %v50 = vunpack.c.h.b16 %v17
  %v51 = vunpack.c.l.b16 %v18
  %v52 = vunpack.c.h.b16 %v18
  %v53 = vpack.c.b16 %v47, %v45
  %v54 = vpack.c.b16 %v48, %v46
  %v55 = vpack.c.b16 %v51, %v49
  %v56 = vpack.c.b16 %v52, %v50
  %v77 = vunpack.c.l.b16 %v19
  %v78 = vunpack.c.l.b16 %v20
  %v79 = vunpack.c.l.b16 %v21
  %v80 = vunpack.c.l.b16 %v22
  %v81 = vunpack.c.l.b16 %v23
  %v82 = vunpack.c.l.b16 %v24
  %v83 = vunpack.c.l.b16 %v25
  %v84 = vunpack.c.l.b16 %v26
  %v85 = vunpack.c.l.b16 %v27
  %v86 = vunpack.c.l.b16 %v28
  %v87 = vunpack.c.l.b16 %v29
  %v88 = vunpack.c.l.b16 %v30
  %v89 = vunpack.c.l.b16 %v31
  %v90 = vunpack.c.l.b16 %v32
  %v91 = vunpack.c.l.b16 %v33
  %v92 = vunpack.c.l.b16 %v34
  %v93 = vunpack.c.l.b16 %v35
  %v94 = vunpack.c.l.b16 %v36
  %v95 = vpack.c.b16 %v78, %v77
  %v96 = vpack.c.b16 %v80, %v79
  %v97 = vpack.c.b16 %v82, %v81
  %v98 = vpack.c.b16 %v84, %v83
  %v99 = vpack.c.b16 %v86, %v85
  %v100 = vpack.c.b16 %v88, %v87
  %v101 = vpack.c.b16 %v90, %v89
  %v102 = vpack.c.b16 %v92, %v91
  %v103 = vpack.c.b16 %v94, %v93
  %vm113 = vcmask 130048
  %v115 = vsel %vm113, %v54, 0
  %v118 = vsel %vm113, %v56, 0
  %120 = vmatpush.bf16.msra.mxu0 %v102
  %121 = vmatpush.bf16.msra.mxu0 %v101
  %122 = vmatpush.bf16.msra.mxu0 %v100
  %123 = vmatpush.bf16.msra.mxu0 %v99
  %124 = vmatpush.bf16.msra.mxu0 %v98
  %125 = vmatpush.bf16.msra.mxu0 %v97
  %126 = vmatpush.bf16.msra.mxu0 %v96
  %127 = vmatpush.bf16.msra.mxu0 %v95
  %128 = vmatmul.bf16.gmra.mxu0 %v53
  %v129 = vpop.f32.mrf.mxu0
  %v130 = vadd.f32 %v39, %v129
  %v131 = vpop.f32.mrf.mxu0
  %v132 = vadd.f32 %v39, %v131
  %133 = vmatmul.bf16.gmra.mxu0 %v55
  %v134 = vpop.f32.mrf.mxu0
  %v135 = vadd.f32 %v39, %v134
  %v136 = vpop.f32.mrf.mxu0
  %v137 = vadd.f32 %v39, %v136
  %138 = vdwg.mxu0
  %139 = vmatpush.bf16.msra.mxu0 0
  %140 = vmatpush.bf16.msra.mxu0 0
  %141 = vmatpush.bf16.msra.mxu0 0
  %142 = vmatpush.bf16.msra.mxu0 0
  %143 = vmatpush.bf16.msra.mxu0 0
  %144 = vmatpush.bf16.msra.mxu0 0
  %145 = vmatpush.bf16.msra.mxu0 0
  %146 = vmatpush.bf16.msra.mxu0 %v103
  %147 = vmatmul.bf16.gmra.mxu0 %v115
  %v148 = vpop.f32.mrf.mxu0
  %v149 = vadd.f32 %v130, %v148
  %v150 = vpop.f32.mrf.mxu0
  %v151 = vadd.f32 %v132, %v150
  %152 = vmatmul.bf16.gmra.mxu0 %v118
  %v153 = vpop.f32.mrf.mxu0
  %v154 = vadd.f32 %v135, %v153
  %v155 = vpop.f32.mrf.mxu0
  %v156 = vadd.f32 %v137, %v155
  %157 = vdwg.mxu0
  %v158 = vmax.f32 %v149, 0.0
  %v159 = vmax.f32 %v151, 0.0
  %v160 = vmax.f32 %v154, 0.0
  %v161 = vmax.f32 %v156, 0.0
  %162 = vst.msk [vmem:[%s3] sm:$0xff] %vm113, %v158
  %163 = vst.msk [vmem:[%s3 + $0x8] sm:$0xff] %vm113, %v159
  %164 = vst.msk [vmem:[%s3 + $0x10] sm:$0xff] %vm113, %v160
  %165 = vst.msk [vmem:[%s3 + $0x18] sm:$0xff] %vm113, %v161
  // Predicated region
  $region14: #{resnet_forward_pallas.28} parent=0 // pred_check
    _
  $region15: #{resnet_forward_pallas.28} parent=0 // pred_check_branch
    %167 = sbr.rel (0) target = $region17
  $region16: #{resnet_forward_pallas.28} parent=0 // pred_region
    _
  $region17: #{resnet_forward_pallas.28} parent=0 // pred_fallthru
    _
  // Predicated region
  $region18: #{resnet_forward_pallas.28} parent=0 // pred_check
    _
  $region19: #{resnet_forward_pallas.28} parent=0 // pred_check_branch
    %169 = sbr.rel (0) target = $region21
  $region20: #{resnet_forward_pallas.28} parent=0 // pred_region
    _
  $region21: #{resnet_forward_pallas.28} parent=0 // pred_fallthru
    _

// kernel: resnet_forward_pallas.30
$region0: #{resnet_forward_pallas.30}
  #allocation0 [shape = 'u32[]', space=smem, size = 0x4, offset = 0x4, fixed_abs, tag = 'smem constant byte address 0x4 - core index']
  #allocation1 [shape = 'u32[72,128]{1,0:T(1,128)}', space=vmem, size = 0x9000, scoped, tag = 'internal scratch']
  %s0 = inlined_call_operand.vmem [shape: bf16[8,144], index: 0, kind: input, shape index: {}]
  %s1 = inlined_call_operand.vmem [shape: bf16[144,32], index: 1, kind: input, shape index: {}]
  %s2 = inlined_call_operand.vmem [shape: f32[1,32], index: 2, kind: input, shape index: {}]
  %s3 = inlined_call_operand.vmem [shape: f32[8,32], index: 3, kind: output, shape index: {}]
  %s4 = sld [smem:[#allocation0]]
  $region22: #{resnet_forward_pallas.30} parent=0
    _
  %s6 = ssub.s32 1, %s4
  %s7 = scalar_select 0, %s6, %s4
  // Predicated region
  $region2: #{resnet_forward_pallas.30} parent=0 // pred_check
    _
  $region3: #{resnet_forward_pallas.30} parent=0 // pred_check_branch
    %9 = sbr.rel (0) target = $region5
  $region4: #{resnet_forward_pallas.30} parent=0 // pred_region
    _
  $region5: #{resnet_forward_pallas.30} parent=0 // pred_fallthru
    _
  // Predicated region
  $region6: #{resnet_forward_pallas.30} parent=0 // pred_check
    _
  $region7: #{resnet_forward_pallas.30} parent=0 // pred_check_branch
    %11 = sbr.rel (0) target = $region9
  $region8: #{resnet_forward_pallas.30} parent=0 // pred_region
    _
  $region9: #{resnet_forward_pallas.30} parent=0 // pred_fallthru
    _
  // Predicated region
  $region10: #{resnet_forward_pallas.30} parent=0 // pred_check
    _
  $region11: #{resnet_forward_pallas.30} parent=0 // pred_check_branch
    %13 = sbr.rel (0) target = $region13
  $region12: #{resnet_forward_pallas.30} parent=0 // pred_region
    _
  $region13: #{resnet_forward_pallas.30} parent=0 // pred_fallthru
    _
  %v15 = vld [vmem:[%s0] sm:$0xff]
  %v16 = vld [vmem:[%s1] sm:$0xf]
  %v17 = vld [vmem:[%s1 + $0x4] sm:$0xf]
  %v18 = vld [vmem:[%s1 + $0x8] sm:$0xf]
  %v19 = vld [vmem:[%s1 + $0xc] sm:$0xf]
  %v20 = vld [vmem:[%s1 + $0x10] sm:$0xf]
  %v21 = vld [vmem:[%s1 + $0x14] sm:$0xf]
  %v22 = vld [vmem:[%s1 + $0x18] sm:$0xf]
  %v23 = vld [vmem:[%s1 + $0x1c] sm:$0xf]
  %v24 = vld [vmem:[%s1 + $0x20] sm:$0xf]
  %v25 = vld [vmem:[%s1 + $0x24] sm:$0xf]
  %v26 = vld [vmem:[%s1 + $0x28] sm:$0xf]
  %v27 = vld [vmem:[%s1 + $0x2c] sm:$0xf]
  %v28 = vld [vmem:[%s1 + $0x30] sm:$0xf]
  %v29 = vld [vmem:[%s1 + $0x34] sm:$0xf]
  %v30 = vld [vmem:[%s1 + $0x38] sm:$0xf]
  %v31 = vld [vmem:[%s1 + $0x3c] sm:$0xf]
  %v32 = vld [vmem:[%s1 + $0x40] sm:$0xf]
  %v33 = vld [vmem:[%s1 + $0x44] sm:$0xf]
  %v34 = vld [vmem:[%s2] sm:$0x1]
  %v36 = vperm.slane %v34, 0
  %v39 = vunpack.c.l.b16 %v15
  %v40 = vunpack.c.h.b16 %v15
  %v41 = vpack.c.b16 %v39, %v39
  %v42 = vpack.c.b16 %v40, %v40
  %v62 = vunpack.c.l.b16 %v16
  %v63 = vunpack.c.l.b16 %v17
  %v64 = vunpack.c.l.b16 %v18
  %v65 = vunpack.c.l.b16 %v19
  %v66 = vunpack.c.l.b16 %v20
  %v67 = vunpack.c.l.b16 %v21
  %v68 = vunpack.c.l.b16 %v22
  %v69 = vunpack.c.l.b16 %v23
  %v70 = vunpack.c.l.b16 %v24
  %v71 = vunpack.c.l.b16 %v25
  %v72 = vunpack.c.l.b16 %v26
  %v73 = vunpack.c.l.b16 %v27
  %v74 = vunpack.c.l.b16 %v28
  %v75 = vunpack.c.l.b16 %v29
  %v76 = vunpack.c.l.b16 %v30
  %v77 = vunpack.c.l.b16 %v31
  %v78 = vunpack.c.l.b16 %v32
  %v79 = vunpack.c.l.b16 %v33
  %v80 = vpack.c.b16 %v63, %v62
  %v81 = vpack.c.b16 %v65, %v64
  %v82 = vpack.c.b16 %v67, %v66
  %v83 = vpack.c.b16 %v69, %v68
  %v84 = vpack.c.b16 %v71, %v70
  %v85 = vpack.c.b16 %v73, %v72
  %v86 = vpack.c.b16 %v75, %v74
  %v87 = vpack.c.b16 %v77, %v76
  %v88 = vpack.c.b16 %v79, %v78
  %vm98 = vcmask 130048
  %v100 = vsel %vm98, %v42, 0
  %102 = vmatpush.bf16.msra.mxu0 %v87
  %103 = vmatpush.bf16.msra.mxu0 %v86
  %104 = vmatpush.bf16.msra.mxu0 %v85
  %105 = vmatpush.bf16.msra.mxu0 %v84
  %106 = vmatpush.bf16.msra.mxu0 %v83
  %107 = vmatpush.bf16.msra.mxu0 %v82
  %108 = vmatpush.bf16.msra.mxu0 %v81
  %109 = vmatpush.bf16.msra.mxu0 %v80
  %110 = vmatmul.bf16.gmra.mxu0 %v41
  %v111 = vpop.f32.mrf.mxu0
  %v112 = vadd.f32 %v36, %v111
  %v113 = vpop.f32.mrf.mxu0
  %114 = vdwg.mxu0
  %115 = vmatpush.bf16.msra.mxu0 0
  %116 = vmatpush.bf16.msra.mxu0 0
  %117 = vmatpush.bf16.msra.mxu0 0
  %118 = vmatpush.bf16.msra.mxu0 0
  %119 = vmatpush.bf16.msra.mxu0 0
  %120 = vmatpush.bf16.msra.mxu0 0
  %121 = vmatpush.bf16.msra.mxu0 0
  %122 = vmatpush.bf16.msra.mxu0 %v88
  %123 = vmatmul.bf16.gmra.mxu0 %v100
  %v124 = vpop.f32.mrf.mxu0
  %v125 = vadd.f32 %v112, %v124
  %v126 = vpop.f32.mrf.mxu0
  %127 = vdwg.mxu0
  %v128 = vmax.f32 %v125, 0.0
  %vm129 = vcmask 261120
  %130 = vst.msk [vmem:[%s3] sm:$0xff] %vm129, %v128
  // Predicated region
  $region14: #{resnet_forward_pallas.30} parent=0 // pred_check
    _
  $region15: #{resnet_forward_pallas.30} parent=0 // pred_check_branch
    %132 = sbr.rel (0) target = $region17
  $region16: #{resnet_forward_pallas.30} parent=0 // pred_region
    _
  $region17: #{resnet_forward_pallas.30} parent=0 // pred_fallthru
    _
  // Predicated region
  $region18: #{resnet_forward_pallas.30} parent=0 // pred_check
    _
  $region19: #{resnet_forward_pallas.30} parent=0 // pred_check_branch
    %134 = sbr.rel (0) target = $region21
  $region20: #{resnet_forward_pallas.30} parent=0 // pred_region
    _
  $region21: #{resnet_forward_pallas.30} parent=0 // pred_fallthru
    _

// kernel: resnet_forward_pallas.31
$region0: #{resnet_forward_pallas.31}
  #allocation0 [shape = 'u32[]', space=smem, size = 0x4, offset = 0x4, fixed_abs, tag = 'smem constant byte address 0x4 - core index']
  #allocation1 [shape = 'u32[72,128]{1,0:T(1,128)}', space=vmem, size = 0x9000, scoped, tag = 'internal scratch']
  %s0 = inlined_call_operand.vmem [shape: bf16[8,16], index: 0, kind: input, shape index: {}]
  %s1 = inlined_call_operand.vmem [shape: bf16[16,32], index: 1, kind: input, shape index: {}]
  %s2 = inlined_call_operand.vmem [shape: f32[1,32], index: 2, kind: input, shape index: {}]
  %s3 = inlined_call_operand.vmem [shape: f32[8,32], index: 3, kind: output, shape index: {}]
  %s4 = sld [smem:[#allocation0]]
  $region22: #{resnet_forward_pallas.31} parent=0
    _
  %s6 = ssub.s32 1, %s4
  %s7 = scalar_select 0, %s6, %s4
  // Predicated region
  $region2: #{resnet_forward_pallas.31} parent=0 // pred_check
    _
  $region3: #{resnet_forward_pallas.31} parent=0 // pred_check_branch
    %9 = sbr.rel (0) target = $region5
  $region4: #{resnet_forward_pallas.31} parent=0 // pred_region
    _
  $region5: #{resnet_forward_pallas.31} parent=0 // pred_fallthru
    _
  // Predicated region
  $region6: #{resnet_forward_pallas.31} parent=0 // pred_check
    _
  $region7: #{resnet_forward_pallas.31} parent=0 // pred_check_branch
    %11 = sbr.rel (0) target = $region9
  $region8: #{resnet_forward_pallas.31} parent=0 // pred_region
    _
  $region9: #{resnet_forward_pallas.31} parent=0 // pred_fallthru
    _
  // Predicated region
  $region10: #{resnet_forward_pallas.31} parent=0 // pred_check
    _
  $region11: #{resnet_forward_pallas.31} parent=0 // pred_check_branch
    %13 = sbr.rel (0) target = $region13
  $region12: #{resnet_forward_pallas.31} parent=0 // pred_region
    _
  $region13: #{resnet_forward_pallas.31} parent=0 // pred_fallthru
    _
  %v15 = vld [vmem:[%s0] sm:$0xf]
  %v16 = vld [vmem:[%s1] sm:$0xf]
  %v17 = vld [vmem:[%s1 + $0x4] sm:$0xf]
  %v18 = vld [vmem:[%s2] sm:$0x1]
  %v20 = vperm.slane %v18, 0
  %v24 = vunpack.c.l.b16 %v16
  %v25 = vunpack.c.l.b16 %v17
  %v26 = vpack.c.b16 %v25, %v24
  %vm28 = vcmask 130048
  %v30 = vsel %vm28, %v15, 0
  %32 = vmatpush.bf16.msra.mxu0 0
  %33 = vmatpush.bf16.msra.mxu0 0
  %34 = vmatpush.bf16.msra.mxu0 0
  %35 = vmatpush.bf16.msra.mxu0 0
  %36 = vmatpush.bf16.msra.mxu0 0
  %37 = vmatpush.bf16.msra.mxu0 0
  %38 = vmatpush.bf16.msra.mxu0 0
  %39 = vmatpush.bf16.msra.mxu0 %v26
  %40 = vmatmul.bf16.gmra.mxu0 %v30
  %v41 = vpop.f32.mrf.mxu0
  %v42 = vadd.f32 %v20, %v41
  %v43 = vpop.f32.mrf.mxu0
  %44 = vdwg.mxu0
  %vm45 = vcmask 261120
  %46 = vst.msk [vmem:[%s3] sm:$0xff] %vm45, %v42
  // Predicated region
  $region14: #{resnet_forward_pallas.31} parent=0 // pred_check
    _
  $region15: #{resnet_forward_pallas.31} parent=0 // pred_check_branch
    %48 = sbr.rel (0) target = $region17
  $region16: #{resnet_forward_pallas.31} parent=0 // pred_region
    _
  $region17: #{resnet_forward_pallas.31} parent=0 // pred_fallthru
    _
  // Predicated region
  $region18: #{resnet_forward_pallas.31} parent=0 // pred_check
    _
  $region19: #{resnet_forward_pallas.31} parent=0 // pred_check_branch
    %50 = sbr.rel (0) target = $region21
  $region20: #{resnet_forward_pallas.31} parent=0 // pred_region
    _
  $region21: #{resnet_forward_pallas.31} parent=0 // pred_fallthru
    _

// kernel: resnet_forward_pallas.32
$region0: #{resnet_forward_pallas.32}
  #allocation0 [shape = 'u32[]', space=smem, size = 0x4, offset = 0x4, fixed_abs, tag = 'smem constant byte address 0x4 - core index']
  #allocation1 [shape = 'u32[72,128]{1,0:T(1,128)}', space=vmem, size = 0x9000, scoped, tag = 'internal scratch']
  %s0 = inlined_call_operand.vmem [shape: bf16[8,288], index: 0, kind: input, shape index: {}]
  %s1 = inlined_call_operand.vmem [shape: bf16[288,32], index: 1, kind: input, shape index: {}]
  %s2 = inlined_call_operand.vmem [shape: f32[1,32], index: 2, kind: input, shape index: {}]
  %s3 = inlined_call_operand.vmem [shape: f32[8,32], index: 3, kind: input, shape index: {}]
  %s4 = inlined_call_operand.vmem [shape: f32[8,32], index: 4, kind: output, shape index: {}]
  %s5 = sld [smem:[#allocation0]]
  $region26: #{resnet_forward_pallas.32} parent=0
    _
  %s7 = ssub.s32 1, %s5
  %s8 = scalar_select 0, %s7, %s5
  // Predicated region
  $region2: #{resnet_forward_pallas.32} parent=0 // pred_check
    _
  $region3: #{resnet_forward_pallas.32} parent=0 // pred_check_branch
    %10 = sbr.rel (0) target = $region5
  $region4: #{resnet_forward_pallas.32} parent=0 // pred_region
    _
  $region5: #{resnet_forward_pallas.32} parent=0 // pred_fallthru
    _
  // Predicated region
  $region6: #{resnet_forward_pallas.32} parent=0 // pred_check
    _
  $region7: #{resnet_forward_pallas.32} parent=0 // pred_check_branch
    %12 = sbr.rel (0) target = $region9
  $region8: #{resnet_forward_pallas.32} parent=0 // pred_region
    _
  $region9: #{resnet_forward_pallas.32} parent=0 // pred_fallthru
    _
  // Predicated region
  $region10: #{resnet_forward_pallas.32} parent=0 // pred_check
    _
  $region11: #{resnet_forward_pallas.32} parent=0 // pred_check_branch
    %14 = sbr.rel (0) target = $region13
  $region12: #{resnet_forward_pallas.32} parent=0 // pred_region
    _
  $region13: #{resnet_forward_pallas.32} parent=0 // pred_fallthru
    _
  // Predicated region
  $region14: #{resnet_forward_pallas.32} parent=0 // pred_check
    _
  $region15: #{resnet_forward_pallas.32} parent=0 // pred_check_branch
    %16 = sbr.rel (0) target = $region17
  $region16: #{resnet_forward_pallas.32} parent=0 // pred_region
    _
  $region17: #{resnet_forward_pallas.32} parent=0 // pred_fallthru
    _
  %v18 = vld [vmem:[%s0] sm:$0xff]
  %v19 = vld [vmem:[%s0 + $0x8] sm:$0xf]
  %v20 = vld [vmem:[%s1] sm:$0xf]
  %v21 = vld [vmem:[%s1 + $0x4] sm:$0xf]
  %v22 = vld [vmem:[%s1 + $0x8] sm:$0xf]
  %v23 = vld [vmem:[%s1 + $0xc] sm:$0xf]
  %v24 = vld [vmem:[%s1 + $0x10] sm:$0xf]
  %v25 = vld [vmem:[%s1 + $0x14] sm:$0xf]
  %v26 = vld [vmem:[%s1 + $0x18] sm:$0xf]
  %v27 = vld [vmem:[%s1 + $0x1c] sm:$0xf]
  %v28 = vld [vmem:[%s1 + $0x20] sm:$0xf]
  %v29 = vld [vmem:[%s1 + $0x24] sm:$0xf]
  %v30 = vld [vmem:[%s1 + $0x28] sm:$0xf]
  %v31 = vld [vmem:[%s1 + $0x2c] sm:$0xf]
  %v32 = vld [vmem:[%s1 + $0x30] sm:$0xf]
  %v33 = vld [vmem:[%s1 + $0x34] sm:$0xf]
  %v34 = vld [vmem:[%s1 + $0x38] sm:$0xf]
  %v35 = vld [vmem:[%s1 + $0x3c] sm:$0xf]
  %v36 = vld [vmem:[%s1 + $0x40] sm:$0xf]
  %v37 = vld [vmem:[%s1 + $0x44] sm:$0xf]
  %v38 = vld [vmem:[%s1 + $0x48] sm:$0xf]
  %v39 = vld [vmem:[%s1 + $0x4c] sm:$0xf]
  %v40 = vld [vmem:[%s1 + $0x50] sm:$0xf]
  %v41 = vld [vmem:[%s1 + $0x54] sm:$0xf]
  %v42 = vld [vmem:[%s1 + $0x58] sm:$0xf]
  %v43 = vld [vmem:[%s1 + $0x5c] sm:$0xf]
  %v44 = vld [vmem:[%s1 + $0x60] sm:$0xf]
  %v45 = vld [vmem:[%s1 + $0x64] sm:$0xf]
  %v46 = vld [vmem:[%s1 + $0x68] sm:$0xf]
  %v47 = vld [vmem:[%s1 + $0x6c] sm:$0xf]
  %v48 = vld [vmem:[%s1 + $0x70] sm:$0xf]
  %v49 = vld [vmem:[%s1 + $0x74] sm:$0xf]
  %v50 = vld [vmem:[%s1 + $0x78] sm:$0xf]
  %v51 = vld [vmem:[%s1 + $0x7c] sm:$0xf]
  %v52 = vld [vmem:[%s1 + $0x80] sm:$0xf]
  %v53 = vld [vmem:[%s1 + $0x84] sm:$0xf]
  %v54 = vld [vmem:[%s1 + $0x88] sm:$0xf]
  %v55 = vld [vmem:[%s1 + $0x8c] sm:$0xf]
  %v56 = vld [vmem:[%s2] sm:$0x1]
  %v58 = vperm.slane %v56, 0
  %v62 = vunpack.c.l.b16 %v18
  %v63 = vunpack.c.h.b16 %v18
  %v64 = vunpack.c.l.b16 %v19
  %v65 = vpack.c.b16 %v62, %v62
  %v66 = vpack.c.b16 %v63, %v63
  %v67 = vpack.c.b16 %v64, %v64
  %v106 = vunpack.c.l.b16 %v20
  %v107 = vunpack.c.l.b16 %v21
  %v108 = vunpack.c.l.b16 %v22
  %v109 = vunpack.c.l.b16 %v23
  %v110 = vunpack.c.l.b16 %v24
  %v111 = vunpack.c.l.b16 %v25
  %v112 = vunpack.c.l.b16 %v26
  %v113 = vunpack.c.l.b16 %v27
  %v114 = vunpack.c.l.b16 %v28
  %v115 = vunpack.c.l.b16 %v29
  %v116 = vunpack.c.l.b16 %v30
  %v117 = vunpack.c.l.b16 %v31
  %v118 = vunpack.c.l.b16 %v32
  %v119 = vunpack.c.l.b16 %v33
  %v120 = vunpack.c.l.b16 %v34
  %v121 = vunpack.c.l.b16 %v35
  %v122 = vunpack.c.l.b16 %v36
  %v123 = vunpack.c.l.b16 %v37
  %v124 = vunpack.c.l.b16 %v38
  %v125 = vunpack.c.l.b16 %v39
  %v126 = vunpack.c.l.b16 %v40
  %v127 = vunpack.c.l.b16 %v41
  %v128 = vunpack.c.l.b16 %v42
  %v129 = vunpack.c.l.b16 %v43
  %v130 = vunpack.c.l.b16 %v44
  %v131 = vunpack.c.l.b16 %v45
  %v132 = vunpack.c.l.b16 %v46
  %v133 = vunpack.c.l.b16 %v47
  %v134 = vunpack.c.l.b16 %v48
  %v135 = vunpack.c.l.b16 %v49
  %v136 = vunpack.c.l.b16 %v50
  %v137 = vunpack.c.l.b16 %v51
  %v138 = vunpack.c.l.b16 %v52
  %v139 = vunpack.c.l.b16 %v53
  %v140 = vunpack.c.l.b16 %v54
  %v141 = vunpack.c.l.b16 %v55
  %v142 = vpack.c.b16 %v107, %v106
  %v143 = vpack.c.b16 %v109, %v108
  %v144 = vpack.c.b16 %v111, %v110
  %v145 = vpack.c.b16 %v113, %v112
  %v146 = vpack.c.b16 %v115, %v114
  %v147 = vpack.c.b16 %v117, %v116
  %v148 = vpack.c.b16 %v119, %v118
  %v149 = vpack.c.b16 %v121, %v120
  %v150 = vpack.c.b16 %v123, %v122
  %v151 = vpack.c.b16 %v125, %v124
  %v152 = vpack.c.b16 %v127, %v126
  %v153 = vpack.c.b16 %v129, %v128
  %v154 = vpack.c.b16 %v131, %v130
  %v155 = vpack.c.b16 %v133, %v132
  %v156 = vpack.c.b16 %v135, %v134
  %v157 = vpack.c.b16 %v137, %v136
  %v158 = vpack.c.b16 %v139, %v138
  %v159 = vpack.c.b16 %v141, %v140
  %vm178 = vcmask 261120
  %v180 = vsel %vm178, %v67, 0
  %182 = vmatpush.bf16.msra.mxu0 %v149
  %183 = vmatpush.bf16.msra.mxu0 %v148
  %184 = vmatpush.bf16.msra.mxu0 %v147
  %185 = vmatpush.bf16.msra.mxu0 %v146
  %186 = vmatpush.bf16.msra.mxu0 %v145
  %187 = vmatpush.bf16.msra.mxu0 %v144
  %188 = vmatpush.bf16.msra.mxu0 %v143
  %189 = vmatpush.bf16.msra.mxu0 %v142
  %190 = vmatmul.bf16.gmra.mxu0 %v65
  %v191 = vpop.f32.mrf.mxu0
  %v192 = vadd.f32 %v58, %v191
  %v193 = vpop.f32.mrf.mxu0
  %194 = vdwg.mxu0
  %195 = vmatpush.bf16.msra.mxu0 %v157
  %196 = vmatpush.bf16.msra.mxu0 %v156
  %197 = vmatpush.bf16.msra.mxu0 %v155
  %198 = vmatpush.bf16.msra.mxu0 %v154
  %199 = vmatpush.bf16.msra.mxu0 %v153
  %200 = vmatpush.bf16.msra.mxu0 %v152
  %201 = vmatpush.bf16.msra.mxu0 %v151
  %202 = vmatpush.bf16.msra.mxu0 %v150
  %203 = vmatmul.bf16.gmra.mxu0 %v66
  %v204 = vpop.f32.mrf.mxu0
  %v205 = vadd.f32 %v192, %v204
  %v206 = vpop.f32.mrf.mxu0
  %207 = vdwg.mxu0
  %208 = vmatpush.bf16.msra.mxu0 0
  %209 = vmatpush.bf16.msra.mxu0 0
  %210 = vmatpush.bf16.msra.mxu0 0
  %211 = vmatpush.bf16.msra.mxu0 0
  %212 = vmatpush.bf16.msra.mxu0 0
  %213 = vmatpush.bf16.msra.mxu0 0
  %214 = vmatpush.bf16.msra.mxu0 %v159
  %215 = vmatpush.bf16.msra.mxu0 %v158
  %216 = vmatmul.bf16.gmra.mxu0 %v180
  %v217 = vpop.f32.mrf.mxu0
  %v218 = vadd.f32 %v205, %v217
  %v219 = vpop.f32.mrf.mxu0
  %220 = vdwg.mxu0
  %v221 = vld [vmem:[%s3] sm:$0xff]
  %v222 = vadd.f32 %v218, %v221
  %v223 = vmax.f32 %v222, 0.0
  %224 = vst.msk [vmem:[%s4] sm:$0xff] %vm178, %v223
  // Predicated region
  $region18: #{resnet_forward_pallas.32} parent=0 // pred_check
    _
  $region19: #{resnet_forward_pallas.32} parent=0 // pred_check_branch
    %226 = sbr.rel (0) target = $region21
  $region20: #{resnet_forward_pallas.32} parent=0 // pred_region
    _
  $region21: #{resnet_forward_pallas.32} parent=0 // pred_fallthru
    _
  // Predicated region
  $region22: #{resnet_forward_pallas.32} parent=0 // pred_check
    _
  $region23: #{resnet_forward_pallas.32} parent=0 // pred_check_branch
    %228 = sbr.rel (0) target = $region25
  $region24: #{resnet_forward_pallas.32} parent=0 // pred_region
    _
  $region25: #{resnet_forward_pallas.32} parent=0 // pred_fallthru
    _

// kernel: resnet_forward_pallas.33
$region0: #{resnet_forward_pallas.33}
  #allocation0 [shape = 'u32[]', space=smem, size = 0x4, offset = 0x4, fixed_abs, tag = 'smem constant byte address 0x4 - core index']
  #allocation1 [shape = 'u32[72,128]{1,0:T(1,128)}', space=vmem, size = 0x9000, scoped, tag = 'internal scratch']
  %s0 = inlined_call_operand.vmem [shape: bf16[8,288], index: 0, kind: input, shape index: {}]
  %s1 = inlined_call_operand.vmem [shape: bf16[288,32], index: 1, kind: input, shape index: {}]
  %s2 = inlined_call_operand.vmem [shape: f32[1,32], index: 2, kind: input, shape index: {}]
  %s3 = inlined_call_operand.vmem [shape: f32[8,32], index: 3, kind: output, shape index: {}]
  %s4 = sld [smem:[#allocation0]]
  $region22: #{resnet_forward_pallas.33} parent=0
    _
  %s6 = ssub.s32 1, %s4
  %s7 = scalar_select 0, %s6, %s4
  // Predicated region
  $region2: #{resnet_forward_pallas.33} parent=0 // pred_check
    _
  $region3: #{resnet_forward_pallas.33} parent=0 // pred_check_branch
    %9 = sbr.rel (0) target = $region5
  $region4: #{resnet_forward_pallas.33} parent=0 // pred_region
    _
  $region5: #{resnet_forward_pallas.33} parent=0 // pred_fallthru
    _
  // Predicated region
  $region6: #{resnet_forward_pallas.33} parent=0 // pred_check
    _
  $region7: #{resnet_forward_pallas.33} parent=0 // pred_check_branch
    %11 = sbr.rel (0) target = $region9
  $region8: #{resnet_forward_pallas.33} parent=0 // pred_region
    _
  $region9: #{resnet_forward_pallas.33} parent=0 // pred_fallthru
    _
  // Predicated region
  $region10: #{resnet_forward_pallas.33} parent=0 // pred_check
    _
  $region11: #{resnet_forward_pallas.33} parent=0 // pred_check_branch
    %13 = sbr.rel (0) target = $region13
  $region12: #{resnet_forward_pallas.33} parent=0 // pred_region
    _
  $region13: #{resnet_forward_pallas.33} parent=0 // pred_fallthru
    _
  %v15 = vld [vmem:[%s0] sm:$0xff]
  %v16 = vld [vmem:[%s0 + $0x8] sm:$0xf]
  %v17 = vld [vmem:[%s1] sm:$0xf]
  %v18 = vld [vmem:[%s1 + $0x4] sm:$0xf]
  %v19 = vld [vmem:[%s1 + $0x8] sm:$0xf]
  %v20 = vld [vmem:[%s1 + $0xc] sm:$0xf]
  %v21 = vld [vmem:[%s1 + $0x10] sm:$0xf]
  %v22 = vld [vmem:[%s1 + $0x14] sm:$0xf]
  %v23 = vld [vmem:[%s1 + $0x18] sm:$0xf]
  %v24 = vld [vmem:[%s1 + $0x1c] sm:$0xf]
  %v25 = vld [vmem:[%s1 + $0x20] sm:$0xf]
  %v26 = vld [vmem:[%s1 + $0x24] sm:$0xf]
  %v27 = vld [vmem:[%s1 + $0x28] sm:$0xf]
  %v28 = vld [vmem:[%s1 + $0x2c] sm:$0xf]
  %v29 = vld [vmem:[%s1 + $0x30] sm:$0xf]
  %v30 = vld [vmem:[%s1 + $0x34] sm:$0xf]
  %v31 = vld [vmem:[%s1 + $0x38] sm:$0xf]
  %v32 = vld [vmem:[%s1 + $0x3c] sm:$0xf]
  %v33 = vld [vmem:[%s1 + $0x40] sm:$0xf]
  %v34 = vld [vmem:[%s1 + $0x44] sm:$0xf]
  %v35 = vld [vmem:[%s1 + $0x48] sm:$0xf]
  %v36 = vld [vmem:[%s1 + $0x4c] sm:$0xf]
  %v37 = vld [vmem:[%s1 + $0x50] sm:$0xf]
  %v38 = vld [vmem:[%s1 + $0x54] sm:$0xf]
  %v39 = vld [vmem:[%s1 + $0x58] sm:$0xf]
  %v40 = vld [vmem:[%s1 + $0x5c] sm:$0xf]
  %v41 = vld [vmem:[%s1 + $0x60] sm:$0xf]
  %v42 = vld [vmem:[%s1 + $0x64] sm:$0xf]
  %v43 = vld [vmem:[%s1 + $0x68] sm:$0xf]
  %v44 = vld [vmem:[%s1 + $0x6c] sm:$0xf]
  %v45 = vld [vmem:[%s1 + $0x70] sm:$0xf]
  %v46 = vld [vmem:[%s1 + $0x74] sm:$0xf]
  %v47 = vld [vmem:[%s1 + $0x78] sm:$0xf]
  %v48 = vld [vmem:[%s1 + $0x7c] sm:$0xf]
  %v49 = vld [vmem:[%s1 + $0x80] sm:$0xf]
  %v50 = vld [vmem:[%s1 + $0x84] sm:$0xf]
  %v51 = vld [vmem:[%s1 + $0x88] sm:$0xf]
  %v52 = vld [vmem:[%s1 + $0x8c] sm:$0xf]
  %v53 = vld [vmem:[%s2] sm:$0x1]
  %v55 = vperm.slane %v53, 0
  %v59 = vunpack.c.l.b16 %v15
  %v60 = vunpack.c.h.b16 %v15
  %v61 = vunpack.c.l.b16 %v16
  %v62 = vpack.c.b16 %v59, %v59
  %v63 = vpack.c.b16 %v60, %v60
  %v64 = vpack.c.b16 %v61, %v61
  %v103 = vunpack.c.l.b16 %v17
  %v104 = vunpack.c.l.b16 %v18
  %v105 = vunpack.c.l.b16 %v19
  %v106 = vunpack.c.l.b16 %v20
  %v107 = vunpack.c.l.b16 %v21
  %v108 = vunpack.c.l.b16 %v22
  %v109 = vunpack.c.l.b16 %v23
  %v110 = vunpack.c.l.b16 %v24
  %v111 = vunpack.c.l.b16 %v25
  %v112 = vunpack.c.l.b16 %v26
  %v113 = vunpack.c.l.b16 %v27
  %v114 = vunpack.c.l.b16 %v28
  %v115 = vunpack.c.l.b16 %v29
  %v116 = vunpack.c.l.b16 %v30
  %v117 = vunpack.c.l.b16 %v31
  %v118 = vunpack.c.l.b16 %v32
  %v119 = vunpack.c.l.b16 %v33
  %v120 = vunpack.c.l.b16 %v34
  %v121 = vunpack.c.l.b16 %v35
  %v122 = vunpack.c.l.b16 %v36
  %v123 = vunpack.c.l.b16 %v37
  %v124 = vunpack.c.l.b16 %v38
  %v125 = vunpack.c.l.b16 %v39
  %v126 = vunpack.c.l.b16 %v40
  %v127 = vunpack.c.l.b16 %v41
  %v128 = vunpack.c.l.b16 %v42
  %v129 = vunpack.c.l.b16 %v43
  %v130 = vunpack.c.l.b16 %v44
  %v131 = vunpack.c.l.b16 %v45
  %v132 = vunpack.c.l.b16 %v46
  %v133 = vunpack.c.l.b16 %v47
  %v134 = vunpack.c.l.b16 %v48
  %v135 = vunpack.c.l.b16 %v49
  %v136 = vunpack.c.l.b16 %v50
  %v137 = vunpack.c.l.b16 %v51
  %v138 = vunpack.c.l.b16 %v52
  %v139 = vpack.c.b16 %v104, %v103
  %v140 = vpack.c.b16 %v106, %v105
  %v141 = vpack.c.b16 %v108, %v107
  %v142 = vpack.c.b16 %v110, %v109
  %v143 = vpack.c.b16 %v112, %v111
  %v144 = vpack.c.b16 %v114, %v113
  %v145 = vpack.c.b16 %v116, %v115
  %v146 = vpack.c.b16 %v118, %v117
  %v147 = vpack.c.b16 %v120, %v119
  %v148 = vpack.c.b16 %v122, %v121
  %v149 = vpack.c.b16 %v124, %v123
  %v150 = vpack.c.b16 %v126, %v125
  %v151 = vpack.c.b16 %v128, %v127
  %v152 = vpack.c.b16 %v130, %v129
  %v153 = vpack.c.b16 %v132, %v131
  %v154 = vpack.c.b16 %v134, %v133
  %v155 = vpack.c.b16 %v136, %v135
  %v156 = vpack.c.b16 %v138, %v137
  %vm175 = vcmask 261120
  %v177 = vsel %vm175, %v64, 0
  %179 = vmatpush.bf16.msra.mxu0 %v146
  %180 = vmatpush.bf16.msra.mxu0 %v145
  %181 = vmatpush.bf16.msra.mxu0 %v144
  %182 = vmatpush.bf16.msra.mxu0 %v143
  %183 = vmatpush.bf16.msra.mxu0 %v142
  %184 = vmatpush.bf16.msra.mxu0 %v141
  %185 = vmatpush.bf16.msra.mxu0 %v140
  %186 = vmatpush.bf16.msra.mxu0 %v139
  %187 = vmatmul.bf16.gmra.mxu0 %v62
  %v188 = vpop.f32.mrf.mxu0
  %v189 = vadd.f32 %v55, %v188
  %v190 = vpop.f32.mrf.mxu0
  %191 = vdwg.mxu0
  %192 = vmatpush.bf16.msra.mxu0 %v154
  %193 = vmatpush.bf16.msra.mxu0 %v153
  %194 = vmatpush.bf16.msra.mxu0 %v152
  %195 = vmatpush.bf16.msra.mxu0 %v151
  %196 = vmatpush.bf16.msra.mxu0 %v150
  %197 = vmatpush.bf16.msra.mxu0 %v149
  %198 = vmatpush.bf16.msra.mxu0 %v148
  %199 = vmatpush.bf16.msra.mxu0 %v147
  %200 = vmatmul.bf16.gmra.mxu0 %v63
  %v201 = vpop.f32.mrf.mxu0
  %v202 = vadd.f32 %v189, %v201
  %v203 = vpop.f32.mrf.mxu0
  %204 = vdwg.mxu0
  %205 = vmatpush.bf16.msra.mxu0 0
  %206 = vmatpush.bf16.msra.mxu0 0
  %207 = vmatpush.bf16.msra.mxu0 0
  %208 = vmatpush.bf16.msra.mxu0 0
  %209 = vmatpush.bf16.msra.mxu0 0
  %210 = vmatpush.bf16.msra.mxu0 0
  %211 = vmatpush.bf16.msra.mxu0 %v156
  %212 = vmatpush.bf16.msra.mxu0 %v155
  %213 = vmatmul.bf16.gmra.mxu0 %v177
  %v214 = vpop.f32.mrf.mxu0
  %v215 = vadd.f32 %v202, %v214
  %v216 = vpop.f32.mrf.mxu0
  %217 = vdwg.mxu0
  %v218 = vmax.f32 %v215, 0.0
  %219 = vst.msk [vmem:[%s3] sm:$0xff] %vm175, %v218
  // Predicated region
  $region14: #{resnet_forward_pallas.33} parent=0 // pred_check
    _
  $region15: #{resnet_forward_pallas.33} parent=0 // pred_check_branch
    %221 = sbr.rel (0) target = $region17
  $region16: #{resnet_forward_pallas.33} parent=0 // pred_region
    _
  $region17: #{resnet_forward_pallas.33} parent=0 // pred_fallthru
    _
  // Predicated region
  $region18: #{resnet_forward_pallas.33} parent=0 // pred_check
    _
  $region19: #{resnet_forward_pallas.33} parent=0 // pred_check_branch
    %223 = sbr.rel (0) target = $region21
  $region20: #{resnet_forward_pallas.33} parent=0 // pred_region
    _
  $region21: #{resnet_forward_pallas.33} parent=0 // pred_fallthru
    _

// kernel: resnet_forward_pallas.35
$region0: #{resnet_forward_pallas.35}
  #allocation0 [shape = 'u32[]', space=smem, size = 0x4, offset = 0x4, fixed_abs, tag = 'smem constant byte address 0x4 - core index']
  #allocation1 [shape = 'u32[72,128]{1,0:T(1,128)}', space=vmem, size = 0x9000, scoped, tag = 'internal scratch']
  %s0 = inlined_call_operand.vmem [shape: bf16[8,288], index: 0, kind: input, shape index: {}]
  %s1 = inlined_call_operand.vmem [shape: bf16[288,64], index: 1, kind: input, shape index: {}]
  %s2 = inlined_call_operand.vmem [shape: f32[1,64], index: 2, kind: input, shape index: {}]
  %s3 = inlined_call_operand.vmem [shape: f32[8,64], index: 3, kind: output, shape index: {}]
  %s4 = sld [smem:[#allocation0]]
  $region22: #{resnet_forward_pallas.35} parent=0
    _
  %s6 = ssub.s32 1, %s4
  %s7 = scalar_select 0, %s6, %s4
  // Predicated region
  $region2: #{resnet_forward_pallas.35} parent=0 // pred_check
    _
  $region3: #{resnet_forward_pallas.35} parent=0 // pred_check_branch
    %9 = sbr.rel (0) target = $region5
  $region4: #{resnet_forward_pallas.35} parent=0 // pred_region
    _
  $region5: #{resnet_forward_pallas.35} parent=0 // pred_fallthru
    _
  // Predicated region
  $region6: #{resnet_forward_pallas.35} parent=0 // pred_check
    _
  $region7: #{resnet_forward_pallas.35} parent=0 // pred_check_branch
    %11 = sbr.rel (0) target = $region9
  $region8: #{resnet_forward_pallas.35} parent=0 // pred_region
    _
  $region9: #{resnet_forward_pallas.35} parent=0 // pred_fallthru
    _
  // Predicated region
  $region10: #{resnet_forward_pallas.35} parent=0 // pred_check
    _
  $region11: #{resnet_forward_pallas.35} parent=0 // pred_check_branch
    %13 = sbr.rel (0) target = $region13
  $region12: #{resnet_forward_pallas.35} parent=0 // pred_region
    _
  $region13: #{resnet_forward_pallas.35} parent=0 // pred_fallthru
    _
  %v15 = vld [vmem:[%s0] sm:$0xff]
  %v16 = vld [vmem:[%s0 + $0x8] sm:$0xf]
  %v17 = vld [vmem:[%s1] sm:$0xf]
  %v18 = vld [vmem:[%s1 + $0x4] sm:$0xf]
  %v19 = vld [vmem:[%s1 + $0x8] sm:$0xf]
  %v20 = vld [vmem:[%s1 + $0xc] sm:$0xf]
  %v21 = vld [vmem:[%s1 + $0x10] sm:$0xf]
  %v22 = vld [vmem:[%s1 + $0x14] sm:$0xf]
  %v23 = vld [vmem:[%s1 + $0x18] sm:$0xf]
  %v24 = vld [vmem:[%s1 + $0x1c] sm:$0xf]
  %v25 = vld [vmem:[%s1 + $0x20] sm:$0xf]
  %v26 = vld [vmem:[%s1 + $0x24] sm:$0xf]
  %v27 = vld [vmem:[%s1 + $0x28] sm:$0xf]
  %v28 = vld [vmem:[%s1 + $0x2c] sm:$0xf]
  %v29 = vld [vmem:[%s1 + $0x30] sm:$0xf]
  %v30 = vld [vmem:[%s1 + $0x34] sm:$0xf]
  %v31 = vld [vmem:[%s1 + $0x38] sm:$0xf]
  %v32 = vld [vmem:[%s1 + $0x3c] sm:$0xf]
  %v33 = vld [vmem:[%s1 + $0x40] sm:$0xf]
  %v34 = vld [vmem:[%s1 + $0x44] sm:$0xf]
  %v35 = vld [vmem:[%s1 + $0x48] sm:$0xf]
  %v36 = vld [vmem:[%s1 + $0x4c] sm:$0xf]
  %v37 = vld [vmem:[%s1 + $0x50] sm:$0xf]
  %v38 = vld [vmem:[%s1 + $0x54] sm:$0xf]
  %v39 = vld [vmem:[%s1 + $0x58] sm:$0xf]
  %v40 = vld [vmem:[%s1 + $0x5c] sm:$0xf]
  %v41 = vld [vmem:[%s1 + $0x60] sm:$0xf]
  %v42 = vld [vmem:[%s1 + $0x64] sm:$0xf]
  %v43 = vld [vmem:[%s1 + $0x68] sm:$0xf]
  %v44 = vld [vmem:[%s1 + $0x6c] sm:$0xf]
  %v45 = vld [vmem:[%s1 + $0x70] sm:$0xf]
  %v46 = vld [vmem:[%s1 + $0x74] sm:$0xf]
  %v47 = vld [vmem:[%s1 + $0x78] sm:$0xf]
  %v48 = vld [vmem:[%s1 + $0x7c] sm:$0xf]
  %v49 = vld [vmem:[%s1 + $0x80] sm:$0xf]
  %v50 = vld [vmem:[%s1 + $0x84] sm:$0xf]
  %v51 = vld [vmem:[%s1 + $0x88] sm:$0xf]
  %v52 = vld [vmem:[%s1 + $0x8c] sm:$0xf]
  %v53 = vld [vmem:[%s2] sm:$0x1]
  %v55 = vperm.slane %v53, 0
  %v59 = vunpack.c.l.b16 %v15
  %v60 = vunpack.c.h.b16 %v15
  %v61 = vunpack.c.l.b16 %v16
  %v62 = vpack.c.b16 %v59, %v59
  %v63 = vpack.c.b16 %v60, %v60
  %v64 = vpack.c.b16 %v61, %v61
  %v103 = vunpack.c.l.b16 %v17
  %v104 = vunpack.c.l.b16 %v18
  %v105 = vunpack.c.l.b16 %v19
  %v106 = vunpack.c.l.b16 %v20
  %v107 = vunpack.c.l.b16 %v21
  %v108 = vunpack.c.l.b16 %v22
  %v109 = vunpack.c.l.b16 %v23
  %v110 = vunpack.c.l.b16 %v24
  %v111 = vunpack.c.l.b16 %v25
  %v112 = vunpack.c.l.b16 %v26
  %v113 = vunpack.c.l.b16 %v27
  %v114 = vunpack.c.l.b16 %v28
  %v115 = vunpack.c.l.b16 %v29
  %v116 = vunpack.c.l.b16 %v30
  %v117 = vunpack.c.l.b16 %v31
  %v118 = vunpack.c.l.b16 %v32
  %v119 = vunpack.c.l.b16 %v33
  %v120 = vunpack.c.l.b16 %v34
  %v121 = vunpack.c.l.b16 %v35
  %v122 = vunpack.c.l.b16 %v36
  %v123 = vunpack.c.l.b16 %v37
  %v124 = vunpack.c.l.b16 %v38
  %v125 = vunpack.c.l.b16 %v39
  %v126 = vunpack.c.l.b16 %v40
  %v127 = vunpack.c.l.b16 %v41
  %v128 = vunpack.c.l.b16 %v42
  %v129 = vunpack.c.l.b16 %v43
  %v130 = vunpack.c.l.b16 %v44
  %v131 = vunpack.c.l.b16 %v45
  %v132 = vunpack.c.l.b16 %v46
  %v133 = vunpack.c.l.b16 %v47
  %v134 = vunpack.c.l.b16 %v48
  %v135 = vunpack.c.l.b16 %v49
  %v136 = vunpack.c.l.b16 %v50
  %v137 = vunpack.c.l.b16 %v51
  %v138 = vunpack.c.l.b16 %v52
  %v139 = vpack.c.b16 %v104, %v103
  %v140 = vpack.c.b16 %v106, %v105
  %v141 = vpack.c.b16 %v108, %v107
  %v142 = vpack.c.b16 %v110, %v109
  %v143 = vpack.c.b16 %v112, %v111
  %v144 = vpack.c.b16 %v114, %v113
  %v145 = vpack.c.b16 %v116, %v115
  %v146 = vpack.c.b16 %v118, %v117
  %v147 = vpack.c.b16 %v120, %v119
  %v148 = vpack.c.b16 %v122, %v121
  %v149 = vpack.c.b16 %v124, %v123
  %v150 = vpack.c.b16 %v126, %v125
  %v151 = vpack.c.b16 %v128, %v127
  %v152 = vpack.c.b16 %v130, %v129
  %v153 = vpack.c.b16 %v132, %v131
  %v154 = vpack.c.b16 %v134, %v133
  %v155 = vpack.c.b16 %v136, %v135
  %v156 = vpack.c.b16 %v138, %v137
  %vm175 = vcmask 261120
  %v177 = vsel %vm175, %v64, 0
  %179 = vmatpush.bf16.msra.mxu0 %v146
  %180 = vmatpush.bf16.msra.mxu0 %v145
  %181 = vmatpush.bf16.msra.mxu0 %v144
  %182 = vmatpush.bf16.msra.mxu0 %v143
  %183 = vmatpush.bf16.msra.mxu0 %v142
  %184 = vmatpush.bf16.msra.mxu0 %v141
  %185 = vmatpush.bf16.msra.mxu0 %v140
  %186 = vmatpush.bf16.msra.mxu0 %v139
  %187 = vmatmul.bf16.gmra.mxu0 %v62
  %v188 = vpop.f32.mrf.mxu0
  %v189 = vadd.f32 %v55, %v188
  %v190 = vpop.f32.mrf.mxu0
  %191 = vdwg.mxu0
  %192 = vmatpush.bf16.msra.mxu0 %v154
  %193 = vmatpush.bf16.msra.mxu0 %v153
  %194 = vmatpush.bf16.msra.mxu0 %v152
  %195 = vmatpush.bf16.msra.mxu0 %v151
  %196 = vmatpush.bf16.msra.mxu0 %v150
  %197 = vmatpush.bf16.msra.mxu0 %v149
  %198 = vmatpush.bf16.msra.mxu0 %v148
  %199 = vmatpush.bf16.msra.mxu0 %v147
  %200 = vmatmul.bf16.gmra.mxu0 %v63
  %v201 = vpop.f32.mrf.mxu0
  %v202 = vadd.f32 %v189, %v201
  %v203 = vpop.f32.mrf.mxu0
  %204 = vdwg.mxu0
  %205 = vmatpush.bf16.msra.mxu0 0
  %206 = vmatpush.bf16.msra.mxu0 0
  %207 = vmatpush.bf16.msra.mxu0 0
  %208 = vmatpush.bf16.msra.mxu0 0
  %209 = vmatpush.bf16.msra.mxu0 0
  %210 = vmatpush.bf16.msra.mxu0 0
  %211 = vmatpush.bf16.msra.mxu0 %v156
  %212 = vmatpush.bf16.msra.mxu0 %v155
  %213 = vmatmul.bf16.gmra.mxu0 %v177
  %v214 = vpop.f32.mrf.mxu0
  %v215 = vadd.f32 %v202, %v214
  %v216 = vpop.f32.mrf.mxu0
  %217 = vdwg.mxu0
  %v218 = vmax.f32 %v215, 0.0
  %vm219 = vcmask 523264
  %220 = vst.msk [vmem:[%s3] sm:$0xff] %vm219, %v218
  // Predicated region
  $region14: #{resnet_forward_pallas.35} parent=0 // pred_check
    _
  $region15: #{resnet_forward_pallas.35} parent=0 // pred_check_branch
    %222 = sbr.rel (0) target = $region17
  $region16: #{resnet_forward_pallas.35} parent=0 // pred_region
    _
  $region17: #{resnet_forward_pallas.35} parent=0 // pred_fallthru
    _
  // Predicated region
  $region18: #{resnet_forward_pallas.35} parent=0 // pred_check
    _
  $region19: #{resnet_forward_pallas.35} parent=0 // pred_check_branch
    %224 = sbr.rel (0) target = $region21
  $region20: #{resnet_forward_pallas.35} parent=0 // pred_region
    _
  $region21: #{resnet_forward_pallas.35} parent=0 // pred_fallthru
    _

// kernel: resnet_forward_pallas.36
$region0: #{resnet_forward_pallas.36}
  #allocation0 [shape = 'u32[]', space=smem, size = 0x4, offset = 0x4, fixed_abs, tag = 'smem constant byte address 0x4 - core index']
  #allocation1 [shape = 'u32[72,128]{1,0:T(1,128)}', space=vmem, size = 0x9000, scoped, tag = 'internal scratch']
  %s0 = inlined_call_operand.vmem [shape: bf16[8,32], index: 0, kind: input, shape index: {}]
  %s1 = inlined_call_operand.vmem [shape: bf16[32,64], index: 1, kind: input, shape index: {}]
  %s2 = inlined_call_operand.vmem [shape: f32[1,64], index: 2, kind: input, shape index: {}]
  %s3 = inlined_call_operand.vmem [shape: f32[8,64], index: 3, kind: output, shape index: {}]
  %s4 = sld [smem:[#allocation0]]
  $region22: #{resnet_forward_pallas.36} parent=0
    _
  %s6 = ssub.s32 1, %s4
  %s7 = scalar_select 0, %s6, %s4
  // Predicated region
  $region2: #{resnet_forward_pallas.36} parent=0 // pred_check
    _
  $region3: #{resnet_forward_pallas.36} parent=0 // pred_check_branch
    %9 = sbr.rel (0) target = $region5
  $region4: #{resnet_forward_pallas.36} parent=0 // pred_region
    _
  $region5: #{resnet_forward_pallas.36} parent=0 // pred_fallthru
    _
  // Predicated region
  $region6: #{resnet_forward_pallas.36} parent=0 // pred_check
    _
  $region7: #{resnet_forward_pallas.36} parent=0 // pred_check_branch
    %11 = sbr.rel (0) target = $region9
  $region8: #{resnet_forward_pallas.36} parent=0 // pred_region
    _
  $region9: #{resnet_forward_pallas.36} parent=0 // pred_fallthru
    _
  // Predicated region
  $region10: #{resnet_forward_pallas.36} parent=0 // pred_check
    _
  $region11: #{resnet_forward_pallas.36} parent=0 // pred_check_branch
    %13 = sbr.rel (0) target = $region13
  $region12: #{resnet_forward_pallas.36} parent=0 // pred_region
    _
  $region13: #{resnet_forward_pallas.36} parent=0 // pred_fallthru
    _
  %v15 = vld [vmem:[%s0] sm:$0xf]
  %v16 = vld [vmem:[%s1] sm:$0xf]
  %v17 = vld [vmem:[%s1 + $0x4] sm:$0xf]
  %v18 = vld [vmem:[%s1 + $0x8] sm:$0xf]
  %v19 = vld [vmem:[%s1 + $0xc] sm:$0xf]
  %v20 = vld [vmem:[%s2] sm:$0x1]
  %v22 = vperm.slane %v20, 0
  %v28 = vunpack.c.l.b16 %v16
  %v29 = vunpack.c.l.b16 %v17
  %v30 = vunpack.c.l.b16 %v18
  %v31 = vunpack.c.l.b16 %v19
  %v32 = vpack.c.b16 %v29, %v28
  %v33 = vpack.c.b16 %v31, %v30
  %vm36 = vcmask 261120
  %v38 = vsel %vm36, %v15, 0
  %40 = vmatpush.bf16.msra.mxu0 0
  %41 = vmatpush.bf16.msra.mxu0 0
  %42 = vmatpush.bf16.msra.mxu0 0
  %43 = vmatpush.bf16.msra.mxu0 0
  %44 = vmatpush.bf16.msra.mxu0 0
  %45 = vmatpush.bf16.msra.mxu0 0
  %46 = vmatpush.bf16.msra.mxu0 %v33
  %47 = vmatpush.bf16.msra.mxu0 %v32
  %48 = vmatmul.bf16.gmra.mxu0 %v38
  %v49 = vpop.f32.mrf.mxu0
  %v50 = vadd.f32 %v22, %v49
  %v51 = vpop.f32.mrf.mxu0
  %52 = vdwg.mxu0
  %vm53 = vcmask 523264
  %54 = vst.msk [vmem:[%s3] sm:$0xff] %vm53, %v50
  // Predicated region
  $region14: #{resnet_forward_pallas.36} parent=0 // pred_check
    _
  $region15: #{resnet_forward_pallas.36} parent=0 // pred_check_branch
    %56 = sbr.rel (0) target = $region17
  $region16: #{resnet_forward_pallas.36} parent=0 // pred_region
    _
  $region17: #{resnet_forward_pallas.36} parent=0 // pred_fallthru
    _
  // Predicated region
  $region18: #{resnet_forward_pallas.36} parent=0 // pred_check
    _
  $region19: #{resnet_forward_pallas.36} parent=0 // pred_check_branch
    %58 = sbr.rel (0) target = $region21
  $region20: #{resnet_forward_pallas.36} parent=0 // pred_region
    _
  $region21: #{resnet_forward_pallas.36} parent=0 // pred_fallthru
    _

// kernel: resnet_forward_pallas.37
$region0: #{resnet_forward_pallas.37}
  #allocation0 [shape = 'u32[]', space=smem, size = 0x4, offset = 0x4, fixed_abs, tag = 'smem constant byte address 0x4 - core index']
  #allocation1 [shape = 'u32[72,128]{1,0:T(1,128)}', space=vmem, size = 0x9000, scoped, tag = 'internal scratch']
  %s0 = inlined_call_operand.vmem [shape: bf16[8,576], index: 0, kind: input, shape index: {}]
  %s1 = inlined_call_operand.vmem [shape: bf16[576,64], index: 1, kind: input, shape index: {}]
  %s2 = inlined_call_operand.vmem [shape: f32[1,64], index: 2, kind: input, shape index: {}]
  %s3 = inlined_call_operand.vmem [shape: f32[8,64], index: 3, kind: input, shape index: {}]
  %s4 = inlined_call_operand.vmem [shape: f32[8,64], index: 4, kind: output, shape index: {}]
  %s5 = sld [smem:[#allocation0]]
  $region26: #{resnet_forward_pallas.37} parent=0
    _
  %s7 = ssub.s32 1, %s5
  %s8 = scalar_select 0, %s7, %s5
  // Predicated region
  $region2: #{resnet_forward_pallas.37} parent=0 // pred_check
    _
  $region3: #{resnet_forward_pallas.37} parent=0 // pred_check_branch
    %10 = sbr.rel (0) target = $region5
  $region4: #{resnet_forward_pallas.37} parent=0 // pred_region
    _
  $region5: #{resnet_forward_pallas.37} parent=0 // pred_fallthru
    _
  // Predicated region
  $region6: #{resnet_forward_pallas.37} parent=0 // pred_check
    _
  $region7: #{resnet_forward_pallas.37} parent=0 // pred_check_branch
    %12 = sbr.rel (0) target = $region9
  $region8: #{resnet_forward_pallas.37} parent=0 // pred_region
    _
  $region9: #{resnet_forward_pallas.37} parent=0 // pred_fallthru
    _
  // Predicated region
  $region10: #{resnet_forward_pallas.37} parent=0 // pred_check
    _
  $region11: #{resnet_forward_pallas.37} parent=0 // pred_check_branch
    %14 = sbr.rel (0) target = $region13
  $region12: #{resnet_forward_pallas.37} parent=0 // pred_region
    _
  $region13: #{resnet_forward_pallas.37} parent=0 // pred_fallthru
    _
  // Predicated region
  $region14: #{resnet_forward_pallas.37} parent=0 // pred_check
    _
  $region15: #{resnet_forward_pallas.37} parent=0 // pred_check_branch
    %16 = sbr.rel (0) target = $region17
  $region16: #{resnet_forward_pallas.37} parent=0 // pred_region
    _
  $region17: #{resnet_forward_pallas.37} parent=0 // pred_fallthru
    _
  %v18 = vld [vmem:[%s0] sm:$0xff]
  %v19 = vld [vmem:[%s0 + $0x8] sm:$0xff]
  %v20 = vld [vmem:[%s0 + $0x10] sm:$0xf]
  %v21 = vld [vmem:[%s1] sm:$0xf]
  %v22 = vld [vmem:[%s1 + $0x4] sm:$0xf]
  %v23 = vld [vmem:[%s1 + $0x8] sm:$0xf]
  %v24 = vld [vmem:[%s1 + $0xc] sm:$0xf]
  %v25 = vld [vmem:[%s1 + $0x10] sm:$0xf]
  %v26 = vld [vmem:[%s1 + $0x14] sm:$0xf]
  %v27 = vld [vmem:[%s1 + $0x18] sm:$0xf]
  %v28 = vld [vmem:[%s1 + $0x1c] sm:$0xf]
  %v29 = vld [vmem:[%s1 + $0x20] sm:$0xf]
  %v30 = vld [vmem:[%s1 + $0x24] sm:$0xf]
  %v31 = vld [vmem:[%s1 + $0x28] sm:$0xf]
  %v32 = vld [vmem:[%s1 + $0x2c] sm:$0xf]
  %v33 = vld [vmem:[%s1 + $0x30] sm:$0xf]
  %v34 = vld [vmem:[%s1 + $0x34] sm:$0xf]
  %v35 = vld [vmem:[%s1 + $0x38] sm:$0xf]
  %v36 = vld [vmem:[%s1 + $0x3c] sm:$0xf]
  %v37 = vld [vmem:[%s1 + $0x40] sm:$0xf]
  %v38 = vld [vmem:[%s1 + $0x44] sm:$0xf]
  %v39 = vld [vmem:[%s1 + $0x48] sm:$0xf]
  %v40 = vld [vmem:[%s1 + $0x4c] sm:$0xf]
  %v41 = vld [vmem:[%s1 + $0x50] sm:$0xf]
  %v42 = vld [vmem:[%s1 + $0x54] sm:$0xf]
  %v43 = vld [vmem:[%s1 + $0x58] sm:$0xf]
  %v44 = vld [vmem:[%s1 + $0x5c] sm:$0xf]
  %v45 = vld [vmem:[%s1 + $0x60] sm:$0xf]
  %v46 = vld [vmem:[%s1 + $0x64] sm:$0xf]
  %v47 = vld [vmem:[%s1 + $0x68] sm:$0xf]
  %v48 = vld [vmem:[%s1 + $0x6c] sm:$0xf]
  %v49 = vld [vmem:[%s1 + $0x70] sm:$0xf]
  %v50 = vld [vmem:[%s1 + $0x74] sm:$0xf]
  %v51 = vld [vmem:[%s1 + $0x78] sm:$0xf]
  %v52 = vld [vmem:[%s1 + $0x7c] sm:$0xf]
  %v53 = vld [vmem:[%s1 + $0x80] sm:$0xf]
  %v54 = vld [vmem:[%s1 + $0x84] sm:$0xf]
  %v55 = vld [vmem:[%s1 + $0x88] sm:$0xf]
  %v56 = vld [vmem:[%s1 + $0x8c] sm:$0xf]
  %v57 = vld [vmem:[%s1 + $0x90] sm:$0xf]
  %v58 = vld [vmem:[%s1 + $0x94] sm:$0xf]
  %v59 = vld [vmem:[%s1 + $0x98] sm:$0xf]
  %v60 = vld [vmem:[%s1 + $0x9c] sm:$0xf]
  %v61 = vld [vmem:[%s1 + $0xa0] sm:$0xf]
  %v62 = vld [vmem:[%s1 + $0xa4] sm:$0xf]
  %v63 = vld [vmem:[%s1 + $0xa8] sm:$0xf]
  %v64 = vld [vmem:[%s1 + $0xac] sm:$0xf]
  %v65 = vld [vmem:[%s1 + $0xb0] sm:$0xf]
  %v66 = vld [vmem:[%s1 + $0xb4] sm:$0xf]
  %v67 = vld [vmem:[%s1 + $0xb8] sm:$0xf]
  %v68 = vld [vmem:[%s1 + $0xbc] sm:$0xf]
  %v69 = vld [vmem:[%s1 + $0xc0] sm:$0xf]
  %v70 = vld [vmem:[%s1 + $0xc4] sm:$0xf]
  %v71 = vld [vmem:[%s1 + $0xc8] sm:$0xf]
  %v72 = vld [vmem:[%s1 + $0xcc] sm:$0xf]
  %v73 = vld [vmem:[%s1 + $0xd0] sm:$0xf]
  %v74 = vld [vmem:[%s1 + $0xd4] sm:$0xf]
  %v75 = vld [vmem:[%s1 + $0xd8] sm:$0xf]
  %v76 = vld [vmem:[%s1 + $0xdc] sm:$0xf]
  %v77 = vld [vmem:[%s1 + $0xe0] sm:$0xf]
  %v78 = vld [vmem:[%s1 + $0xe4] sm:$0xf]
  %v79 = vld [vmem:[%s1 + $0xe8] sm:$0xf]
  %v80 = vld [vmem:[%s1 + $0xec] sm:$0xf]
  %v81 = vld [vmem:[%s1 + $0xf0] sm:$0xf]
  %v82 = vld [vmem:[%s1 + $0xf4] sm:$0xf]
  %v83 = vld [vmem:[%s1 + $0xf8] sm:$0xf]
  %v84 = vld [vmem:[%s1 + $0xfc] sm:$0xf]
  %v85 = vld [vmem:[%s1 + $0x100] sm:$0xf]
  %v86 = vld [vmem:[%s1 + $0x104] sm:$0xf]
  %v87 = vld [vmem:[%s1 + $0x108] sm:$0xf]
  %v88 = vld [vmem:[%s1 + $0x10c] sm:$0xf]
  %v89 = vld [vmem:[%s1 + $0x110] sm:$0xf]
  %v90 = vld [vmem:[%s1 + $0x114] sm:$0xf]
  %v91 = vld [vmem:[%s1 + $0x118] sm:$0xf]
  %v92 = vld [vmem:[%s1 + $0x11c] sm:$0xf]
  %v93 = vld [vmem:[%s2] sm:$0x1]
  %v95 = vperm.slane %v93, 0
  %v100 = vunpack.c.l.b16 %v18
  %v101 = vunpack.c.h.b16 %v18
  %v102 = vunpack.c.l.b16 %v19
  %v103 = vunpack.c.h.b16 %v19
  %v104 = vunpack.c.l.b16 %v20
  %v105 = vpack.c.b16 %v100, %v100
  %v106 = vpack.c.b16 %v101, %v101
  %v107 = vpack.c.b16 %v102, %v102
  %v108 = vpack.c.b16 %v103, %v103
  %v109 = vpack.c.b16 %v104, %v104
  %v186 = vunpack.c.l.b16 %v21
  %v187 = vunpack.c.l.b16 %v22
  %v188 = vunpack.c.l.b16 %v23
  %v189 = vunpack.c.l.b16 %v24
  %v190 = vunpack.c.l.b16 %v25
  %v191 = vunpack.c.l.b16 %v26
  %v192 = vunpack.c.l.b16 %v27
  %v193 = vunpack.c.l.b16 %v28
  %v194 = vunpack.c.l.b16 %v29
  %v195 = vunpack.c.l.b16 %v30
  %v196 = vunpack.c.l.b16 %v31
  %v197 = vunpack.c.l.b16 %v32
  %v198 = vunpack.c.l.b16 %v33
  %v199 = vunpack.c.l.b16 %v34
  %v200 = vunpack.c.l.b16 %v35
  %v201 = vunpack.c.l.b16 %v36
  %v202 = vunpack.c.l.b16 %v37
  %v203 = vunpack.c.l.b16 %v38
  %v204 = vunpack.c.l.b16 %v39
  %v205 = vunpack.c.l.b16 %v40
  %v206 = vunpack.c.l.b16 %v41
  %v207 = vunpack.c.l.b16 %v42
  %v208 = vunpack.c.l.b16 %v43
  %v209 = vunpack.c.l.b16 %v44
  %v210 = vunpack.c.l.b16 %v45
  %v211 = vunpack.c.l.b16 %v46
  %v212 = vunpack.c.l.b16 %v47
  %v213 = vunpack.c.l.b16 %v48
  %v214 = vunpack.c.l.b16 %v49
  %v215 = vunpack.c.l.b16 %v50
  %v216 = vunpack.c.l.b16 %v51
  %v217 = vunpack.c.l.b16 %v52
  %v218 = vunpack.c.l.b16 %v53
  %v219 = vunpack.c.l.b16 %v54
  %v220 = vunpack.c.l.b16 %v55
  %v221 = vunpack.c.l.b16 %v56
  %v222 = vunpack.c.l.b16 %v57
  %v223 = vunpack.c.l.b16 %v58
  %v224 = vunpack.c.l.b16 %v59
  %v225 = vunpack.c.l.b16 %v60
  %v226 = vunpack.c.l.b16 %v61
  %v227 = vunpack.c.l.b16 %v62
  %v228 = vunpack.c.l.b16 %v63
  %v229 = vunpack.c.l.b16 %v64
  %v230 = vunpack.c.l.b16 %v65
  %v231 = vunpack.c.l.b16 %v66
  %v232 = vunpack.c.l.b16 %v67
  %v233 = vunpack.c.l.b16 %v68
  %v234 = vunpack.c.l.b16 %v69
  %v235 = vunpack.c.l.b16 %v70
  %v236 = vunpack.c.l.b16 %v71
  %v237 = vunpack.c.l.b16 %v72
  %v238 = vunpack.c.l.b16 %v73
  %v239 = vunpack.c.l.b16 %v74
  %v240 = vunpack.c.l.b16 %v75
  %v241 = vunpack.c.l.b16 %v76
  %v242 = vunpack.c.l.b16 %v77
  %v243 = vunpack.c.l.b16 %v78
  %v244 = vunpack.c.l.b16 %v79
  %v245 = vunpack.c.l.b16 %v80
  %v246 = vunpack.c.l.b16 %v81
  %v247 = vunpack.c.l.b16 %v82
  %v248 = vunpack.c.l.b16 %v83
  %v249 = vunpack.c.l.b16 %v84
  %v250 = vunpack.c.l.b16 %v85
  %v251 = vunpack.c.l.b16 %v86
  %v252 = vunpack.c.l.b16 %v87
  %v253 = vunpack.c.l.b16 %v88
  %v254 = vunpack.c.l.b16 %v89
  %v255 = vunpack.c.l.b16 %v90
  %v256 = vunpack.c.l.b16 %v91
  %v257 = vunpack.c.l.b16 %v92
  %v258 = vpack.c.b16 %v187, %v186
  %v259 = vpack.c.b16 %v189, %v188
  %v260 = vpack.c.b16 %v191, %v190
  %v261 = vpack.c.b16 %v193, %v192
  %v262 = vpack.c.b16 %v195, %v194
  %v263 = vpack.c.b16 %v197, %v196
  %v264 = vpack.c.b16 %v199, %v198
  %v265 = vpack.c.b16 %v201, %v200
  %v266 = vpack.c.b16 %v203, %v202
  %v267 = vpack.c.b16 %v205, %v204
  %v268 = vpack.c.b16 %v207, %v206
  %v269 = vpack.c.b16 %v209, %v208
  %v270 = vpack.c.b16 %v211, %v210
  %v271 = vpack.c.b16 %v213, %v212
  %v272 = vpack.c.b16 %v215, %v214
  %v273 = vpack.c.b16 %v217, %v216
  %v274 = vpack.c.b16 %v219, %v218
  %v275 = vpack.c.b16 %v221, %v220
  %v276 = vpack.c.b16 %v223, %v222
  %v277 = vpack.c.b16 %v225, %v224
  %v278 = vpack.c.b16 %v227, %v226
  %v279 = vpack.c.b16 %v229, %v228
  %v280 = vpack.c.b16 %v231, %v230
  %v281 = vpack.c.b16 %v233, %v232
  %v282 = vpack.c.b16 %v235, %v234
  %v283 = vpack.c.b16 %v237, %v236
  %v284 = vpack.c.b16 %v239, %v238
  %v285 = vpack.c.b16 %v241, %v240
  %v286 = vpack.c.b16 %v243, %v242
  %v287 = vpack.c.b16 %v245, %v244
  %v288 = vpack.c.b16 %v247, %v246
  %v289 = vpack.c.b16 %v249, %v248
  %v290 = vpack.c.b16 %v251, %v250
  %v291 = vpack.c.b16 %v253, %v252
  %v292 = vpack.c.b16 %v255, %v254
  %v293 = vpack.c.b16 %v257, %v256
  %vm330 = vcmask 523264
  %v332 = vsel %vm330, %v109, 0
  %334 = vmatpush.bf16.msra.mxu0 %v265
  %335 = vmatpush.bf16.msra.mxu0 %v264
  %336 = vmatpush.bf16.msra.mxu0 %v263
  %337 = vmatpush.bf16.msra.mxu0 %v262
  %338 = vmatpush.bf16.msra.mxu0 %v261
  %339 = vmatpush.bf16.msra.mxu0 %v260
  %340 = vmatpush.bf16.msra.mxu0 %v259
  %341 = vmatpush.bf16.msra.mxu0 %v258
  %342 = vmatmul.bf16.gmra.mxu0 %v105
  %v343 = vpop.f32.mrf.mxu0
  %v344 = vadd.f32 %v95, %v343
  %v345 = vpop.f32.mrf.mxu0
  %346 = vdwg.mxu0
  %347 = vmatpush.bf16.msra.mxu0 %v273
  %348 = vmatpush.bf16.msra.mxu0 %v272
  %349 = vmatpush.bf16.msra.mxu0 %v271
  %350 = vmatpush.bf16.msra.mxu0 %v270
  %351 = vmatpush.bf16.msra.mxu0 %v269
  %352 = vmatpush.bf16.msra.mxu0 %v268
  %353 = vmatpush.bf16.msra.mxu0 %v267
  %354 = vmatpush.bf16.msra.mxu0 %v266
  %355 = vmatmul.bf16.gmra.mxu0 %v106
  %v356 = vpop.f32.mrf.mxu0
  %v357 = vadd.f32 %v344, %v356
  %v358 = vpop.f32.mrf.mxu0
  %359 = vdwg.mxu0
  %360 = vmatpush.bf16.msra.mxu0 %v281
  %361 = vmatpush.bf16.msra.mxu0 %v280
  %362 = vmatpush.bf16.msra.mxu0 %v279
  %363 = vmatpush.bf16.msra.mxu0 %v278
  %364 = vmatpush.bf16.msra.mxu0 %v277
  %365 = vmatpush.bf16.msra.mxu0 %v276
  %366 = vmatpush.bf16.msra.mxu0 %v275
  %367 = vmatpush.bf16.msra.mxu0 %v274
  %368 = vmatmul.bf16.gmra.mxu0 %v107
  %v369 = vpop.f32.mrf.mxu0
  %v370 = vadd.f32 %v357, %v369
  %v371 = vpop.f32.mrf.mxu0
  %372 = vdwg.mxu0
  %373 = vmatpush.bf16.msra.mxu0 %v289
  %374 = vmatpush.bf16.msra.mxu0 %v288
  %375 = vmatpush.bf16.msra.mxu0 %v287
  %376 = vmatpush.bf16.msra.mxu0 %v286
  %377 = vmatpush.bf16.msra.mxu0 %v285
  %378 = vmatpush.bf16.msra.mxu0 %v284
  %379 = vmatpush.bf16.msra.mxu0 %v283
  %380 = vmatpush.bf16.msra.mxu0 %v282
  %381 = vmatmul.bf16.gmra.mxu0 %v108
  %v382 = vpop.f32.mrf.mxu0
  %v383 = vadd.f32 %v370, %v382
  %v384 = vpop.f32.mrf.mxu0
  %385 = vdwg.mxu0
  %386 = vmatpush.bf16.msra.mxu0 0
  %387 = vmatpush.bf16.msra.mxu0 0
  %388 = vmatpush.bf16.msra.mxu0 0
  %389 = vmatpush.bf16.msra.mxu0 0
  %390 = vmatpush.bf16.msra.mxu0 %v293
  %391 = vmatpush.bf16.msra.mxu0 %v292
  %392 = vmatpush.bf16.msra.mxu0 %v291
  %393 = vmatpush.bf16.msra.mxu0 %v290
  %394 = vmatmul.bf16.gmra.mxu0 %v332
  %v395 = vpop.f32.mrf.mxu0
  %v396 = vadd.f32 %v383, %v395
  %v397 = vpop.f32.mrf.mxu0
  %398 = vdwg.mxu0
  %v399 = vld [vmem:[%s3] sm:$0xff]
  %v400 = vadd.f32 %v396, %v399
  %v401 = vmax.f32 %v400, 0.0
  %402 = vst.msk [vmem:[%s4] sm:$0xff] %vm330, %v401
  // Predicated region
  $region18: #{resnet_forward_pallas.37} parent=0 // pred_check
    _
  $region19: #{resnet_forward_pallas.37} parent=0 // pred_check_branch
    %404 = sbr.rel (0) target = $region21
  $region20: #{resnet_forward_pallas.37} parent=0 // pred_region
    _
  $region21: #{resnet_forward_pallas.37} parent=0 // pred_fallthru
    _
  // Predicated region
  $region22: #{resnet_forward_pallas.37} parent=0 // pred_check
    _
  $region23: #{resnet_forward_pallas.37} parent=0 // pred_check_branch
    %406 = sbr.rel (0) target = $region25
  $region24: #{resnet_forward_pallas.37} parent=0 // pred_region
    _
  $region25: #{resnet_forward_pallas.37} parent=0 // pred_fallthru
    _

</llo_original>
